<compile_context>
chip_gen: v7x
topology: tpu7x:2x2x1
jax: 0.10.0
libtpu: 0.0.40
codegen_flags: <defaults>
</compile_context>

<pallas_src>
import math

import jax
import jax.numpy as jnp
from jax.experimental import pallas as pl
from jax.experimental.pallas import tpu as pltpu

# ----- small ViT config (same structure as google/vit-base, scaled down) -----
BATCH = 2
IN_CH = 3
IMG = 16
PATCH = 4
PATCH_DIM = IN_CH * PATCH * PATCH          # 48 (im2col feature size)
NUM_PATCHES = (IMG // PATCH) ** 2          # 16
SEQ = NUM_PATCHES + 1                      # 17 (CLS + patches)
HIDDEN = 32
NUM_HEADS = 4
HEAD_DIM = HIDDEN // NUM_HEADS             # 8
MLP = 4 * HIDDEN                           # 128
NUM_LAYERS = 2
HEAD_HIDDEN = 512                          # nn.Linear(hidden, 512)
OUT_DIM = 7                                # 3 position + 4 quaternion
LN_EPS = 1e-12                             # HF ViT layer_norm_eps


# --------------------------- in-kernel helpers --------------------------------

def _ln(x, g, b, eps=LN_EPS):
    """LayerNorm over the last (lane) dim of a 2-D f32 tile."""
    mean = jnp.mean(x, axis=-1, keepdims=True)
    var = jnp.mean((x - mean) ** 2, axis=-1, keepdims=True)
    return (x - mean) * jax.lax.rsqrt(var + eps) * g + b


# --------------------------- fused encoder kernel ------------------------------

def _encoder_kernel(patches_ref, patch_w_ref, embed_add_ref,
                    ln1g_ref, ln1b_ref, wqkv_ref, bqkv_ref, wo_ref, bo_ref,
                    ln2g_ref, ln2b_ref, w1_ref, b1_ref, w2_ref, b2_ref,
                    tok_ref):
    """One grid step = one encoder layer for one batch element.

    grid = (BATCH, NUM_LAYERS); the token output block (index_map constant over
    the layer axis) is the resident VMEM accumulator carrying activations
    between layers.  Layer 0 first materializes the patch/CLS/pos embedding.
    """
    layer = pl.program_id(1)

    # ---- layer 0: patch embedding + CLS + position embeddings (stays in VMEM) ----
    @pl.when(layer == 0)
    def _():
        p = patches_ref[0]                                  # (SEQ, PATCH_DIM); row 0 is zeros
        emb = jnp.dot(p, patch_w_ref[...], preferred_element_type=jnp.float32)
        # embed_add row 0 = cls + pos[0]; rows 1.. = patch_bias + pos[r]
        tok_ref[0] = emb + embed_add_ref[...]

    tok = tok_ref[0]                                        # (SEQ, HIDDEN) resident activations

    # ---- attention sub-block: LN1 -> fused QKV -> per-head softmax attn -> proj ----
    x = _ln(tok, ln1g_ref[0], ln1b_ref[0])
    qkv = jnp.dot(x, wqkv_ref[0],
                  preferred_element_type=jnp.float32) + bqkv_ref[0]   # (SEQ, 3*HIDDEN)
    wo = wo_ref[0]                                          # (HIDDEN, HIDDEN)
    scale = 1.0 / math.sqrt(HEAD_DIM)
    attn = jnp.zeros((SEQ, HIDDEN), jnp.float32)
    for h in range(NUM_HEADS):                              # unrolled; all heads, one launch
        lo = h * HEAD_DIM
        q = qkv[:, lo:lo + HEAD_DIM]                        # (SEQ, HEAD_DIM)
        k = qkv[:, HIDDEN + lo:HIDDEN + lo + HEAD_DIM]
        v = qkv[:, 2 * HIDDEN + lo:2 * HIDDEN + lo + HEAD_DIM]
        s = jax.lax.dot_general(q, k, (((1,), (1,)), ((), ())),
                                preferred_element_type=jnp.float32) * scale
        s = s - jnp.max(s, axis=-1, keepdims=True)
        probs = jnp.exp(s)
        probs = probs / jnp.sum(probs, axis=-1, keepdims=True)
        ctx = jnp.dot(probs, v, preferred_element_type=jnp.float32)   # (SEQ, HEAD_DIM)
        # fold this head's context directly into the output projection
        # (equivalent to concat(ctx_heads) @ wo, without a lane concat)
        attn = attn + jnp.dot(ctx, wo[lo:lo + HEAD_DIM, :],
                              preferred_element_type=jnp.float32)
    tok = tok + attn + bo_ref[0]                            # residual 1

    # ---- MLP sub-block: LN2 -> FC1 -> GELU -> FC2 ----
    y = _ln(tok, ln2g_ref[0], ln2b_ref[0])
    hmid = jnp.dot(y, w1_ref[0], preferred_element_type=jnp.float32) + b1_ref[0]
    # TODO(synk): HF ViT uses exact (erf) GELU; tanh approximation kept for
    # Mosaic-safe lowering (~1e-3 relative difference).
    hmid = jax.nn.gelu(hmid, approximate=True)
    mlp = jnp.dot(hmid, w2_ref[0], preferred_element_type=jnp.float32) + b2_ref[0]
    tok_ref[0] = tok + mlp                                  # residual 2


def encoder_forward(patches_padded, patch_w, embed_add, lp):
    """patches_padded: (B, SEQ, PATCH_DIM) with a zero row 0 (CLS slot)."""
    B = patches_padded.shape[0]

    def per_layer_spec(arr):
        return pl.BlockSpec((1,) + arr.shape[1:], lambda b, l: (l, 0, 0))

    layer_arrays = [lp["ln1_g"], lp["ln1_b"], lp["wqkv"], lp["bqkv"],
                    lp["wo"], lp["bo"], lp["ln2_g"], lp["ln2_b"],
                    lp["w_fc1"], lp["b_fc1"], lp["w_fc2"], lp["b_fc2"]]

    return pl.pallas_call(
        _encoder_kernel,
        out_shape=jax.ShapeDtypeStruct((B, SEQ, HIDDEN), jnp.float32),
        grid=(B, NUM_LAYERS),
        in_specs=[
            pl.BlockSpec((1, SEQ, PATCH_DIM), lambda b, l: (b, 0, 0)),   # patches
            pl.BlockSpec((PATCH_DIM, HIDDEN), lambda b, l: (0, 0)),      # patch_w
            pl.BlockSpec((SEQ, HIDDEN), lambda b, l: (0, 0)),            # embed add-term
        ] + [per_layer_spec(a) for a in layer_arrays],
        out_specs=pl.BlockSpec((1, SEQ, HIDDEN), lambda b, l: (b, 0, 0)),
        compiler_params=pltpu.CompilerParams(
            dimension_semantics=("parallel", "arbitrary")),
    )(patches_padded, patch_w, embed_add, *layer_arrays)


# --------------------------- fused pose-head kernel ----------------------------

def _pose_head_kernel(x_ref, g_ref, b_ref, w1_ref, b1_ref, w2_ref, b2_ref,
                      pos_ref, quat_ref):
    # final encoder LayerNorm applied only to the CLS rows, fused with the head
    x = _ln(x_ref[...], g_ref[...], b_ref[...])
    h = jnp.dot(x, w1_ref[...], preferred_element_type=jnp.float32) + b1_ref[...]
    h = jnp.maximum(h, 0.0)                                               # ReLU
    out = jnp.dot(h, w2_ref[...], preferred_element_type=jnp.float32) + b2_ref[...]
    pos = out[:, :3]
    quat = out[:, 3:]
    norm = jnp.sqrt(jnp.sum(quat * quat, axis=-1, keepdims=True))
    quat = quat / jnp.maximum(norm, 1e-12)                 # eps guards near-zero quaternions
    pos_ref[...] = pos.astype(pos_ref.dtype)
    quat_ref[...] = quat.astype(quat_ref.dtype)


def pose_head(cls_tokens, ln_g, ln_b, w1, b1, w2, b2):
    B, H = cls_tokens.shape
    return pl.pallas_call(
        _pose_head_kernel,
        out_shape=(jax.ShapeDtypeStruct((B, 3), jnp.float32),
                   jax.ShapeDtypeStruct((B, 4), jnp.float32)),
        grid=(1,),
        in_specs=[
            pl.BlockSpec((B, H), lambda i: (0, 0)),
            pl.BlockSpec((1, H), lambda i: (0, 0)),
            pl.BlockSpec((1, H), lambda i: (0, 0)),
            pl.BlockSpec((H, HEAD_HIDDEN), lambda i: (0, 0)),
            pl.BlockSpec((1, HEAD_HIDDEN), lambda i: (0, 0)),
            pl.BlockSpec((HEAD_HIDDEN, OUT_DIM), lambda i: (0, 0)),
            pl.BlockSpec((1, OUT_DIM), lambda i: (0, 0)),
        ],
        out_specs=(pl.BlockSpec((B, 3), lambda i: (0, 0)),
                   pl.BlockSpec((B, 4), lambda i: (0, 0))),
        compiler_params=pltpu.CompilerParams(dimension_semantics=("arbitrary",)),
    )(cls_tokens, ln_g.reshape(1, H), ln_b.reshape(1, H),
      w1, b1.reshape(1, -1), w2, b2.reshape(1, -1))


# ----------------------------- model glue --------------------------------------

def vit_pose_forward(params, x):
    B = x.shape[0]
    # --- im2col of Conv2d(C, hidden, kernel=P, stride=P); zero row 0 reserves CLS slot
    patches = x.reshape(B, IN_CH, IMG // PATCH, PATCH, IMG // PATCH, PATCH)
    patches = patches.transpose(0, 2, 4, 1, 3, 5).reshape(B, NUM_PATCHES, PATCH_DIM)
    patches = jnp.pad(patches, ((0, 0), (1, 0), (0, 0)))         # (B, SEQ, PATCH_DIM)

    # additive term folded into the in-kernel embedding:
    #   row 0 -> cls + pos[0]     (patch row is zero so the matmul contributes 0)
    #   row r -> patch_bias + pos[r]
    cls, pos, patch_b = params["cls"], params["pos"], params["patch_b"]
    embed_add = jnp.concatenate(
        [cls[0] + pos[0, :1], pos[0, 1:] + patch_b[None, :]], axis=0)    # (SEQ, HIDDEN)

    tokens = encoder_forward(patches, params["patch_w"], embed_add, params["layers"])

    cls_feat = tokens[:, 0, :]           # final LN runs only on these rows (inside pose_head)
    return pose_head(cls_feat, params["ln_g"], params["ln_b"],
                     params["head_w1"], params["head_b1"],
                     params["head_w2"], params["head_b2"])


# --------------------------- deterministic init ---------------------------------

def init_params(key):
    keys = iter(jax.random.split(key, 16))

    def nrm(shape, scale=0.02):
        return scale * jax.random.normal(next(keys), shape, jnp.float32)

    L = NUM_LAYERS
    return {
        "patch_w": nrm((PATCH_DIM, HIDDEN)),
        "patch_b": nrm((HIDDEN,)),
        "cls": nrm((1, 1, HIDDEN)),
        "pos": nrm((1, SEQ, HIDDEN)),
        "ln_g": jnp.ones((HIDDEN,), jnp.float32),
        "ln_b": jnp.zeros((HIDDEN,), jnp.float32),
        "head_w1": nrm((HIDDEN, HEAD_HIDDEN)),
        "head_b1": nrm((HEAD_HIDDEN,)),
        "head_w2": nrm((HEAD_HIDDEN, OUT_DIM)),
        "head_b2": nrm((OUT_DIM,)),
        # per-layer weights stacked along a leading layer axis (one pallas_call over layers)
        "layers": {
            "ln1_g": jnp.ones((L, 1, HIDDEN), jnp.float32),
            "ln1_b": jnp.zeros((L, 1, HIDDEN), jnp.float32),
            "wqkv": nrm((L, HIDDEN, 3 * HIDDEN)),      # fused Q|K|V projection
            "bqkv": nrm((L, 1, 3 * HIDDEN)),
            "wo": nrm((L, HIDDEN, HIDDEN)),
            "bo": nrm((L, 1, HIDDEN)),
            "ln2_g": jnp.ones((L, 1, HIDDEN), jnp.float32),
            "ln2_b": jnp.zeros((L, 1, HIDDEN), jnp.float32),
            "w_fc1": nrm((L, HIDDEN, MLP)),
            "b_fc1": nrm((L, 1, MLP)),
            "w_fc2": nrm((L, MLP, HIDDEN)),
            "b_fc2": nrm((L, 1, HIDDEN)),
        },
    }


# --------------------------------- main -----------------------------------------

if __name__ == "__main__":
    root = jax.random.PRNGKey(0)
    k_params, k_x = jax.random.split(root)
    params = init_params(k_params)
    x = jax.random.normal(k_x, (BATCH, IN_CH, IMG, IMG), jnp.float32)  # NCHW pixels

    fwd = jax.jit(vit_pose_forward)
    position, quaternion = fwd(params, x)
    jax.block_until_ready((position, quaternion))

    assert position.shape == (BATCH, 3)
    assert quaternion.shape == (BATCH, 4)
    assert bool(jnp.all(jnp.isfinite(position))) and bool(jnp.all(jnp.isfinite(quaternion)))
    norms = jnp.sqrt(jnp.sum(quaternion * quaternion, axis=-1))
    assert bool(jnp.all(jnp.abs(norms - 1.0) < 1e-4)), "quaternion not unit-norm"

    print("KERNEL_OK")
</pallas_src>

<mosaic_0001>
module attributes {stable_mosaic.version = 11 : i64} {
  func.func @_encoder_kernel(%arg0: i32, %arg1: i32, %arg2: memref<1x17x48xf32, #tpu.memory_space<vmem>>, %arg3: memref<48x32xf32, #tpu.memory_space<vmem>>, %arg4: memref<17x32xf32, #tpu.memory_space<vmem>>, %arg5: memref<1x1x32xf32, #tpu.memory_space<vmem>>, %arg6: memref<1x1x32xf32, #tpu.memory_space<vmem>>, %arg7: memref<1x32x96xf32, #tpu.memory_space<vmem>>, %arg8: memref<1x1x96xf32, #tpu.memory_space<vmem>>, %arg9: memref<1x32x32xf32, #tpu.memory_space<vmem>>, %arg10: memref<1x1x32xf32, #tpu.memory_space<vmem>>, %arg11: memref<1x1x32xf32, #tpu.memory_space<vmem>>, %arg12: memref<1x1x32xf32, #tpu.memory_space<vmem>>, %arg13: memref<1x32x128xf32, #tpu.memory_space<vmem>>, %arg14: memref<1x1x128xf32, #tpu.memory_space<vmem>>, %arg15: memref<1x128x32xf32, #tpu.memory_space<vmem>>, %arg16: memref<1x1x32xf32, #tpu.memory_space<vmem>>, %arg17: memref<1x17x32xf32, #tpu.memory_space<vmem>>) attributes {dimension_semantics = [#tpu.dimension_semantics<parallel>, #tpu.dimension_semantics<arbitrary>], iteration_bounds = array<i64: 2, 2>, scalar_prefetch = 0 : i64, scratch_operands = 0 : i64, tpu.core_type = #tpu.core_type<tc>, window_params = [{transform_indices = @transform_0, window_bounds = array<i64: 1, 17, 48>}, {pipeline_mode = #tpu.pipeline_mode<synchronous>, transform_indices = @transform_1, window_bounds = array<i64: 48, 32>}, {pipeline_mode = #tpu.pipeline_mode<synchronous>, transform_indices = @transform_2, window_bounds = array<i64: 17, 32>}, {transform_indices = @transform_3, window_bounds = array<i64: 1, 1, 32>}, {transform_indices = @transform_4, window_bounds = array<i64: 1, 1, 32>}, {transform_indices = @transform_5, window_bounds = array<i64: 1, 32, 96>}, {transform_indices = @transform_6, window_bounds = array<i64: 1, 1, 96>}, {transform_indices = @transform_7, window_bounds = array<i64: 1, 32, 32>}, {transform_indices = @transform_8, window_bounds = array<i64: 1, 1, 32>}, {transform_indices = @transform_9, window_bounds = array<i64: 1, 1, 32>}, {transform_indices = @transform_10, window_bounds = array<i64: 1, 1, 32>}, {transform_indices = @transform_11, window_bounds = array<i64: 1, 32, 128>}, {transform_indices = @transform_12, window_bounds = array<i64: 1, 1, 128>}, {transform_indices = @transform_13, window_bounds = array<i64: 1, 128, 32>}, {transform_indices = @transform_14, window_bounds = array<i64: 1, 1, 32>}, {transform_indices = @transform_15, window_bounds = array<i64: 1, 17, 32>}]} {
    %c0_i32 = arith.constant 0 : i32
    %0 = arith.cmpi eq, %arg1, %c0_i32 : i32
    %1 = arith.extui %0 : i1 to i32
    %c0_i32_0 = arith.constant 0 : i32
    %2 = arith.cmpi ne, %1, %c0_i32_0 : i32
    scf.if %2 {
      %c0_83 = arith.constant 0 : index
      %c0_84 = arith.constant 0 : index
      %c0_85 = arith.constant 0 : index
      %179 = vector.load %arg2[%c0_83, %c0_84, %c0_85] : memref<1x17x48xf32, #tpu.memory_space<vmem>>, vector<1x17x48xf32>
      %180 = vector.shape_cast %179 : vector<1x17x48xf32> to vector<17x48xf32>
      %c0_86 = arith.constant 0 : index
      %c0_87 = arith.constant 0 : index
      %181 = vector.load %arg3[%c0_86, %c0_87] : memref<48x32xf32, #tpu.memory_space<vmem>>, vector<48x32xf32>
      %cst_88 = arith.constant dense<0.000000e+00> : vector<17x32xf32>
      %182 = tpu.matmul %180, %181, %cst_88 {dimension_numbers = #tpu.dot_dimension_numbers<[1], [0], [0], [1], [0, 0, 1, 1], [], []>} : vector<17x48xf32>, vector<48x32xf32>, vector<17x32xf32> -> vector<17x32xf32>
      %c0_89 = arith.constant 0 : index
      %c0_90 = arith.constant 0 : index
      %183 = vector.load %arg4[%c0_89, %c0_90] : memref<17x32xf32, #tpu.memory_space<vmem>>, vector<17x32xf32>
      %184 = arith.addf %182, %183 : vector<17x32xf32>
      %c0_91 = arith.constant 0 : index
      %c0_92 = arith.constant 0 : index
      %c0_93 = arith.constant 0 : index
      %185 = vector.load %arg17[%c0_91, %c0_92, %c0_93] : memref<1x17x32xf32, #tpu.memory_space<vmem>>, vector<1x17x32xf32>
      %186 = vector.shape_cast %185 : vector<1x17x32xf32> to vector<17x32xf32>
      %187 = vector.shape_cast %184 : vector<17x32xf32> to vector<1x17x32xf32>
      tpu.vector_store %arg17[%c0_91, %c0_92, %c0_93], %187 {strides = array<i32>} : memref<1x17x32xf32, #tpu.memory_space<vmem>>, vector<1x17x32xf32>,
    } else {
    }
    %c0 = arith.constant 0 : index
    %c0_1 = arith.constant 0 : index
    %c0_2 = arith.constant 0 : index
    %3 = vector.load %arg17[%c0, %c0_1, %c0_2] : memref<1x17x32xf32, #tpu.memory_space<vmem>>, vector<1x17x32xf32>
    %4 = vector.shape_cast %3 : vector<1x17x32xf32> to vector<17x32xf32>
    %c0_3 = arith.constant 0 : index
    %c0_4 = arith.constant 0 : index
    %c0_5 = arith.constant 0 : index
    %5 = vector.load %arg5[%c0_3, %c0_4, %c0_5] : memref<1x1x32xf32, #tpu.memory_space<vmem>>, vector<1x1x32xf32>
    %6 = vector.shape_cast %5 : vector<1x1x32xf32> to vector<1x32xf32>
    %c0_6 = arith.constant 0 : index
    %c0_7 = arith.constant 0 : index
    %c0_8 = arith.constant 0 : index
    %7 = vector.load %arg6[%c0_6, %c0_7, %c0_8] : memref<1x1x32xf32, #tpu.memory_space<vmem>>, vector<1x1x32xf32>
    %8 = vector.shape_cast %7 : vector<1x1x32xf32> to vector<1x32xf32>
    %cst = arith.constant dense<0.000000e+00> : vector<17xf32>
    %9 = vector.multi_reduction <add>, %4, %cst [1] : vector<17x32xf32> to vector<17xf32>
    %10 = vector.shape_cast %9 : vector<17xf32> to vector<17x1xf32>
    %cst_9 = arith.constant 3.200000e+01 : f32
    %11 = vector.broadcast %cst_9 : f32 to vector<17x1xf32>
    %12 = arith.divf %10, %11 : vector<17x1xf32>
    %13 = vector.broadcast %12 : vector<17x1xf32> to vector<17x32xf32>
    %14 = arith.subf %4, %13 : vector<17x32xf32>
    %15 = arith.mulf %14, %14 : vector<17x32xf32>
    %cst_10 = arith.constant dense<0.000000e+00> : vector<17xf32>
    %16 = vector.multi_reduction <add>, %15, %cst_10 [1] : vector<17x32xf32> to vector<17xf32>
    %17 = vector.shape_cast %16 : vector<17xf32> to vector<17x1xf32>
    %cst_11 = arith.constant 3.200000e+01 : f32
    %18 = vector.broadcast %cst_11 : f32 to vector<17x1xf32>
    %19 = arith.divf %17, %18 : vector<17x1xf32>
    %20 = vector.broadcast %12 : vector<17x1xf32> to vector<17x32xf32>
    %21 = arith.subf %4, %20 : vector<17x32xf32>
    %cst_12 = arith.constant 9.99999996E-13 : f32
    %22 = vector.broadcast %cst_12 : f32 to vector<17x1xf32>
    %23 = arith.addf %19, %22 : vector<17x1xf32>
    %24 = math.rsqrt %23 : vector<17x1xf32>
    %25 = vector.broadcast %24 : vector<17x1xf32> to vector<17x32xf32>
    %26 = arith.mulf %21, %25 : vector<17x32xf32>
    %27 = vector.broadcast %6 : vector<1x32xf32> to vector<17x32xf32>
    %28 = arith.mulf %26, %27 : vector<17x32xf32>
    %29 = vector.broadcast %8 : vector<1x32xf32> to vector<17x32xf32>
    %30 = arith.addf %28, %29 : vector<17x32xf32>
    %c0_13 = arith.constant 0 : index
    %c0_14 = arith.constant 0 : index
    %c0_15 = arith.constant 0 : index
    %31 = vector.load %arg7[%c0_13, %c0_14, %c0_15] : memref<1x32x96xf32, #tpu.memory_space<vmem>>, vector<1x32x96xf32>
    %32 = vector.shape_cast %31 : vector<1x32x96xf32> to vector<32x96xf32>
    %cst_16 = arith.constant dense<0.000000e+00> : vector<17x96xf32>
    %33 = tpu.matmul %30, %32, %cst_16 {dimension_numbers = #tpu.dot_dimension_numbers<[1], [0], [0], [1], [0, 0, 1, 1], [], []>} : vector<17x32xf32>, vector<32x96xf32>, vector<17x96xf32> -> vector<17x96xf32>
    %c0_17 = arith.constant 0 : index
    %c0_18 = arith.constant 0 : index
    %c0_19 = arith.constant 0 : index
    %34 = vector.load %arg8[%c0_17, %c0_18, %c0_19] : memref<1x1x96xf32, #tpu.memory_space<vmem>>, vector<1x1x96xf32>
    %35 = vector.shape_cast %34 : vector<1x1x96xf32> to vector<1x96xf32>
    %36 = vector.broadcast %35 : vector<1x96xf32> to vector<17x96xf32>
    %37 = arith.addf %33, %36 : vector<17x96xf32>
    %c0_20 = arith.constant 0 : index
    %c0_21 = arith.constant 0 : index
    %c0_22 = arith.constant 0 : index
    %38 = vector.load %arg9[%c0_20, %c0_21, %c0_22] : memref<1x32x32xf32, #tpu.memory_space<vmem>>, vector<1x32x32xf32>
    %39 = vector.shape_cast %38 : vector<1x32x32xf32> to vector<32x32xf32>
    %cst_23 = arith.constant 0.000000e+00 : f32
    %40 = vector.broadcast %cst_23 : f32 to vector<17x32xf32>
    %41 = vector.extract_strided_slice %37 {offsets = [0, 0], sizes = [17, 8], strides = [1, 1]} : vector<17x96xf32> to vector<17x8xf32>
    %42 = vector.extract_strided_slice %37 {offsets = [0, 32], sizes = [17, 8], strides = [1, 1]} : vector<17x96xf32> to vector<17x8xf32>
    %43 = vector.extract_strided_slice %37 {offsets = [0, 64], sizes = [17, 8], strides = [1, 1]} : vector<17x96xf32> to vector<17x8xf32>
    %cst_24 = arith.constant dense<0.000000e+00> : vector<17x17xf32>
    %44 = tpu.matmul %41, %42, %cst_24 {dimension_numbers = #tpu.dot_dimension_numbers<[1], [1], [0], [0], [0, 0, 1, 0], [], []>} : vector<17x8xf32>, vector<17x8xf32>, vector<17x17xf32> -> vector<17x17xf32>
    %cst_25 = arith.constant 0.353553385 : f32
    %45 = vector.broadcast %cst_25 : f32 to vector<17x17xf32>
    %46 = arith.mulf %44, %45 : vector<17x17xf32>
    %cst_26 = arith.constant dense<0xFF800000> : vector<17xf32>
    %47 = vector.multi_reduction <maximumf>, %46, %cst_26 [1] : vector<17x17xf32> to vector<17xf32>
    %48 = vector.shape_cast %47 : vector<17xf32> to vector<17x1xf32>
    %49 = vector.broadcast %48 : vector<17x1xf32> to vector<17x17xf32>
    %50 = arith.subf %46, %49 : vector<17x17xf32>
    %51 = math.exp %50 : vector<17x17xf32>
    %cst_27 = arith.constant dense<0.000000e+00> : vector<17xf32>
    %52 = vector.multi_reduction <add>, %51, %cst_27 [1] : vector<17x17xf32> to vector<17xf32>
    %53 = vector.shape_cast %52 : vector<17xf32> to vector<17x1xf32>
    %54 = vector.broadcast %53 : vector<17x1xf32> to vector<17x17xf32>
    %55 = arith.divf %51, %54 : vector<17x17xf32>
    %cst_28 = arith.constant dense<0.000000e+00> : vector<17x8xf32>
    %56 = tpu.matmul %55, %43, %cst_28 {dimension_numbers = #tpu.dot_dimension_numbers<[1], [0], [0], [1], [0, 0, 1, 1], [], []>} : vector<17x17xf32>, vector<17x8xf32>, vector<17x8xf32> -> vector<17x8xf32>
    %57 = vector.extract_strided_slice %39 {offsets = [0, 0], sizes = [8, 32], strides = [1, 1]} : vector<32x32xf32> to vector<8x32xf32>
    %cst_29 = arith.constant dense<0.000000e+00> : vector<17x32xf32>
    %58 = tpu.matmul %56, %57, %cst_29 {dimension_numbers = #tpu.dot_dimension_numbers<[1], [0], [0], [1], [0, 0, 1, 1], [], []>} : vector<17x8xf32>, vector<8x32xf32>, vector<17x32xf32> -> vector<17x32xf32>
    %59 = arith.addf %40, %58 : vector<17x32xf32>
    %60 = vector.extract_strided_slice %37 {offsets = [0, 8], sizes = [17, 8], strides = [1, 1]} : vector<17x96xf32> to vector<17x8xf32>
    %61 = vector.extract_strided_slice %37 {offsets = [0, 40], sizes = [17, 8], strides = [1, 1]} : vector<17x96xf32> to vector<17x8xf32>
    %62 = vector.extract_strided_slice %37 {offsets = [0, 72], sizes = [17, 8], strides = [1, 1]} : vector<17x96xf32> to vector<17x8xf32>
    %cst_30 = arith.constant dense<0.000000e+00> : vector<17x17xf32>
    %63 = tpu.matmul %60, %61, %cst_30 {dimension_numbers = #tpu.dot_dimension_numbers<[1], [1], [0], [0], [0, 0, 1, 0], [], []>} : vector<17x8xf32>, vector<17x8xf32>, vector<17x17xf32> -> vector<17x17xf32>
    %cst_31 = arith.constant 0.353553385 : f32
    %64 = vector.broadcast %cst_31 : f32 to vector<17x17xf32>
    %65 = arith.mulf %63, %64 : vector<17x17xf32>
    %cst_32 = arith.constant dense<0xFF800000> : vector<17xf32>
    %66 = vector.multi_reduction <maximumf>, %65, %cst_32 [1] : vector<17x17xf32> to vector<17xf32>
    %67 = vector.shape_cast %66 : vector<17xf32> to vector<17x1xf32>
    %68 = vector.broadcast %67 : vector<17x1xf32> to vector<17x17xf32>
    %69 = arith.subf %65, %68 : vector<17x17xf32>
    %70 = math.exp %69 : vector<17x17xf32>
    %cst_33 = arith.constant dense<0.000000e+00> : vector<17xf32>
    %71 = vector.multi_reduction <add>, %70, %cst_33 [1] : vector<17x17xf32> to vector<17xf32>
    %72 = vector.shape_cast %71 : vector<17xf32> to vector<17x1xf32>
    %73 = vector.broadcast %72 : vector<17x1xf32> to vector<17x17xf32>
    %74 = arith.divf %70, %73 : vector<17x17xf32>
    %cst_34 = arith.constant dense<0.000000e+00> : vector<17x8xf32>
    %75 = tpu.matmul %74, %62, %cst_34 {dimension_numbers = #tpu.dot_dimension_numbers<[1], [0], [0], [1], [0, 0, 1, 1], [], []>} : vector<17x17xf32>, vector<17x8xf32>, vector<17x8xf32> -> vector<17x8xf32>
    %76 = vector.extract_strided_slice %39 {offsets = [8, 0], sizes = [8, 32], strides = [1, 1]} : vector<32x32xf32> to vector<8x32xf32>
    %cst_35 = arith.constant dense<0.000000e+00> : vector<17x32xf32>
    %77 = tpu.matmul %75, %76, %cst_35 {dimension_numbers = #tpu.dot_dimension_numbers<[1], [0], [0], [1], [0, 0, 1, 1], [], []>} : vector<17x8xf32>, vector<8x32xf32>, vector<17x32xf32> -> vector<17x32xf32>
    %78 = arith.addf %59, %77 : vector<17x32xf32>
    %79 = vector.extract_strided_slice %37 {offsets = [0, 16], sizes = [17, 8], strides = [1, 1]} : vector<17x96xf32> to vector<17x8xf32>
    %80 = vector.extract_strided_slice %37 {offsets = [0, 48], sizes = [17, 8], strides = [1, 1]} : vector<17x96xf32> to vector<17x8xf32>
    %81 = vector.extract_strided_slice %37 {offsets = [0, 80], sizes = [17, 8], strides = [1, 1]} : vector<17x96xf32> to vector<17x8xf32>
    %cst_36 = arith.constant dense<0.000000e+00> : vector<17x17xf32>
    %82 = tpu.matmul %79, %80, %cst_36 {dimension_numbers = #tpu.dot_dimension_numbers<[1], [1], [0], [0], [0, 0, 1, 0], [], []>} : vector<17x8xf32>, vector<17x8xf32>, vector<17x17xf32> -> vector<17x17xf32>
    %cst_37 = arith.constant 0.353553385 : f32
    %83 = vector.broadcast %cst_37 : f32 to vector<17x17xf32>
    %84 = arith.mulf %82, %83 : vector<17x17xf32>
    %cst_38 = arith.constant dense<0xFF800000> : vector<17xf32>
    %85 = vector.multi_reduction <maximumf>, %84, %cst_38 [1] : vector<17x17xf32> to vector<17xf32>
    %86 = vector.shape_cast %85 : vector<17xf32> to vector<17x1xf32>
    %87 = vector.broadcast %86 : vector<17x1xf32> to vector<17x17xf32>
    %88 = arith.subf %84, %87 : vector<17x17xf32>
    %89 = math.exp %88 : vector<17x17xf32>
    %cst_39 = arith.constant dense<0.000000e+00> : vector<17xf32>
    %90 = vector.multi_reduction <add>, %89, %cst_39 [1] : vector<17x17xf32> to vector<17xf32>
    %91 = vector.shape_cast %90 : vector<17xf32> to vector<17x1xf32>
    %92 = vector.broadcast %91 : vector<17x1xf32> to vector<17x17xf32>
    %93 = arith.divf %89, %92 : vector<17x17xf32>
    %cst_40 = arith.constant dense<0.000000e+00> : vector<17x8xf32>
    %94 = tpu.matmul %93, %81, %cst_40 {dimension_numbers = #tpu.dot_dimension_numbers<[1], [0], [0], [1], [0, 0, 1, 1], [], []>} : vector<17x17xf32>, vector<17x8xf32>, vector<17x8xf32> -> vector<17x8xf32>
    %95 = vector.extract_strided_slice %39 {offsets = [16, 0], sizes = [8, 32], strides = [1, 1]} : vector<32x32xf32> to vector<8x32xf32>
    %cst_41 = arith.constant dense<0.000000e+00> : vector<17x32xf32>
    %96 = tpu.matmul %94, %95, %cst_41 {dimension_numbers = #tpu.dot_dimension_numbers<[1], [0], [0], [1], [0, 0, 1, 1], [], []>} : vector<17x8xf32>, vector<8x32xf32>, vector<17x32xf32> -> vector<17x32xf32>
    %97 = arith.addf %78, %96 : vector<17x32xf32>
    %98 = vector.extract_strided_slice %37 {offsets = [0, 24], sizes = [17, 8], strides = [1, 1]} : vector<17x96xf32> to vector<17x8xf32>
    %99 = vector.extract_strided_slice %37 {offsets = [0, 56], sizes = [17, 8], strides = [1, 1]} : vector<17x96xf32> to vector<17x8xf32>
    %100 = vector.extract_strided_slice %37 {offsets = [0, 88], sizes = [17, 8], strides = [1, 1]} : vector<17x96xf32> to vector<17x8xf32>
    %cst_42 = arith.constant dense<0.000000e+00> : vector<17x17xf32>
    %101 = tpu.matmul %98, %99, %cst_42 {dimension_numbers = #tpu.dot_dimension_numbers<[1], [1], [0], [0], [0, 0, 1, 0], [], []>} : vector<17x8xf32>, vector<17x8xf32>, vector<17x17xf32> -> vector<17x17xf32>
    %cst_43 = arith.constant 0.353553385 : f32
    %102 = vector.broadcast %cst_43 : f32 to vector<17x17xf32>
    %103 = arith.mulf %101, %102 : vector<17x17xf32>
    %cst_44 = arith.constant dense<0xFF800000> : vector<17xf32>
    %104 = vector.multi_reduction <maximumf>, %103, %cst_44 [1] : vector<17x17xf32> to vector<17xf32>
    %105 = vector.shape_cast %104 : vector<17xf32> to vector<17x1xf32>
    %106 = vector.broadcast %105 : vector<17x1xf32> to vector<17x17xf32>
    %107 = arith.subf %103, %106 : vector<17x17xf32>
    %108 = math.exp %107 : vector<17x17xf32>
    %cst_45 = arith.constant dense<0.000000e+00> : vector<17xf32>
    %109 = vector.multi_reduction <add>, %108, %cst_45 [1] : vector<17x17xf32> to vector<17xf32>
    %110 = vector.shape_cast %109 : vector<17xf32> to vector<17x1xf32>
    %111 = vector.broadcast %110 : vector<17x1xf32> to vector<17x17xf32>
    %112 = arith.divf %108, %111 : vector<17x17xf32>
    %cst_46 = arith.constant dense<0.000000e+00> : vector<17x8xf32>
    %113 = tpu.matmul %112, %100, %cst_46 {dimension_numbers = #tpu.dot_dimension_numbers<[1], [0], [0], [1], [0, 0, 1, 1], [], []>} : vector<17x17xf32>, vector<17x8xf32>, vector<17x8xf32> -> vector<17x8xf32>
    %114 = vector.extract_strided_slice %39 {offsets = [24, 0], sizes = [8, 32], strides = [1, 1]} : vector<32x32xf32> to vector<8x32xf32>
    %cst_47 = arith.constant dense<0.000000e+00> : vector<17x32xf32>
    %115 = tpu.matmul %113, %114, %cst_47 {dimension_numbers = #tpu.dot_dimension_numbers<[1], [0], [0], [1], [0, 0, 1, 1], [], []>} : vector<17x8xf32>, vector<8x32xf32>, vector<17x32xf32> -> vector<17x32xf32>
    %116 = arith.addf %97, %115 : vector<17x32xf32>
    %117 = arith.addf %4, %116 : vector<17x32xf32>
    %c0_48 = arith.constant 0 : index
    %c0_49 = arith.constant 0 : index
    %c0_50 = arith.constant 0 : index
    %118 = vector.load %arg10[%c0_48, %c0_49, %c0_50] : memref<1x1x32xf32, #tpu.memory_space<vmem>>, vector<1x1x32xf32>
    %119 = vector.shape_cast %118 : vector<1x1x32xf32> to vector<1x32xf32>
    %120 = vector.broadcast %119 : vector<1x32xf32> to vector<17x32xf32>
    %121 = arith.addf %117, %120 : vector<17x32xf32>
    %c0_51 = arith.constant 0 : index
    %c0_52 = arith.constant 0 : index
    %c0_53 = arith.constant 0 : index
    %122 = vector.load %arg11[%c0_51, %c0_52, %c0_53] : memref<1x1x32xf32, #tpu.memory_space<vmem>>, vector<1x1x32xf32>
    %123 = vector.shape_cast %122 : vector<1x1x32xf32> to vector<1x32xf32>
    %c0_54 = arith.constant 0 : index
    %c0_55 = arith.constant 0 : index
    %c0_56 = arith.constant 0 : index
    %124 = vector.load %arg12[%c0_54, %c0_55, %c0_56] : memref<1x1x32xf32, #tpu.memory_space<vmem>>, vector<1x1x32xf32>
    %125 = vector.shape_cast %124 : vector<1x1x32xf32> to vector<1x32xf32>
    %cst_57 = arith.constant dense<0.000000e+00> : vector<17xf32>
    %126 = vector.multi_reduction <add>, %121, %cst_57 [1] : vector<17x32xf32> to vector<17xf32>
    %127 = vector.shape_cast %126 : vector<17xf32> to vector<17x1xf32>
    %cst_58 = arith.constant 3.200000e+01 : f32
    %128 = vector.broadcast %cst_58 : f32 to vector<17x1xf32>
    %129 = arith.divf %127, %128 : vector<17x1xf32>
    %130 = vector.broadcast %129 : vector<17x1xf32> to vector<17x32xf32>
    %131 = arith.subf %121, %130 : vector<17x32xf32>
    %132 = arith.mulf %131, %131 : vector<17x32xf32>
    %cst_59 = arith.constant dense<0.000000e+00> : vector<17xf32>
    %133 = vector.multi_reduction <add>, %132, %cst_59 [1] : vector<17x32xf32> to vector<17xf32>
    %134 = vector.shape_cast %133 : vector<17xf32> to vector<17x1xf32>
    %cst_60 = arith.constant 3.200000e+01 : f32
    %135 = vector.broadcast %cst_60 : f32 to vector<17x1xf32>
    %136 = arith.divf %134, %135 : vector<17x1xf32>
    %137 = vector.broadcast %129 : vector<17x1xf32> to vector<17x32xf32>
    %138 = arith.subf %121, %137 : vector<17x32xf32>
    %cst_61 = arith.constant 9.99999996E-13 : f32
    %139 = vector.broadcast %cst_61 : f32 to vector<17x1xf32>
    %140 = arith.addf %136, %139 : vector<17x1xf32>
    %141 = math.rsqrt %140 : vector<17x1xf32>
    %142 = vector.broadcast %141 : vector<17x1xf32> to vector<17x32xf32>
    %143 = arith.mulf %138, %142 : vector<17x32xf32>
    %144 = vector.broadcast %123 : vector<1x32xf32> to vector<17x32xf32>
    %145 = arith.mulf %143, %144 : vector<17x32xf32>
    %146 = vector.broadcast %125 : vector<1x32xf32> to vector<17x32xf32>
    %147 = arith.addf %145, %146 : vector<17x32xf32>
    %c0_62 = arith.constant 0 : index
    %c0_63 = arith.constant 0 : index
    %c0_64 = arith.constant 0 : index
    %148 = vector.load %arg13[%c0_62, %c0_63, %c0_64] : memref<1x32x128xf32, #tpu.memory_space<vmem>>, vector<1x32x128xf32>
    %149 = vector.shape_cast %148 : vector<1x32x128xf32> to vector<32x128xf32>
    %cst_65 = arith.constant dense<0.000000e+00> : vector<17x128xf32>
    %150 = tpu.matmul %147, %149, %cst_65 {dimension_numbers = #tpu.dot_dimension_numbers<[1], [0], [0], [1], [0, 0, 1, 1], [], []>} : vector<17x32xf32>, vector<32x128xf32>, vector<17x128xf32> -> vector<17x128xf32>
    %c0_66 = arith.constant 0 : index
    %c0_67 = arith.constant 0 : index
    %c0_68 = arith.constant 0 : index
    %151 = vector.load %arg14[%c0_66, %c0_67, %c0_68] : memref<1x1x128xf32, #tpu.memory_space<vmem>>, vector<1x1x128xf32>
    %152 = vector.shape_cast %151 : vector<1x1x128xf32> to vector<1x128xf32>
    %153 = vector.broadcast %152 : vector<1x128xf32> to vector<17x128xf32>
    %154 = arith.addf %150, %153 : vector<17x128xf32>
    %155 = arith.mulf %154, %154 : vector<17x128xf32>
    %156 = arith.mulf %154, %155 : vector<17x128xf32>
    %cst_69 = arith.constant 4.471500e-02 : f32
    %157 = vector.broadcast %cst_69 : f32 to vector<17x128xf32>
    %158 = arith.mulf %157, %156 : vector<17x128xf32>
    %159 = arith.addf %154, %158 : vector<17x128xf32>
    %cst_70 = arith.constant 0.797884583 : f32
    %160 = vector.broadcast %cst_70 : f32 to vector<17x128xf32>
    %161 = arith.mulf %160, %159 : vector<17x128xf32>
    %162 = math.tanh %161 : vector<17x128xf32>
    %cst_71 = arith.constant 1.000000e+00 : f32
    %163 = vector.broadcast %cst_71 : f32 to vector<17x128xf32>
    %164 = arith.addf %163, %162 : vector<17x128xf32>
    %cst_72 = arith.constant 5.000000e-01 : f32
    %165 = vector.broadcast %cst_72 : f32 to vector<17x128xf32>
    %166 = arith.mulf %165, %164 : vector<17x128xf32>
    %167 = arith.mulf %154, %166 : vector<17x128xf32>
    %c0_73 = arith.constant 0 : index
    %c0_74 = arith.constant 0 : index
    %c0_75 = arith.constant 0 : index
    %168 = vector.load %arg15[%c0_73, %c0_74, %c0_75] : memref<1x128x32xf32, #tpu.memory_space<vmem>>, vector<1x128x32xf32>
    %169 = vector.shape_cast %168 : vector<1x128x32xf32> to vector<128x32xf32>
    %cst_76 = arith.constant dense<0.000000e+00> : vector<17x32xf32>
    %170 = tpu.matmul %167, %169, %cst_76 {dimension_numbers = #tpu.dot_dimension_numbers<[1], [0], [0], [1], [0, 0, 1, 1], [], []>} : vector<17x128xf32>, vector<128x32xf32>, vector<17x32xf32> -> vector<17x32xf32>
    %c0_77 = arith.constant 0 : index
    %c0_78 = arith.constant 0 : index
    %c0_79 = arith.constant 0 : index
    %171 = vector.load %arg16[%c0_77, %c0_78, %c0_79] : memref<1x1x32xf32, #tpu.memory_space<vmem>>, vector<1x1x32xf32>
    %172 = vector.shape_cast %171 : vector<1x1x32xf32> to vector<1x32xf32>
    %173 = vector.broadcast %172 : vector<1x32xf32> to vector<17x32xf32>
    %174 = arith.addf %170, %173 : vector<17x32xf32>
    %175 = arith.addf %121, %174 : vector<17x32xf32>
    %c0_80 = arith.constant 0 : index
    %c0_81 = arith.constant 0 : index
    %c0_82 = arith.constant 0 : index
    %176 = vector.load %arg17[%c0_80, %c0_81, %c0_82] : memref<1x17x32xf32, #tpu.memory_space<vmem>>, vector<1x17x32xf32>
    %177 = vector.shape_cast %176 : vector<1x17x32xf32> to vector<17x32xf32>
    %178 = vector.shape_cast %175 : vector<17x32xf32> to vector<1x17x32xf32>
    tpu.vector_store %arg17[%c0_80, %c0_81, %c0_82], %178 {strides = array<i32>} : memref<1x17x32xf32, #tpu.memory_space<vmem>>, vector<1x17x32xf32>,
    return
  }
  func.func @transform_0(%arg0: i32, %arg1: i32) -> (i32, i32, i32) {
    %c0_i32 = arith.constant 0 : i32
    %c0_i32_0 = arith.constant 0 : i32
    %c0_i32_1 = arith.constant 0 : i32
    return %arg0, %c0_i32, %c0_i32_0 : i32, i32, i32
  }
  func.func @transform_1(%arg0: i32, %arg1: i32) -> (i32, i32) {
    %c0_i32 = arith.constant 0 : i32
    %c0_i32_0 = arith.constant 0 : i32
    %c0_i32_1 = arith.constant 0 : i32
    return %c0_i32, %c0_i32_0 : i32, i32
  }
  func.func @transform_2(%arg0: i32, %arg1: i32) -> (i32, i32) {
    %c0_i32 = arith.constant 0 : i32
    %c0_i32_0 = arith.constant 0 : i32
    %c0_i32_1 = arith.constant 0 : i32
    return %c0_i32, %c0_i32_0 : i32, i32
  }
  func.func @transform_3(%arg0: i32, %arg1: i32) -> (i32, i32, i32) {
    %c0_i32 = arith.constant 0 : i32
    %c0_i32_0 = arith.constant 0 : i32
    %c0_i32_1 = arith.constant 0 : i32
    return %arg1, %c0_i32, %c0_i32_0 : i32, i32, i32
  }
  func.func @transform_4(%arg0: i32, %arg1: i32) -> (i32, i32, i32) {
    %c0_i32 = arith.constant 0 : i32
    %c0_i32_0 = arith.constant 0 : i32
    %c0_i32_1 = arith.constant 0 : i32
    return %arg1, %c0_i32, %c0_i32_0 : i32, i32, i32
  }
  func.func @transform_5(%arg0: i32, %arg1: i32) -> (i32, i32, i32) {
    %c0_i32 = arith.constant 0 : i32
    %c0_i32_0 = arith.constant 0 : i32
    %c0_i32_1 = arith.constant 0 : i32
    return %arg1, %c0_i32, %c0_i32_0 : i32, i32, i32
  }
  func.func @transform_6(%arg0: i32, %arg1: i32) -> (i32, i32, i32) {
    %c0_i32 = arith.constant 0 : i32
    %c0_i32_0 = arith.constant 0 : i32
    %c0_i32_1 = arith.constant 0 : i32
    return %arg1, %c0_i32, %c0_i32_0 : i32, i32, i32
  }
  func.func @transform_7(%arg0: i32, %arg1: i32) -> (i32, i32, i32) {
    %c0_i32 = arith.constant 0 : i32
    %c0_i32_0 = arith.constant 0 : i32
    %c0_i32_1 = arith.constant 0 : i32
    return %arg1, %c0_i32, %c0_i32_0 : i32, i32, i32
  }
  func.func @transform_8(%arg0: i32, %arg1: i32) -> (i32, i32, i32) {
    %c0_i32 = arith.constant 0 : i32
    %c0_i32_0 = arith.constant 0 : i32
    %c0_i32_1 = arith.constant 0 : i32
    return %arg1, %c0_i32, %c0_i32_0 : i32, i32, i32
  }
  func.func @transform_9(%arg0: i32, %arg1: i32) -> (i32, i32, i32) {
    %c0_i32 = arith.constant 0 : i32
    %c0_i32_0 = arith.constant 0 : i32
    %c0_i32_1 = arith.constant 0 : i32
    return %arg1, %c0_i32, %c0_i32_0 : i32, i32, i32
  }
  func.func @transform_10(%arg0: i32, %arg1: i32) -> (i32, i32, i32) {
    %c0_i32 = arith.constant 0 : i32
    %c0_i32_0 = arith.constant 0 : i32
    %c0_i32_1 = arith.constant 0 : i32
    return %arg1, %c0_i32, %c0_i32_0 : i32, i32, i32
  }
  func.func @transform_11(%arg0: i32, %arg1: i32) -> (i32, i32, i32) {
    %c0_i32 = arith.constant 0 : i32
    %c0_i32_0 = arith.constant 0 : i32
    %c0_i32_1 = arith.constant 0 : i32
    return %arg1, %c0_i32, %c0_i32_0 : i32, i32, i32
  }
  func.func @transform_12(%arg0: i32, %arg1: i32) -> (i32, i32, i32) {
    %c0_i32 = arith.constant 0 : i32
    %c0_i32_0 = arith.constant 0 : i32
    %c0_i32_1 = arith.constant 0 : i32
    return %arg1, %c0_i32, %c0_i32_0 : i32, i32, i32
  }
  func.func @transform_13(%arg0: i32, %arg1: i32) -> (i32, i32, i32) {
    %c0_i32 = arith.constant 0 : i32
    %c0_i32_0 = arith.constant 0 : i32
    %c0_i32_1 = arith.constant 0 : i32
    return %arg1, %c0_i32, %c0_i32_0 : i32, i32, i32
  }
  func.func @transform_14(%arg0: i32, %arg1: i32) -> (i32, i32, i32) {
    %c0_i32 = arith.constant 0 : i32
    %c0_i32_0 = arith.constant 0 : i32
    %c0_i32_1 = arith.constant 0 : i32
    return %arg1, %c0_i32, %c0_i32_0 : i32, i32, i32
  }
  func.func @transform_15(%arg0: i32, %arg1: i32) -> (i32, i32, i32) {
    %c0_i32 = arith.constant 0 : i32
    %c0_i32_0 = arith.constant 0 : i32
    %c0_i32_1 = arith.constant 0 : i32
    return %arg0, %c0_i32, %c0_i32_0 : i32, i32, i32
  }
}

module attributes {stable_mosaic.version = 11 : i64} {
  func.func @_pose_head_kernel(%arg0: i32, %arg1: memref<2x32xf32, #tpu.memory_space<vmem>>, %arg2: memref<1x32xf32, #tpu.memory_space<vmem>>, %arg3: memref<1x32xf32, #tpu.memory_space<vmem>>, %arg4: memref<32x512xf32, #tpu.memory_space<vmem>>, %arg5: memref<1x512xf32, #tpu.memory_space<vmem>>, %arg6: memref<512x7xf32, #tpu.memory_space<vmem>>, %arg7: memref<1x7xf32, #tpu.memory_space<vmem>>, %arg8: memref<2x3xf32, #tpu.memory_space<vmem>>, %arg9: memref<2x4xf32, #tpu.memory_space<vmem>>) attributes {dimension_semantics = [#tpu.dimension_semantics<arbitrary>], iteration_bounds = array<i64: 1>, scalar_prefetch = 0 : i64, scratch_operands = 0 : i64, tpu.core_type = #tpu.core_type<tc>, window_params = [{pipeline_mode = #tpu.pipeline_mode<synchronous>, transform_indices = @transform_0, window_bounds = array<i64: 2, 32>}, {pipeline_mode = #tpu.pipeline_mode<synchronous>, transform_indices = @transform_1, window_bounds = array<i64: 1, 32>}, {pipeline_mode = #tpu.pipeline_mode<synchronous>, transform_indices = @transform_2, window_bounds = array<i64: 1, 32>}, {pipeline_mode = #tpu.pipeline_mode<synchronous>, transform_indices = @transform_3, window_bounds = array<i64: 32, 512>}, {pipeline_mode = #tpu.pipeline_mode<synchronous>, transform_indices = @transform_4, window_bounds = array<i64: 1, 512>}, {pipeline_mode = #tpu.pipeline_mode<synchronous>, transform_indices = @transform_5, window_bounds = array<i64: 512, 7>}, {pipeline_mode = #tpu.pipeline_mode<synchronous>, transform_indices = @transform_6, window_bounds = array<i64: 1, 7>}, {pipeline_mode = #tpu.pipeline_mode<synchronous>, transform_indices = @transform_7, window_bounds = array<i64: 2, 3>}, {pipeline_mode = #tpu.pipeline_mode<synchronous>, transform_indices = @transform_8, window_bounds = array<i64: 2, 4>}]} {
    %c0 = arith.constant 0 : index
    %c0_0 = arith.constant 0 : index
    %0 = vector.load %arg1[%c0, %c0_0] : memref<2x32xf32, #tpu.memory_space<vmem>>, vector<2x32xf32>
    %c0_1 = arith.constant 0 : index
    %c0_2 = arith.constant 0 : index
    %1 = vector.load %arg2[%c0_1, %c0_2] : memref<1x32xf32, #tpu.memory_space<vmem>>, vector<1x32xf32>
    %c0_3 = arith.constant 0 : index
    %c0_4 = arith.constant 0 : index
    %2 = vector.load %arg3[%c0_3, %c0_4] : memref<1x32xf32, #tpu.memory_space<vmem>>, vector<1x32xf32>
    %cst = arith.constant dense<0.000000e+00> : vector<2xf32>
    %3 = vector.multi_reduction <add>, %0, %cst [1] : vector<2x32xf32> to vector<2xf32>
    %4 = vector.shape_cast %3 : vector<2xf32> to vector<2x1xf32>
    %cst_5 = arith.constant 3.200000e+01 : f32
    %5 = vector.broadcast %cst_5 : f32 to vector<2x1xf32>
    %6 = arith.divf %4, %5 : vector<2x1xf32>
    %7 = vector.broadcast %6 : vector<2x1xf32> to vector<2x32xf32>
    %8 = arith.subf %0, %7 : vector<2x32xf32>
    %9 = arith.mulf %8, %8 : vector<2x32xf32>
    %cst_6 = arith.constant dense<0.000000e+00> : vector<2xf32>
    %10 = vector.multi_reduction <add>, %9, %cst_6 [1] : vector<2x32xf32> to vector<2xf32>
    %11 = vector.shape_cast %10 : vector<2xf32> to vector<2x1xf32>
    %cst_7 = arith.constant 3.200000e+01 : f32
    %12 = vector.broadcast %cst_7 : f32 to vector<2x1xf32>
    %13 = arith.divf %11, %12 : vector<2x1xf32>
    %14 = vector.broadcast %6 : vector<2x1xf32> to vector<2x32xf32>
    %15 = arith.subf %0, %14 : vector<2x32xf32>
    %cst_8 = arith.constant 9.99999996E-13 : f32
    %16 = vector.broadcast %cst_8 : f32 to vector<2x1xf32>
    %17 = arith.addf %13, %16 : vector<2x1xf32>
    %18 = math.rsqrt %17 : vector<2x1xf32>
    %19 = vector.broadcast %18 : vector<2x1xf32> to vector<2x32xf32>
    %20 = arith.mulf %15, %19 : vector<2x32xf32>
    %21 = vector.broadcast %1 : vector<1x32xf32> to vector<2x32xf32>
    %22 = arith.mulf %20, %21 : vector<2x32xf32>
    %23 = vector.broadcast %2 : vector<1x32xf32> to vector<2x32xf32>
    %24 = arith.addf %22, %23 : vector<2x32xf32>
    %c0_9 = arith.constant 0 : index
    %c0_10 = arith.constant 0 : index
    %25 = vector.load %arg4[%c0_9, %c0_10] : memref<32x512xf32, #tpu.memory_space<vmem>>, vector<32x512xf32>
    %cst_11 = arith.constant dense<0.000000e+00> : vector<2x512xf32>
    %26 = tpu.matmul %24, %25, %cst_11 {dimension_numbers = #tpu.dot_dimension_numbers<[1], [0], [0], [1], [0, 0, 1, 1], [], []>} : vector<2x32xf32>, vector<32x512xf32>, vector<2x512xf32> -> vector<2x512xf32>
    %c0_12 = arith.constant 0 : index
    %c0_13 = arith.constant 0 : index
    %27 = vector.load %arg5[%c0_12, %c0_13] : memref<1x512xf32, #tpu.memory_space<vmem>>, vector<1x512xf32>
    %28 = vector.broadcast %27 : vector<1x512xf32> to vector<2x512xf32>
    %29 = arith.addf %26, %28 : vector<2x512xf32>
    %cst_14 = arith.constant 0.000000e+00 : f32
    %30 = vector.broadcast %cst_14 : f32 to vector<2x512xf32>
    %31 = arith.maximumf %29, %30 : vector<2x512xf32>
    %c0_15 = arith.constant 0 : index
    %c0_16 = arith.constant 0 : index
    %32 = vector.load %arg6[%c0_15, %c0_16] : memref<512x7xf32, #tpu.memory_space<vmem>>, vector<512x7xf32>
    %cst_17 = arith.constant dense<0.000000e+00> : vector<2x7xf32>
    %33 = tpu.matmul %31, %32, %cst_17 {dimension_numbers = #tpu.dot_dimension_numbers<[1], [0], [0], [1], [0, 0, 1, 1], [], []>} : vector<2x512xf32>, vector<512x7xf32>, vector<2x7xf32> -> vector<2x7xf32>
    %c0_18 = arith.constant 0 : index
    %c0_19 = arith.constant 0 : index
    %34 = vector.load %arg7[%c0_18, %c0_19] : memref<1x7xf32, #tpu.memory_space<vmem>>, vector<1x7xf32>
    %35 = vector.broadcast %34 : vector<1x7xf32> to vector<2x7xf32>
    %36 = arith.addf %33, %35 : vector<2x7xf32>
    %37 = vector.extract_strided_slice %36 {offsets = [0, 0], sizes = [2, 3], strides = [1, 1]} : vector<2x7xf32> to vector<2x3xf32>
    %38 = vector.extract_strided_slice %36 {offsets = [0, 3], sizes = [2, 4], strides = [1, 1]} : vector<2x7xf32> to vector<2x4xf32>
    %39 = arith.mulf %38, %38 : vector<2x4xf32>
    %cst_20 = arith.constant dense<0.000000e+00> : vector<2xf32>
    %40 = vector.multi_reduction <add>, %39, %cst_20 [1] : vector<2x4xf32> to vector<2xf32>
    %41 = vector.shape_cast %40 : vector<2xf32> to vector<2x1xf32>
    %42 = math.sqrt %41 : vector<2x1xf32>
    %cst_21 = arith.constant 9.99999996E-13 : f32
    %43 = vector.broadcast %cst_21 : f32 to vector<2x1xf32>
    %44 = arith.maximumf %42, %43 : vector<2x1xf32>
    %45 = vector.broadcast %44 : vector<2x1xf32> to vector<2x4xf32>
    %46 = arith.divf %38, %45 : vector<2x4xf32>
    %c0_22 = arith.constant 0 : index
    %c0_23 = arith.constant 0 : index
    %47 = vector.load %arg8[%c0_22, %c0_23] : memref<2x3xf32, #tpu.memory_space<vmem>>, vector<2x3xf32>
    tpu.vector_store %arg8[%c0_22, %c0_23], %37 {strides = array<i32>} : memref<2x3xf32, #tpu.memory_space<vmem>>, vector<2x3xf32>,
    %c0_24 = arith.constant 0 : index
    %c0_25 = arith.constant 0 : index
    %48 = vector.load %arg9[%c0_24, %c0_25] : memref<2x4xf32, #tpu.memory_space<vmem>>, vector<2x4xf32>
    tpu.vector_store %arg9[%c0_24, %c0_25], %46 {strides = array<i32>} : memref<2x4xf32, #tpu.memory_space<vmem>>, vector<2x4xf32>,
    return
  }
  func.func @transform_0(%arg0: i32) -> (i32, i32) {
    %c0_i32 = arith.constant 0 : i32
    %c0_i32_0 = arith.constant 0 : i32
    %c0_i32_1 = arith.constant 0 : i32
    return %c0_i32, %c0_i32_0 : i32, i32
  }
  func.func @transform_1(%arg0: i32) -> (i32, i32) {
    %c0_i32 = arith.constant 0 : i32
    %c0_i32_0 = arith.constant 0 : i32
    %c0_i32_1 = arith.constant 0 : i32
    return %c0_i32, %c0_i32_0 : i32, i32
  }
  func.func @transform_2(%arg0: i32) -> (i32, i32) {
    %c0_i32 = arith.constant 0 : i32
    %c0_i32_0 = arith.constant 0 : i32
    %c0_i32_1 = arith.constant 0 : i32
    return %c0_i32, %c0_i32_0 : i32, i32
  }
  func.func @transform_3(%arg0: i32) -> (i32, i32) {
    %c0_i32 = arith.constant 0 : i32
    %c0_i32_0 = arith.constant 0 : i32
    %c0_i32_1 = arith.constant 0 : i32
    return %c0_i32, %c0_i32_0 : i32, i32
  }
  func.func @transform_4(%arg0: i32) -> (i32, i32) {
    %c0_i32 = arith.constant 0 : i32
    %c0_i32_0 = arith.constant 0 : i32
    %c0_i32_1 = arith.constant 0 : i32
    return %c0_i32, %c0_i32_0 : i32, i32
  }
  func.func @transform_5(%arg0: i32) -> (i32, i32) {
    %c0_i32 = arith.constant 0 : i32
    %c0_i32_0 = arith.constant 0 : i32
    %c0_i32_1 = arith.constant 0 : i32
    return %c0_i32, %c0_i32_0 : i32, i32
  }
  func.func @transform_6(%arg0: i32) -> (i32, i32) {
    %c0_i32 = arith.constant 0 : i32
    %c0_i32_0 = arith.constant 0 : i32
    %c0_i32_1 = arith.constant 0 : i32
    return %c0_i32, %c0_i32_0 : i32, i32
  }
  func.func @transform_7(%arg0: i32) -> (i32, i32) {
    %c0_i32 = arith.constant 0 : i32
    %c0_i32_0 = arith.constant 0 : i32
    %c0_i32_1 = arith.constant 0 : i32
    return %c0_i32, %c0_i32_0 : i32, i32
  }
  func.func @transform_8(%arg0: i32) -> (i32, i32) {
    %c0_i32 = arith.constant 0 : i32
    %c0_i32_0 = arith.constant 0 : i32
    %c0_i32_1 = arith.constant 0 : i32
    return %c0_i32, %c0_i32_0 : i32, i32
  }
}

</mosaic_0001>

<llo_original>
// kernel: vit_pose_forward.3
$region0: #{vit_pose_forward.3}
  #allocation0 [shape = 'u32[]', space=smem, size = 0x4, offset = 0x4, fixed_abs, tag = 'smem constant byte address 0x4 - core index']
  #allocation1 [shape = 'u32[144,128]{1,0:T(1,128)}', space=vmem, size = 0x12000, scoped, tag = 'internal scratch']
  %s0 = inlined_call_operand.vmem [shape: f32[2,32], index: 0, kind: input, shape index: {}]
  %s1 = inlined_call_operand.vmem [shape: f32[1,32], index: 1, kind: input, shape index: {}]
  %s2 = inlined_call_operand.vmem [shape: f32[1,32], index: 2, kind: input, shape index: {}]
  %s3 = inlined_call_operand.vmem [shape: f32[32,512], index: 3, kind: input, shape index: {}]
  %s4 = inlined_call_operand.vmem [shape: f32[1,512], index: 4, kind: input, shape index: {}]
  %s5 = inlined_call_operand.vmem [shape: f32[512,7], index: 5, kind: input, shape index: {}]
  %s6 = inlined_call_operand.vmem [shape: f32[1,7], index: 6, kind: input, shape index: {}]
  %s7 = inlined_call_operand.hbm [shape: f32[2,3], index: 7, kind: output, shape index: {0}]
  %s8 = inlined_call_operand.hbm [shape: f32[2,4], index: 8, kind: output, shape index: {1}]
  %9 = xla_tuple %s7, %s8
  %s10 = sld [smem:[#allocation0]]
  $region46: #{vit_pose_forward.3} parent=0
    _
  %s12 = ssub.s32 1, %s10
  %s13 = scalar_select 0, %s12, %s10
  $region1: #{vit_pose_forward.3} parent=0
    #allocation2 [shape = 'u8[1024]{0}', space=vmem, size = 0x400, scoped, tag = 'output window, operand 0, single buffered']
    #allocation3 [shape = 's32[1]{0}', space=sflag, size = 0x4, scoped, tag = 'scoped memory for vit_pose_forward.3']
    #allocation4 [shape = 'u8[1024]{0}', space=vmem, size = 0x400, scoped, tag = 'output window, operand 1, single buffered']
    #allocation5 [shape = 's32[1]{0}', space=sflag, size = 0x4, scoped, tag = 'scoped memory for vit_pose_forward.3']
    %14 = vsyncpa [#allocation3], 0
    %15 = vsyncpa [#allocation5], 0
    // Predicated region
    $region2: #{vit_pose_forward.3} parent=1 // pred_check
      _
    $region3: #{vit_pose_forward.3} parent=1 // pred_check_branch
      %17 = sbr.rel (0) target = $region5
    $region4: #{vit_pose_forward.3} parent=1 // pred_region
      _
    $region5: #{vit_pose_forward.3} parent=1 // pred_fallthru
      _
    // Predicated region
    $region6: #{vit_pose_forward.3} parent=1 // pred_check
      _
    $region7: #{vit_pose_forward.3} parent=1 // pred_check_branch
      %19 = sbr.rel (0) target = $region9
    $region8: #{vit_pose_forward.3} parent=1 // pred_region
      _
    $region9: #{vit_pose_forward.3} parent=1 // pred_fallthru
      _
    // Predicated region
    $region10: #{vit_pose_forward.3} parent=1 // pred_check
      _
    $region11: #{vit_pose_forward.3} parent=1 // pred_check_branch
      %21 = sbr.rel (0) target = $region13
    $region12: #{vit_pose_forward.3} parent=1 // pred_region
      _
    $region13: #{vit_pose_forward.3} parent=1 // pred_fallthru
      _
    // Predicated region
    $region14: #{vit_pose_forward.3} parent=1 // pred_check
      _
    $region15: #{vit_pose_forward.3} parent=1 // pred_check_branch
      %23 = sbr.rel (0) target = $region17
    $region16: #{vit_pose_forward.3} parent=1 // pred_region
      _
    $region17: #{vit_pose_forward.3} parent=1 // pred_fallthru
      _
    // Predicated region
    $region18: #{vit_pose_forward.3} parent=1 // pred_check
      _
    $region19: #{vit_pose_forward.3} parent=1 // pred_check_branch
      %25 = sbr.rel (0) target = $region21
    $region20: #{vit_pose_forward.3} parent=1 // pred_region
      _
    $region21: #{vit_pose_forward.3} parent=1 // pred_fallthru
      _
    // Predicated region
    $region22: #{vit_pose_forward.3} parent=1 // pred_check
      _
    $region23: #{vit_pose_forward.3} parent=1 // pred_check_branch
      %27 = sbr.rel (0) target = $region25
    $region24: #{vit_pose_forward.3} parent=1 // pred_region
      _
    $region25: #{vit_pose_forward.3} parent=1 // pred_fallthru
      _
    // Predicated region
    $region26: #{vit_pose_forward.3} parent=1 // pred_check
      _
    $region27: #{vit_pose_forward.3} parent=1 // pred_check_branch
      %29 = sbr.rel (0) target = $region29
    $region28: #{vit_pose_forward.3} parent=1 // pred_region
      _
    $region29: #{vit_pose_forward.3} parent=1 // pred_fallthru
      _
    %v30 = vld [vmem:[%s0] sm:$0x3]
    %v31 = vld [vmem:[%s1] sm:$0x1]
    %v32 = vld [vmem:[%s2] sm:$0x1]
    %vm33 = vcmask 254976
    %v34 = vsel %vm33, %v30, 0.0
    %35 = vadd.xlane.f32.xlu0 %v34
    %v36 = vpop.xlane.xlu0 %35
    %v37 = vrcp.pop 32.0
    %v38 = vmul.f32 %v36, %v37
    %v39 = vsub.f32 %v30, %v38
    %v40 = vmul.f32 %v39, %v39
    %v41 = vsel %vm33, %v40, 0.0
    %42 = vadd.xlane.f32.xlu0 %v41
    %v43 = vpop.xlane.xlu0 %42
    %v44 = vmul.f32 %v43, %v37
    %v45 = vadd.f32 %v44, 1e-12
    %v46 = vrsqrt.pop %v45
    %v47 = vmul.f32 %v39, %v46
    %v49 = vlaneseq
    %v50 = vshrl.u32 %v49, 7
    %v51 = vsub.s32 0, %v50
    %v52 = vrot.slane %v31, %v51
    %v54 = vmul.f32 %v47, %v52
    %v56 = vlaneseq
    %v57 = vshrl.u32 %v56, 7
    %v58 = vsub.s32 0, %v57
    %v59 = vrot.slane %v32, %v58
    %v61 = vadd.f32 %v54, %v59
    %v62 = vld [vmem:[%s3] sm:$0xff]
    %v63 = vld [vmem:[%s3 + $0x8] sm:$0xff]
    %v64 = vld [vmem:[%s3 + $0x10] sm:$0xff]
    %v65 = vld [vmem:[%s3 + $0x18] sm:$0xff]
    %v66 = vld [vmem:[%s3 + $0x20] sm:$0xff]
    %v67 = vld [vmem:[%s3 + $0x28] sm:$0xff]
    %v68 = vld [vmem:[%s3 + $0x30] sm:$0xff]
    %v69 = vld [vmem:[%s3 + $0x38] sm:$0xff]
    %v70 = vld [vmem:[%s3 + $0x40] sm:$0xff]
    %v71 = vld [vmem:[%s3 + $0x48] sm:$0xff]
    %v72 = vld [vmem:[%s3 + $0x50] sm:$0xff]
    %v73 = vld [vmem:[%s3 + $0x58] sm:$0xff]
    %v74 = vld [vmem:[%s3 + $0x60] sm:$0xff]
    %v75 = vld [vmem:[%s3 + $0x68] sm:$0xff]
    %v76 = vld [vmem:[%s3 + $0x70] sm:$0xff]
    %v77 = vld [vmem:[%s3 + $0x78] sm:$0xff]
    %v78 = vld [vmem:[%s4] sm:$0xf]
    %v80 = vlaneseq
    %v81 = vshrl.u32 %v80, 7
    %v82 = vsub.s32 0, %v81
    %v83 = vrot.slane %v78, %v82
    %v84 = vlaneseq
    %v85 = vshrl.u32 %v84, 7
    %v86 = vsub.s32 1, %v85
    %v87 = vrot.slane %v78, %v86
    %v88 = vlaneseq
    %v89 = vshrl.u32 %v88, 7
    %v90 = vsub.s32 2, %v89
    %v91 = vrot.slane %v78, %v90
    %v92 = vlaneseq
    %v93 = vshrl.u32 %v92, 7
    %v94 = vsub.s32 3, %v93
    %v95 = vrot.slane %v78, %v94
    %vm100 = vcmask 261120
    %v102 = vsel %vm100, %v61, 0
    %104 = vmatprep.subr.mxu0 %v63
    %105 = vmatpush1.msra.mxu0 %v62
    %106 = vmatprep.subr.mxu0 %v67
    %107 = vmatpush1.msra.mxu0 %v66
    %108 = vmatprep.subr.mxu0 %v71
    %109 = vmatpush1.msra.mxu0 %v70
    %110 = vmatprep.subr.mxu0 %v75
    %111 = vmatpush1.msra.mxu0 %v74
    %112 = vmatprep.subr.mxu0 0.0
    %113 = vmatpush1.msra.mxu0 0.0
    %114 = vmatprep.subr.mxu0 0.0
    %115 = vmatpush1.msra.mxu0 0.0
    %116 = vmatprep.subr.mxu0 0.0
    %117 = vmatpush1.msra.mxu0 0.0
    %118 = vmatprep.subr.mxu0 0.0
    %119 = vmatpush1.msra.mxu0 0.0
    %120 = vmatprep.subr.mxu0 0.0
    %121 = vmatpush1.msra.mxu0 0.0
    %122 = vmatprep.subr.mxu0 0.0
    %123 = vmatpush1.msra.mxu0 0.0
    %124 = vmatprep.subr.mxu0 0.0
    %125 = vmatpush1.msra.mxu0 0.0
    %126 = vmatprep.subr.mxu0 0.0
    %127 = vmatpush1.msra.mxu0 0.0
    %128 = vmatprep.subr.mxu0 0.0
    %129 = vmatpush1.msra.mxu0 0.0
    %130 = vmatprep.subr.mxu0 0.0
    %131 = vmatpush1.msra.mxu0 0.0
    %132 = vmatprep.subr.mxu0 0.0
    %133 = vmatpush1.msra.mxu0 0.0
    %134 = vmatprep.subr.mxu0 0.0
    %135 = vmatpush1.msra.mxu0 0.0
    %136 = vmatprep.subr.mxu0 0.0
    %137 = vmatpush1.msra.mxu0 0.0
    %138 = vmatprep.subr.mxu0 0.0
    %139 = vmatpush1.msra.mxu0 0.0
    %140 = vmatprep.subr.mxu0 0.0
    %141 = vmatpush1.msra.mxu0 0.0
    %142 = vmatprep.subr.mxu0 0.0
    %143 = vmatpush1.msra.mxu0 0.0
    %144 = vmatprep.subr.mxu0 0.0
    %145 = vmatpush1.msra.mxu0 0.0
    %146 = vmatprep.subr.mxu0 0.0
    %147 = vmatpush1.msra.mxu0 0.0
    %148 = vmatprep.subr.mxu0 0.0
    %149 = vmatpush1.msra.mxu0 0.0
    %150 = vmatprep.subr.mxu0 0.0
    %151 = vmatpush1.msra.mxu0 0.0
    %152 = vmatprep.subr.mxu0 0.0
    %153 = vmatpush1.msra.mxu0 0.0
    %154 = vmatprep.subr.mxu0 0.0
    %155 = vmatpush1.msra.mxu0 0.0
    %156 = vmatprep.subr.mxu0 0.0
    %157 = vmatpush1.msra.mxu0 0.0
    %158 = vmatprep.subr.mxu0 0.0
    %159 = vmatpush1.msra.mxu0 0.0
    %160 = vmatprep.subr.mxu0 0.0
    %161 = vmatpush1.msra.mxu0 0.0
    %162 = vmatprep.subr.mxu0 0.0
    %163 = vmatpush1.msra.mxu0 0.0
    %164 = vmatprep.subr.mxu0 0.0
    %165 = vmatpush1.msra.mxu0 0.0
    %166 = vmatprep.subr.mxu0 0.0
    %167 = vmatpush1.msra.mxu0 0.0
    %168 = vmatprep.mubr.f32.mxu0 0.0
    %169 = vmatmul.mubr.f32.gmra.mrb[0].mxu0 %v102
    %v170 = vpop.f32.mrb[0].mxu0
    %v171 = vadd.f32 %v83, %v170
    %v172 = vpop.f32.mrb[0].mxu0
    %v173 = vadd.f32 %v87, %v172
    %174 = vdwg.mxu0
    %175 = vmatprep.subr.mxu0 %v65
    %176 = vmatpush1.msra.mxu0 %v64
    %177 = vmatprep.subr.mxu0 %v69
    %178 = vmatpush1.msra.mxu0 %v68
    %179 = vmatprep.subr.mxu0 %v73
    %180 = vmatpush1.msra.mxu0 %v72
    %181 = vmatprep.subr.mxu0 %v77
    %182 = vmatpush1.msra.mxu0 %v76
    %183 = vmatprep.subr.mxu0 0.0
    %184 = vmatpush1.msra.mxu0 0.0
    %185 = vmatprep.subr.mxu0 0.0
    %186 = vmatpush1.msra.mxu0 0.0
    %187 = vmatprep.subr.mxu0 0.0
    %188 = vmatpush1.msra.mxu0 0.0
    %189 = vmatprep.subr.mxu0 0.0
    %190 = vmatpush1.msra.mxu0 0.0
    %191 = vmatprep.subr.mxu0 0.0
    %192 = vmatpush1.msra.mxu0 0.0
    %193 = vmatprep.subr.mxu0 0.0
    %194 = vmatpush1.msra.mxu0 0.0
    %195 = vmatprep.subr.mxu0 0.0
    %196 = vmatpush1.msra.mxu0 0.0
    %197 = vmatprep.subr.mxu0 0.0
    %198 = vmatpush1.msra.mxu0 0.0
    %199 = vmatprep.subr.mxu0 0.0
    %200 = vmatpush1.msra.mxu0 0.0
    %201 = vmatprep.subr.mxu0 0.0
    %202 = vmatpush1.msra.mxu0 0.0
    %203 = vmatprep.subr.mxu0 0.0
    %204 = vmatpush1.msra.mxu0 0.0
    %205 = vmatprep.subr.mxu0 0.0
    %206 = vmatpush1.msra.mxu0 0.0
    %207 = vmatprep.subr.mxu0 0.0
    %208 = vmatpush1.msra.mxu0 0.0
    %209 = vmatprep.subr.mxu0 0.0
    %210 = vmatpush1.msra.mxu0 0.0
    %211 = vmatprep.subr.mxu0 0.0
    %212 = vmatpush1.msra.mxu0 0.0
    %213 = vmatprep.subr.mxu0 0.0
    %214 = vmatpush1.msra.mxu0 0.0
    %215 = vmatprep.subr.mxu0 0.0
    %216 = vmatpush1.msra.mxu0 0.0
    %217 = vmatprep.subr.mxu0 0.0
    %218 = vmatpush1.msra.mxu0 0.0
    %219 = vmatprep.subr.mxu0 0.0
    %220 = vmatpush1.msra.mxu0 0.0
    %221 = vmatprep.subr.mxu0 0.0
    %222 = vmatpush1.msra.mxu0 0.0
    %223 = vmatprep.subr.mxu0 0.0
    %224 = vmatpush1.msra.mxu0 0.0
    %225 = vmatprep.subr.mxu0 0.0
    %226 = vmatpush1.msra.mxu0 0.0
    %227 = vmatprep.subr.mxu0 0.0
    %228 = vmatpush1.msra.mxu0 0.0
    %229 = vmatprep.subr.mxu0 0.0
    %230 = vmatpush1.msra.mxu0 0.0
    %231 = vmatprep.subr.mxu0 0.0
    %232 = vmatpush1.msra.mxu0 0.0
    %233 = vmatprep.subr.mxu0 0.0
    %234 = vmatpush1.msra.mxu0 0.0
    %235 = vmatprep.subr.mxu0 0.0
    %236 = vmatpush1.msra.mxu0 0.0
    %237 = vmatprep.subr.mxu0 0.0
    %238 = vmatpush1.msra.mxu0 0.0
    %239 = vmatprep.mubr.f32.mxu0 0.0
    %240 = vmatmul.mubr.f32.gmra.mrb[0].mxu0 %v102
    %v241 = vpop.f32.mrb[0].mxu0
    %v242 = vadd.f32 %v91, %v241
    %v243 = vpop.f32.mrb[0].mxu0
    %v244 = vadd.f32 %v95, %v243
    %245 = vdwg.mxu0
    %v246 = vmax.f32 %v171, 0.0
    %v247 = vmax.f32 %v173, 0.0
    %v248 = vmax.f32 %v242, 0.0
    %v249 = vmax.f32 %v244, 0.0
    %v250 = vld [vmem:[%s5] sm:$0xff]
    %v251 = vld [vmem:[%s5 + $0x8] sm:$0xff]
    %v252 = vld [vmem:[%s5 + $0x10] sm:$0xff]
    %v253 = vld [vmem:[%s5 + $0x18] sm:$0xff]
    %v254 = vld [vmem:[%s5 + $0x20] sm:$0xff]
    %v255 = vld [vmem:[%s5 + $0x28] sm:$0xff]
    %v256 = vld [vmem:[%s5 + $0x30] sm:$0xff]
    %v257 = vld [vmem:[%s5 + $0x38] sm:$0xff]
    %v258 = vld [vmem:[%s5 + $0x40] sm:$0xff]
    %v259 = vld [vmem:[%s5 + $0x48] sm:$0xff]
    %v260 = vld [vmem:[%s5 + $0x50] sm:$0xff]
    %v261 = vld [vmem:[%s5 + $0x58] sm:$0xff]
    %v262 = vld [vmem:[%s5 + $0x60] sm:$0xff]
    %v263 = vld [vmem:[%s5 + $0x68] sm:$0xff]
    %v264 = vld [vmem:[%s5 + $0x70] sm:$0xff]
    %v265 = vld [vmem:[%s5 + $0x78] sm:$0xff]
    %v266 = vld [vmem:[%s5 + $0x80] sm:$0xff]
    %v267 = vld [vmem:[%s5 + $0x88] sm:$0xff]
    %v268 = vld [vmem:[%s5 + $0x90] sm:$0xff]
    %v269 = vld [vmem:[%s5 + $0x98] sm:$0xff]
    %v270 = vld [vmem:[%s5 + $0xa0] sm:$0xff]
    %v271 = vld [vmem:[%s5 + $0xa8] sm:$0xff]
    %v272 = vld [vmem:[%s5 + $0xb0] sm:$0xff]
    %v273 = vld [vmem:[%s5 + $0xb8] sm:$0xff]
    %v274 = vld [vmem:[%s5 + $0xc0] sm:$0xff]
    %v275 = vld [vmem:[%s5 + $0xc8] sm:$0xff]
    %v276 = vld [vmem:[%s5 + $0xd0] sm:$0xff]
    %v277 = vld [vmem:[%s5 + $0xd8] sm:$0xff]
    %v278 = vld [vmem:[%s5 + $0xe0] sm:$0xff]
    %v279 = vld [vmem:[%s5 + $0xe8] sm:$0xff]
    %v280 = vld [vmem:[%s5 + $0xf0] sm:$0xff]
    %v281 = vld [vmem:[%s5 + $0xf8] sm:$0xff]
    %v282 = vld [vmem:[%s5 + $0x100] sm:$0xff]
    %v283 = vld [vmem:[%s5 + $0x108] sm:$0xff]
    %v284 = vld [vmem:[%s5 + $0x110] sm:$0xff]
    %v285 = vld [vmem:[%s5 + $0x118] sm:$0xff]
    %v286 = vld [vmem:[%s5 + $0x120] sm:$0xff]
    %v287 = vld [vmem:[%s5 + $0x128] sm:$0xff]
    %v288 = vld [vmem:[%s5 + $0x130] sm:$0xff]
    %v289 = vld [vmem:[%s5 + $0x138] sm:$0xff]
    %v290 = vld [vmem:[%s5 + $0x140] sm:$0xff]
    %v291 = vld [vmem:[%s5 + $0x148] sm:$0xff]
    %v292 = vld [vmem:[%s5 + $0x150] sm:$0xff]
    %v293 = vld [vmem:[%s5 + $0x158] sm:$0xff]
    %v294 = vld [vmem:[%s5 + $0x160] sm:$0xff]
    %v295 = vld [vmem:[%s5 + $0x168] sm:$0xff]
    %v296 = vld [vmem:[%s5 + $0x170] sm:$0xff]
    %v297 = vld [vmem:[%s5 + $0x178] sm:$0xff]
    %v298 = vld [vmem:[%s5 + $0x180] sm:$0xff]
    %v299 = vld [vmem:[%s5 + $0x188] sm:$0xff]
    %v300 = vld [vmem:[%s5 + $0x190] sm:$0xff]
    %v301 = vld [vmem:[%s5 + $0x198] sm:$0xff]
    %v302 = vld [vmem:[%s5 + $0x1a0] sm:$0xff]
    %v303 = vld [vmem:[%s5 + $0x1a8] sm:$0xff]
    %v304 = vld [vmem:[%s5 + $0x1b0] sm:$0xff]
    %v305 = vld [vmem:[%s5 + $0x1b8] sm:$0xff]
    %v306 = vld [vmem:[%s5 + $0x1c0] sm:$0xff]
    %v307 = vld [vmem:[%s5 + $0x1c8] sm:$0xff]
    %v308 = vld [vmem:[%s5 + $0x1d0] sm:$0xff]
    %v309 = vld [vmem:[%s5 + $0x1d8] sm:$0xff]
    %v310 = vld [vmem:[%s5 + $0x1e0] sm:$0xff]
    %v311 = vld [vmem:[%s5 + $0x1e8] sm:$0xff]
    %v312 = vld [vmem:[%s5 + $0x1f0] sm:$0xff]
    %v313 = vld [vmem:[%s5 + $0x1f8] sm:$0xff]
    %v314 = vld [vmem:[%s6] sm:$0x1]
    %v316 = vlaneseq
    %v317 = vshrl.u32 %v316, 7
    %v318 = vsub.s32 0, %v317
    %v319 = vrot.slane %v314, %v318
    %321 = vmatprep.subr.mxu0 0.0
    %322 = vmatpush1.msra.mxu0 %v250
    %323 = vmatprep.subr.mxu0 0.0
    %324 = vmatpush1.msra.mxu0 %v251
    %325 = vmatprep.subr.mxu0 0.0
    %326 = vmatpush1.msra.mxu0 %v252
    %327 = vmatprep.subr.mxu0 0.0
    %328 = vmatpush1.msra.mxu0 %v253
    %329 = vmatprep.subr.mxu0 0.0
    %330 = vmatpush1.msra.mxu0 %v254
    %331 = vmatprep.subr.mxu0 0.0
    %332 = vmatpush1.msra.mxu0 %v255
    %333 = vmatprep.subr.mxu0 0.0
    %334 = vmatpush1.msra.mxu0 %v256
    %335 = vmatprep.subr.mxu0 0.0
    %336 = vmatpush1.msra.mxu0 %v257
    %337 = vmatprep.subr.mxu0 0.0
    %338 = vmatpush1.msra.mxu0 %v258
    %339 = vmatprep.subr.mxu0 0.0
    %340 = vmatpush1.msra.mxu0 %v259
    %341 = vmatprep.subr.mxu0 0.0
    %342 = vmatpush1.msra.mxu0 %v260
    %343 = vmatprep.subr.mxu0 0.0
    %344 = vmatpush1.msra.mxu0 %v261
    %345 = vmatprep.subr.mxu0 0.0
    %346 = vmatpush1.msra.mxu0 %v262
    %347 = vmatprep.subr.mxu0 0.0
    %348 = vmatpush1.msra.mxu0 %v263
    %349 = vmatprep.subr.mxu0 0.0
    %350 = vmatpush1.msra.mxu0 %v264
    %351 = vmatprep.subr.mxu0 0.0
    %352 = vmatpush1.msra.mxu0 %v265
    %353 = vmatprep.subr.mxu0 0.0
    %354 = vmatpush1.msra.mxu0 %v266
    %355 = vmatprep.subr.mxu0 0.0
    %356 = vmatpush1.msra.mxu0 %v267
    %357 = vmatprep.subr.mxu0 0.0
    %358 = vmatpush1.msra.mxu0 %v268
    %359 = vmatprep.subr.mxu0 0.0
    %360 = vmatpush1.msra.mxu0 %v269
    %361 = vmatprep.subr.mxu0 0.0
    %362 = vmatpush1.msra.mxu0 %v270
    %363 = vmatprep.subr.mxu0 0.0
    %364 = vmatpush1.msra.mxu0 %v271
    %365 = vmatprep.subr.mxu0 0.0
    %366 = vmatpush1.msra.mxu0 %v272
    %367 = vmatprep.subr.mxu0 0.0
    %368 = vmatpush1.msra.mxu0 %v273
    %369 = vmatprep.subr.mxu0 0.0
    %370 = vmatpush1.msra.mxu0 %v274
    %371 = vmatprep.subr.mxu0 0.0
    %372 = vmatpush1.msra.mxu0 %v275
    %373 = vmatprep.subr.mxu0 0.0
    %374 = vmatpush1.msra.mxu0 %v276
    %375 = vmatprep.subr.mxu0 0.0
    %376 = vmatpush1.msra.mxu0 %v277
    %377 = vmatprep.subr.mxu0 0.0
    %378 = vmatpush1.msra.mxu0 %v278
    %379 = vmatprep.subr.mxu0 0.0
    %380 = vmatpush1.msra.mxu0 %v279
    %381 = vmatprep.subr.mxu0 0.0
    %382 = vmatpush1.msra.mxu0 %v280
    %383 = vmatprep.subr.mxu0 0.0
    %384 = vmatpush1.msra.mxu0 %v281
    %385 = vmatprep.mubr.f32.mxu0 %v247
    %386 = vmatmul.mubr.f32.gmra.mrb[0].mxu0 %v246
    %v387 = vpop.f32.mrb[0].mxu0
    %v388 = vadd.f32 %v319, %v387
    %v389 = vpop.f32.mrb[0].mxu0
    %390 = vdwg.mxu0
    %391 = vmatprep.subr.mxu0 0.0
    %392 = vmatpush1.msra.mxu0 %v282
    %393 = vmatprep.subr.mxu0 0.0
    %394 = vmatpush1.msra.mxu0 %v283
    %395 = vmatprep.subr.mxu0 0.0
    %396 = vmatpush1.msra.mxu0 %v284
    %397 = vmatprep.subr.mxu0 0.0
    %398 = vmatpush1.msra.mxu0 %v285
    %399 = vmatprep.subr.mxu0 0.0
    %400 = vmatpush1.msra.mxu0 %v286
    %401 = vmatprep.subr.mxu0 0.0
    %402 = vmatpush1.msra.mxu0 %v287
    %403 = vmatprep.subr.mxu0 0.0
    %404 = vmatpush1.msra.mxu0 %v288
    %405 = vmatprep.subr.mxu0 0.0
    %406 = vmatpush1.msra.mxu0 %v289
    %407 = vmatprep.subr.mxu0 0.0
    %408 = vmatpush1.msra.mxu0 %v290
    %409 = vmatprep.subr.mxu0 0.0
    %410 = vmatpush1.msra.mxu0 %v291
    %411 = vmatprep.subr.mxu0 0.0
    %412 = vmatpush1.msra.mxu0 %v292
    %413 = vmatprep.subr.mxu0 0.0
    %414 = vmatpush1.msra.mxu0 %v293
    %415 = vmatprep.subr.mxu0 0.0
    %416 = vmatpush1.msra.mxu0 %v294
    %417 = vmatprep.subr.mxu0 0.0
    %418 = vmatpush1.msra.mxu0 %v295
    %419 = vmatprep.subr.mxu0 0.0
    %420 = vmatpush1.msra.mxu0 %v296
    %421 = vmatprep.subr.mxu0 0.0
    %422 = vmatpush1.msra.mxu0 %v297
    %423 = vmatprep.subr.mxu0 0.0
    %424 = vmatpush1.msra.mxu0 %v298
    %425 = vmatprep.subr.mxu0 0.0
    %426 = vmatpush1.msra.mxu0 %v299
    %427 = vmatprep.subr.mxu0 0.0
    %428 = vmatpush1.msra.mxu0 %v300
    %429 = vmatprep.subr.mxu0 0.0
    %430 = vmatpush1.msra.mxu0 %v301
    %431 = vmatprep.subr.mxu0 0.0
    %432 = vmatpush1.msra.mxu0 %v302
    %433 = vmatprep.subr.mxu0 0.0
    %434 = vmatpush1.msra.mxu0 %v303
    %435 = vmatprep.subr.mxu0 0.0
    %436 = vmatpush1.msra.mxu0 %v304
    %437 = vmatprep.subr.mxu0 0.0
    %438 = vmatpush1.msra.mxu0 %v305
    %439 = vmatprep.subr.mxu0 0.0
    %440 = vmatpush1.msra.mxu0 %v306
    %441 = vmatprep.subr.mxu0 0.0
    %442 = vmatpush1.msra.mxu0 %v307
    %443 = vmatprep.subr.mxu0 0.0
    %444 = vmatpush1.msra.mxu0 %v308
    %445 = vmatprep.subr.mxu0 0.0
    %446 = vmatpush1.msra.mxu0 %v309
    %447 = vmatprep.subr.mxu0 0.0
    %448 = vmatpush1.msra.mxu0 %v310
    %449 = vmatprep.subr.mxu0 0.0
    %450 = vmatpush1.msra.mxu0 %v311
    %451 = vmatprep.subr.mxu0 0.0
    %452 = vmatpush1.msra.mxu0 %v312
    %453 = vmatprep.subr.mxu0 0.0
    %454 = vmatpush1.msra.mxu0 %v313
    %455 = vmatprep.mubr.f32.mxu0 %v249
    %456 = vmatmul.mubr.f32.gmra.mrb[0].mxu0 %v248
    %v457 = vpop.f32.mrb[0].mxu0
    %v458 = vadd.f32 %v388, %v457
    %v459 = vpop.f32.mrb[0].mxu0
    %460 = vdwg.mxu0
    %v461 = vmul.f32 %v458, %v458
    %463 = vrot.lane.b32.xlu0 %v461, 125
    %v464 = vpop.permute.xlu0 %463
    %vm466 = vcmask 25600
    %v467 = vsel %vm466, %v464, 0.0
    %468 = vadd.xlane.f32.xlu0 %v467
    %v469 = vpop.xlane.xlu0 %468
    %v470 = vrsqrt.pop %v469
    %v471 = vmul.f32 %v469, %v470
    %vm472 = vcmp.eq.f32.partialorder %v469, inf
    %v473 = vsel %vm472, %v469, %v471
    %vm474 = vcmp.eq.f32.partialorder %v469, 0.0
    %v475 = vand.u32 %v469, 2147483648
    %v476 = vsel %vm474, %v475, %v473
    %v477 = vmax.f32 %v476, 1e-12
    %v478 = vrcp.pop %v477
    %v479 = vmul.f32 %v458, %v478
    %vm480 = vcmask 17408
    %481 = vst.msk [vmem:[#allocation2] sm:$0x3] %vm480, %v458
    %483 = vrot.lane.b32.xlu0 %v479, 125
    %v484 = vpop.permute.xlu0 %483
    %486 = vst.msk [vmem:[#allocation4] sm:$0x3] %vm466, %v484
    // Predicated region
    $region30: #{vit_pose_forward.3} parent=1 // pred_check
      _
    $region31: #{vit_pose_forward.3} parent=1 // pred_check_branch
      %488 = sbr.rel (0) target = $region33
    $region32: #{vit_pose_forward.3} parent=1 // pred_region
      %s490 = ssub.s32 32, 32
      %491 = vsyncadd [#allocation3], %s490
      %s493 = sshll.u32 [#allocation2], 4
      %s494 = int_to_ptr.vmem [resolvable:$true] %s493
      %496 = dma.vmem_to_hbm [thread:$0]  %s494, 32, %s7, [#allocation3]
    $region33: #{vit_pose_forward.3} parent=1 // pred_fallthru
      _
    // Predicated region
    $region34: #{vit_pose_forward.3} parent=1 // pred_check
      _
    $region35: #{vit_pose_forward.3} parent=1 // pred_check_branch
      %498 = sbr.rel (0) target = $region37
    $region36: #{vit_pose_forward.3} parent=1 // pred_region
      %s500 = ssub.s32 32, 32
      %501 = vsyncadd [#allocation5], %s500
      %s503 = sshll.u32 [#allocation4], 4
      %s504 = int_to_ptr.vmem [resolvable:$true] %s503
      %506 = dma.vmem_to_hbm [thread:$0]  %s504, 32, %s8, [#allocation5]
    $region37: #{vit_pose_forward.3} parent=1 // pred_fallthru
      _
    // Predicated region
    $region38: #{vit_pose_forward.3} parent=1 // pred_check
      _
    $region39: #{vit_pose_forward.3} parent=1 // pred_check_branch
      %508 = sbr.rel (0) target = $region41
    $region40: #{vit_pose_forward.3} parent=1 // pred_region
      %509 = dma.done [#allocation3], 32
    $region41: #{vit_pose_forward.3} parent=1 // pred_fallthru
      _
    // Predicated region
    $region42: #{vit_pose_forward.3} parent=1 // pred_check
      _
    $region43: #{vit_pose_forward.3} parent=1 // pred_check_branch
      %511 = sbr.rel (0) target = $region45
    $region44: #{vit_pose_forward.3} parent=1 // pred_region
      %512 = dma.done [#allocation5], 32
    $region45: #{vit_pose_forward.3} parent=1 // pred_fallthru
      _
    %513 = vsyncpa [#allocation3], 1
    %514 = vsyncpa [#allocation5], 1

// kernel: vit_pose_forward.2
$region0: #{vit_pose_forward.2}
  #allocation0 [shape = 'u32[]', space=smem, size = 0x4, offset = 0x4, fixed_abs, tag = 'smem constant byte address 0x4 - core index']
  #allocation1 [shape = 'u32[144,128]{1,0:T(1,128)}', space=vmem, size = 0x12000, scoped, tag = 'internal scratch']
  %s0 = inlined_call_operand.vmem [shape: f32[2,17,48], index: 0, kind: input, shape index: {}]
  %s1 = inlined_call_operand.vmem [shape: f32[48,32], index: 1, kind: input, shape index: {}]
  %s2 = inlined_call_operand.vmem [shape: f32[17,32], index: 2, kind: input, shape index: {}]
  %s3 = inlined_call_operand.vmem [shape: f32[2,1,32], index: 3, kind: input, shape index: {}]
  %s4 = inlined_call_operand.vmem [shape: f32[2,1,32], index: 4, kind: input, shape index: {}]
  %s5 = inlined_call_operand.vmem [shape: f32[2,32,96], index: 5, kind: input, shape index: {}]
  %s6 = inlined_call_operand.vmem [shape: f32[2,1,96], index: 6, kind: input, shape index: {}]
  %s7 = inlined_call_operand.vmem [shape: f32[2,32,32], index: 7, kind: input, shape index: {}]
  %s8 = inlined_call_operand.vmem [shape: f32[2,1,32], index: 8, kind: input, shape index: {}]
  %s9 = inlined_call_operand.vmem [shape: f32[2,1,32], index: 9, kind: input, shape index: {}]
  %s10 = inlined_call_operand.vmem [shape: f32[2,1,32], index: 10, kind: input, shape index: {}]
  %s11 = inlined_call_operand.vmem [shape: f32[2,32,128], index: 11, kind: input, shape index: {}]
  %s12 = inlined_call_operand.vmem [shape: f32[2,1,128], index: 12, kind: input, shape index: {}]
  %s13 = inlined_call_operand.vmem [shape: f32[2,128,32], index: 13, kind: input, shape index: {}]
  %s14 = inlined_call_operand.vmem [shape: f32[2,1,32], index: 14, kind: input, shape index: {}]
  %s15 = inlined_call_operand.vmem [shape: f32[2,17,32], index: 15, kind: output, shape index: {}]
  %s16 = sld [smem:[#allocation0]]
  $region97: #{vit_pose_forward.2} parent=0
    _
  %s18 = ssub.s32 1, %s16
  %s19 = scalar_select 0, %s18, %s16
  loop: start=0, step=1, limit=6
  $region2: #{vit_pose_forward.2} parent=0 // loop_pre_header
    _
  $region3: #{vit_pose_forward.2} parent=0 // loop_header
    %s21 = sphi 0, %s25
    %p22 = scmp.ge.s32.totalorder %s21, 6
    %s28 = sphi 0, %s40
    %s29 = sphi 0, %s36
    %s30 = sphi 0, %s28
    %s31 = sphi 0, %s29
    %s32 = sphi 0, %s30
    %s33 = sphi 0, %s31
    %s43 = sphi 0, %s45
    %s46 = sphi 0, %s43
    %s47 = sphi 0, %s46
    %s63 = sphi 0, %s47
    %s67 = sphi 0, %s67
    %s69 = sphi 0, %s67
    %s70 = sphi 0, %s69
    %s84 = sphi 0, %s70
    %s88 = sphi 0, %s88
    %s90 = sphi 0, %s88
    %s91 = sphi 0, %s90
    %s105 = sphi 0, %s91
    %s111 = sphi 0, %s113
    %s114 = sphi 0, %s111
    %s115 = sphi 0, %s114
    %s131 = sphi 0, %s115
    %s137 = sphi 0, %s139
    %s140 = sphi 0, %s137
    %s141 = sphi 0, %s140
    %s157 = sphi 0, %s141
    %s163 = sphi 0, %s165
    %s166 = sphi 0, %s163
    %s167 = sphi 0, %s166
    %s183 = sphi 0, %s167
    %s189 = sphi 0, %s191
    %s192 = sphi 0, %s189
    %s193 = sphi 0, %s192
    %s209 = sphi 0, %s193
    %s215 = sphi 0, %s217
    %s218 = sphi 0, %s215
    %s219 = sphi 0, %s218
    %s235 = sphi 0, %s219
    %s241 = sphi 0, %s243
    %s244 = sphi 0, %s241
    %s245 = sphi 0, %s244
    %s261 = sphi 0, %s245
    %s267 = sphi 0, %s269
    %s270 = sphi 0, %s267
    %s271 = sphi 0, %s270
    %s287 = sphi 0, %s271
    %s293 = sphi 0, %s295
    %s296 = sphi 0, %s293
    %s297 = sphi 0, %s296
    %s313 = sphi 0, %s297
    %s319 = sphi 0, %s321
    %s322 = sphi 0, %s319
    %s323 = sphi 0, %s322
    %s339 = sphi 0, %s323
    %s345 = sphi 0, %s347
    %s348 = sphi 0, %s345
    %s349 = sphi 0, %s348
    %s365 = sphi 0, %s349
    %s371 = sphi 0, %s373
    %s374 = sphi 0, %s371
    %s375 = sphi 0, %s374
    %s391 = sphi 0, %s375
    %s397 = sphi 0, %s399
    %s400 = sphi 0, %s397
    %s401 = sphi 0, %s400
    %s417 = sphi 0, %s401
    %s423 = sphi 0, %s425
    %s426 = sphi 0, %s423
    %s427 = sphi 0, %s426
    %s443 = sphi 0, %s427
  $region4: #{vit_pose_forward.2} parent=0 // loop_header_branch
    %24 = sbr.rel (%p22) target = $region8
  $region5: #{vit_pose_forward.2} parent=0 // loop_body
    %s26 = ssub.s32 %s21, 1
    %s27 = ssub.s32 %s21, 2
    %s34 = sadd.s32 1, %s29
    %p35 = scmp.ge.s32.totalorder %s34, 2
    %s36 = scalar_select %p35, 0, %s34
    %s37 = sadd.s32 1, %s28
    %s38 = scalar_select %p35, %s37, %s28
    %p39 = scmp.ge.s32.totalorder %s38, 2
    %s40 = scalar_select %p39, 0, %s38
    %s41 = ssub.s32 %s28, %s40
    %p42 = scmp.eq.s32.totalorder %s41, 0
    %s44 = sadd.s32 %s43, 1
    %s45 = scalar_select %p42, %s43, %s44
    %p48 = pneg %p42
    %p49 = scmp.eq.s32.totalorder %s21, 3
    %p50 = por %p48, %p49
    %p51 = scmp.ne.s32.totalorder %s43, %s46
    %p52 = scmp.eq.s32.totalorder %s21, 0
    %p53 = por %p51, %p52
    %p54 = scmp.ne.s32.totalorder %s43, %s46
    %p55 = scmp.eq.s32.totalorder %s26, 3
    %p56 = por %p54, %p55
    %p57 = scmp.ne.s32.totalorder %s46, %s47
    %p58 = scmp.eq.s32.totalorder %s26, 0
    %p59 = por %p57, %p58
    %p60 = scmp.ne.s32.totalorder %s46, %s47
    %p61 = scmp.eq.s32.totalorder %s27, 3
    %p62 = por %p60, %p61
    %p64 = scmp.ne.s32.totalorder %s47, %s63
    %p65 = scmp.eq.s32.totalorder %s27, 0
    %p66 = por %p64, %p65
    %s68 = sadd.s32 %s67, 1
    %p71 = scmp.eq.s32.totalorder %s21, 3
    %p72 = scmp.ne.s32.totalorder %s67, %s69
    %p73 = scmp.eq.s32.totalorder %s21, 0
    %p74 = por %p72, %p73
    %p75 = scmp.ne.s32.totalorder %s67, %s69
    %p76 = scmp.eq.s32.totalorder %s26, 3
    %p77 = por %p75, %p76
    %p78 = scmp.ne.s32.totalorder %s69, %s70
    %p79 = scmp.eq.s32.totalorder %s26, 0
    %p80 = por %p78, %p79
    %p81 = scmp.ne.s32.totalorder %s69, %s70
    %p82 = scmp.eq.s32.totalorder %s27, 3
    %p83 = por %p81, %p82
    %p85 = scmp.ne.s32.totalorder %s70, %s84
    %p86 = scmp.eq.s32.totalorder %s27, 0
    %p87 = por %p85, %p86
    %s89 = sadd.s32 %s88, 1
    %p92 = scmp.eq.s32.totalorder %s21, 3
    %p93 = scmp.ne.s32.totalorder %s88, %s90
    %p94 = scmp.eq.s32.totalorder %s21, 0
    %p95 = por %p93, %p94
    %p96 = scmp.ne.s32.totalorder %s88, %s90
    %p97 = scmp.eq.s32.totalorder %s26, 3
    %p98 = por %p96, %p97
    %p99 = scmp.ne.s32.totalorder %s90, %s91
    %p100 = scmp.eq.s32.totalorder %s26, 0
    %p101 = por %p99, %p100
    %p102 = scmp.ne.s32.totalorder %s90, %s91
    %p103 = scmp.eq.s32.totalorder %s27, 3
    %p104 = por %p102, %p103
    %p106 = scmp.ne.s32.totalorder %s91, %s105
    %p107 = scmp.eq.s32.totalorder %s27, 0
    %p108 = por %p106, %p107
    %s109 = ssub.s32 %s29, %s36
    %p110 = scmp.eq.s32.totalorder %s109, 0
    %s112 = sadd.s32 %s111, 1
    %s113 = scalar_select %p110, %s111, %s112
    %p116 = pneg %p110
    %p117 = scmp.eq.s32.totalorder %s21, 3
    %p118 = por %p116, %p117
    %p119 = scmp.ne.s32.totalorder %s111, %s114
    %p120 = scmp.eq.s32.totalorder %s21, 0
    %p121 = por %p119, %p120
    %p122 = scmp.ne.s32.totalorder %s111, %s114
    %p123 = scmp.eq.s32.totalorder %s26, 3
    %p124 = por %p122, %p123
    %p125 = scmp.ne.s32.totalorder %s114, %s115
    %p126 = scmp.eq.s32.totalorder %s26, 0
    %p127 = por %p125, %p126
    %p128 = scmp.ne.s32.totalorder %s114, %s115
    %p129 = scmp.eq.s32.totalorder %s27, 3
    %p130 = por %p128, %p129
    %p132 = scmp.ne.s32.totalorder %s115, %s131
    %p133 = scmp.eq.s32.totalorder %s27, 0
    %p134 = por %p132, %p133
    %s135 = ssub.s32 %s29, %s36
    %p136 = scmp.eq.s32.totalorder %s135, 0
    %s138 = sadd.s32 %s137, 1
    %s139 = scalar_select %p136, %s137, %s138
    %p142 = pneg %p136
    %p143 = scmp.eq.s32.totalorder %s21, 3
    %p144 = por %p142, %p143
    %p145 = scmp.ne.s32.totalorder %s137, %s140
    %p146 = scmp.eq.s32.totalorder %s21, 0
    %p147 = por %p145, %p146
    %p148 = scmp.ne.s32.totalorder %s137, %s140
    %p149 = scmp.eq.s32.totalorder %s26, 3
    %p150 = por %p148, %p149
    %p151 = scmp.ne.s32.totalorder %s140, %s141
    %p152 = scmp.eq.s32.totalorder %s26, 0
    %p153 = por %p151, %p152
    %p154 = scmp.ne.s32.totalorder %s140, %s141
    %p155 = scmp.eq.s32.totalorder %s27, 3
    %p156 = por %p154, %p155
    %p158 = scmp.ne.s32.totalorder %s141, %s157
    %p159 = scmp.eq.s32.totalorder %s27, 0
    %p160 = por %p158, %p159
    %s161 = ssub.s32 %s29, %s36
    %p162 = scmp.eq.s32.totalorder %s161, 0
    %s164 = sadd.s32 %s163, 1
    %s165 = scalar_select %p162, %s163, %s164
    %p168 = pneg %p162
    %p169 = scmp.eq.s32.totalorder %s21, 3
    %p170 = por %p168, %p169
    %p171 = scmp.ne.s32.totalorder %s163, %s166
    %p172 = scmp.eq.s32.totalorder %s21, 0
    %p173 = por %p171, %p172
    %p174 = scmp.ne.s32.totalorder %s163, %s166
    %p175 = scmp.eq.s32.totalorder %s26, 3
    %p176 = por %p174, %p175
    %p177 = scmp.ne.s32.totalorder %s166, %s167
    %p178 = scmp.eq.s32.totalorder %s26, 0
    %p179 = por %p177, %p178
    %p180 = scmp.ne.s32.totalorder %s166, %s167
    %p181 = scmp.eq.s32.totalorder %s27, 3
    %p182 = por %p180, %p181
    %p184 = scmp.ne.s32.totalorder %s167, %s183
    %p185 = scmp.eq.s32.totalorder %s27, 0
    %p186 = por %p184, %p185
    %s187 = ssub.s32 %s29, %s36
    %p188 = scmp.eq.s32.totalorder %s187, 0
    %s190 = sadd.s32 %s189, 1
    %s191 = scalar_select %p188, %s189, %s190
    %p194 = pneg %p188
    %p195 = scmp.eq.s32.totalorder %s21, 3
    %p196 = por %p194, %p195
    %p197 = scmp.ne.s32.totalorder %s189, %s192
    %p198 = scmp.eq.s32.totalorder %s21, 0
    %p199 = por %p197, %p198
    %p200 = scmp.ne.s32.totalorder %s189, %s192
    %p201 = scmp.eq.s32.totalorder %s26, 3
    %p202 = por %p200, %p201
    %p203 = scmp.ne.s32.totalorder %s192, %s193
    %p204 = scmp.eq.s32.totalorder %s26, 0
    %p205 = por %p203, %p204
    %p206 = scmp.ne.s32.totalorder %s192, %s193
    %p207 = scmp.eq.s32.totalorder %s27, 3
    %p208 = por %p206, %p207
    %p210 = scmp.ne.s32.totalorder %s193, %s209
    %p211 = scmp.eq.s32.totalorder %s27, 0
    %p212 = por %p210, %p211
    %s213 = ssub.s32 %s29, %s36
    %p214 = scmp.eq.s32.totalorder %s213, 0
    %s216 = sadd.s32 %s215, 1
    %s217 = scalar_select %p214, %s215, %s216
    %p220 = pneg %p214
    %p221 = scmp.eq.s32.totalorder %s21, 3
    %p222 = por %p220, %p221
    %p223 = scmp.ne.s32.totalorder %s215, %s218
    %p224 = scmp.eq.s32.totalorder %s21, 0
    %p225 = por %p223, %p224
    %p226 = scmp.ne.s32.totalorder %s215, %s218
    %p227 = scmp.eq.s32.totalorder %s26, 3
    %p228 = por %p226, %p227
    %p229 = scmp.ne.s32.totalorder %s218, %s219
    %p230 = scmp.eq.s32.totalorder %s26, 0
    %p231 = por %p229, %p230
    %p232 = scmp.ne.s32.totalorder %s218, %s219
    %p233 = scmp.eq.s32.totalorder %s27, 3
    %p234 = por %p232, %p233
    %p236 = scmp.ne.s32.totalorder %s219, %s235
    %p237 = scmp.eq.s32.totalorder %s27, 0
    %p238 = por %p236, %p237
    %s239 = ssub.s32 %s29, %s36
    %p240 = scmp.eq.s32.totalorder %s239, 0
    %s242 = sadd.s32 %s241, 1
    %s243 = scalar_select %p240, %s241, %s242
    %p246 = pneg %p240
    %p247 = scmp.eq.s32.totalorder %s21, 3
    %p248 = por %p246, %p247
    %p249 = scmp.ne.s32.totalorder %s241, %s244
    %p250 = scmp.eq.s32.totalorder %s21, 0
    %p251 = por %p249, %p250
    %p252 = scmp.ne.s32.totalorder %s241, %s244
    %p253 = scmp.eq.s32.totalorder %s26, 3
    %p254 = por %p252, %p253
    %p255 = scmp.ne.s32.totalorder %s244, %s245
    %p256 = scmp.eq.s32.totalorder %s26, 0
    %p257 = por %p255, %p256
    %p258 = scmp.ne.s32.totalorder %s244, %s245
    %p259 = scmp.eq.s32.totalorder %s27, 3
    %p260 = por %p258, %p259
    %p262 = scmp.ne.s32.totalorder %s245, %s261
    %p263 = scmp.eq.s32.totalorder %s27, 0
    %p264 = por %p262, %p263
    %s265 = ssub.s32 %s29, %s36
    %p266 = scmp.eq.s32.totalorder %s265, 0
    %s268 = sadd.s32 %s267, 1
    %s269 = scalar_select %p266, %s267, %s268
    %p272 = pneg %p266
    %p273 = scmp.eq.s32.totalorder %s21, 3
    %p274 = por %p272, %p273
    %p275 = scmp.ne.s32.totalorder %s267, %s270
    %p276 = scmp.eq.s32.totalorder %s21, 0
    %p277 = por %p275, %p276
    %p278 = scmp.ne.s32.totalorder %s267, %s270
    %p279 = scmp.eq.s32.totalorder %s26, 3
    %p280 = por %p278, %p279
    %p281 = scmp.ne.s32.totalorder %s270, %s271
    %p282 = scmp.eq.s32.totalorder %s26, 0
    %p283 = por %p281, %p282
    %p284 = scmp.ne.s32.totalorder %s270, %s271
    %p285 = scmp.eq.s32.totalorder %s27, 3
    %p286 = por %p284, %p285
    %p288 = scmp.ne.s32.totalorder %s271, %s287
    %p289 = scmp.eq.s32.totalorder %s27, 0
    %p290 = por %p288, %p289
    %s291 = ssub.s32 %s29, %s36
    %p292 = scmp.eq.s32.totalorder %s291, 0
    %s294 = sadd.s32 %s293, 1
    %s295 = scalar_select %p292, %s293, %s294
    %p298 = pneg %p292
    %p299 = scmp.eq.s32.totalorder %s21, 3
    %p300 = por %p298, %p299
    %p301 = scmp.ne.s32.totalorder %s293, %s296
    %p302 = scmp.eq.s32.totalorder %s21, 0
    %p303 = por %p301, %p302
    %p304 = scmp.ne.s32.totalorder %s293, %s296
    %p305 = scmp.eq.s32.totalorder %s26, 3
    %p306 = por %p304, %p305
    %p307 = scmp.ne.s32.totalorder %s296, %s297
    %p308 = scmp.eq.s32.totalorder %s26, 0
    %p309 = por %p307, %p308
    %p310 = scmp.ne.s32.totalorder %s296, %s297
    %p311 = scmp.eq.s32.totalorder %s27, 3
    %p312 = por %p310, %p311
    %p314 = scmp.ne.s32.totalorder %s297, %s313
    %p315 = scmp.eq.s32.totalorder %s27, 0
    %p316 = por %p314, %p315
    %s317 = ssub.s32 %s29, %s36
    %p318 = scmp.eq.s32.totalorder %s317, 0
    %s320 = sadd.s32 %s319, 1
    %s321 = scalar_select %p318, %s319, %s320
    %p324 = pneg %p318
    %p325 = scmp.eq.s32.totalorder %s21, 3
    %p326 = por %p324, %p325
    %p327 = scmp.ne.s32.totalorder %s319, %s322
    %p328 = scmp.eq.s32.totalorder %s21, 0
    %p329 = por %p327, %p328
    %p330 = scmp.ne.s32.totalorder %s319, %s322
    %p331 = scmp.eq.s32.totalorder %s26, 3
    %p332 = por %p330, %p331
    %p333 = scmp.ne.s32.totalorder %s322, %s323
    %p334 = scmp.eq.s32.totalorder %s26, 0
    %p335 = por %p333, %p334
    %p336 = scmp.ne.s32.totalorder %s322, %s323
    %p337 = scmp.eq.s32.totalorder %s27, 3
    %p338 = por %p336, %p337
    %p340 = scmp.ne.s32.totalorder %s323, %s339
    %p341 = scmp.eq.s32.totalorder %s27, 0
    %p342 = por %p340, %p341
    %s343 = ssub.s32 %s29, %s36
    %p344 = scmp.eq.s32.totalorder %s343, 0
    %s346 = sadd.s32 %s345, 1
    %s347 = scalar_select %p344, %s345, %s346
    %p350 = pneg %p344
    %p351 = scmp.eq.s32.totalorder %s21, 3
    %p352 = por %p350, %p351
    %p353 = scmp.ne.s32.totalorder %s345, %s348
    %p354 = scmp.eq.s32.totalorder %s21, 0
    %p355 = por %p353, %p354
    %p356 = scmp.ne.s32.totalorder %s345, %s348
    %p357 = scmp.eq.s32.totalorder %s26, 3
    %p358 = por %p356, %p357
    %p359 = scmp.ne.s32.totalorder %s348, %s349
    %p360 = scmp.eq.s32.totalorder %s26, 0
    %p361 = por %p359, %p360
    %p362 = scmp.ne.s32.totalorder %s348, %s349
    %p363 = scmp.eq.s32.totalorder %s27, 3
    %p364 = por %p362, %p363
    %p366 = scmp.ne.s32.totalorder %s349, %s365
    %p367 = scmp.eq.s32.totalorder %s27, 0
    %p368 = por %p366, %p367
    %s369 = ssub.s32 %s29, %s36
    %p370 = scmp.eq.s32.totalorder %s369, 0
    %s372 = sadd.s32 %s371, 1
    %s373 = scalar_select %p370, %s371, %s372
    %p376 = pneg %p370
    %p377 = scmp.eq.s32.totalorder %s21, 3
    %p378 = por %p376, %p377
    %p379 = scmp.ne.s32.totalorder %s371, %s374
    %p380 = scmp.eq.s32.totalorder %s21, 0
    %p381 = por %p379, %p380
    %p382 = scmp.ne.s32.totalorder %s371, %s374
    %p383 = scmp.eq.s32.totalorder %s26, 3
    %p384 = por %p382, %p383
    %p385 = scmp.ne.s32.totalorder %s374, %s375
    %p386 = scmp.eq.s32.totalorder %s26, 0
    %p387 = por %p385, %p386
    %p388 = scmp.ne.s32.totalorder %s374, %s375
    %p389 = scmp.eq.s32.totalorder %s27, 3
    %p390 = por %p388, %p389
    %p392 = scmp.ne.s32.totalorder %s375, %s391
    %p393 = scmp.eq.s32.totalorder %s27, 0
    %p394 = por %p392, %p393
    %s395 = ssub.s32 %s29, %s36
    %p396 = scmp.eq.s32.totalorder %s395, 0
    %s398 = sadd.s32 %s397, 1
    %s399 = scalar_select %p396, %s397, %s398
    %p402 = pneg %p396
    %p403 = scmp.eq.s32.totalorder %s21, 3
    %p404 = por %p402, %p403
    %p405 = scmp.ne.s32.totalorder %s397, %s400
    %p406 = scmp.eq.s32.totalorder %s21, 0
    %p407 = por %p405, %p406
    %p408 = scmp.ne.s32.totalorder %s397, %s400
    %p409 = scmp.eq.s32.totalorder %s26, 3
    %p410 = por %p408, %p409
    %p411 = scmp.ne.s32.totalorder %s400, %s401
    %p412 = scmp.eq.s32.totalorder %s26, 0
    %p413 = por %p411, %p412
    %p414 = scmp.ne.s32.totalorder %s400, %s401
    %p415 = scmp.eq.s32.totalorder %s27, 3
    %p416 = por %p414, %p415
    %p418 = scmp.ne.s32.totalorder %s401, %s417
    %p419 = scmp.eq.s32.totalorder %s27, 0
    %p420 = por %p418, %p419
    %s421 = ssub.s32 %s28, %s40
    %p422 = scmp.eq.s32.totalorder %s421, 0
    %s424 = sadd.s32 %s423, 1
    %s425 = scalar_select %p422, %s423, %s424
    %p428 = pneg %p422
    %p429 = scmp.eq.s32.totalorder %s21, 3
    %p430 = por %p428, %p429
    %p431 = scmp.ne.s32.totalorder %s423, %s426
    %p432 = scmp.eq.s32.totalorder %s21, 0
    %p433 = por %p431, %p432
    %p434 = scmp.ne.s32.totalorder %s423, %s426
    %p435 = scmp.eq.s32.totalorder %s26, 3
    %p436 = por %p434, %p435
    %p437 = scmp.ne.s32.totalorder %s426, %s427
    %p438 = scmp.eq.s32.totalorder %s26, 0
    %p439 = por %p437, %p438
    %p440 = scmp.ne.s32.totalorder %s426, %s427
    %p441 = scmp.eq.s32.totalorder %s27, 3
    %p442 = por %p440, %p441
    %p444 = scmp.ne.s32.totalorder %s427, %s443
    %p445 = scmp.eq.s32.totalorder %s27, 0
    %p446 = por %p444, %p445
    %p447 = scmp.le.s32.totalorder 1, %s21
    %p448 = scmp.lt.s32.totalorder %s21, 5
    %p449 = pnand %p447, %p448
    %p450 = pneg %p449
    // Predicated region
    $region9: #{vit_pose_forward.2} parent=5 // pred_check
      _
    $region10: #{vit_pose_forward.2} parent=5 // pred_check_branch
      %452 = sbr.rel (%p449) target = $region12
    $region11: #{vit_pose_forward.2} parent=5 // pred_region
      %s453 = ssub.s32 %s21, 1
      // Predicated region
      $region13: #{vit_pose_forward.2} parent=11 // pred_check
        %p454 = pneg %p80
      $region14: #{vit_pose_forward.2} parent=11 // pred_check_branch
        %456 = sbr.rel (%p454) target = $region16
      $region15: #{vit_pose_forward.2} parent=11 // pred_region
        _
      $region16: #{vit_pose_forward.2} parent=11 // pred_fallthru
        _
      // Predicated region
      $region17: #{vit_pose_forward.2} parent=11 // pred_check
        %p457 = pneg %p101
      $region18: #{vit_pose_forward.2} parent=11 // pred_check_branch
        %459 = sbr.rel (%p457) target = $region20
      $region19: #{vit_pose_forward.2} parent=11 // pred_region
        _
      $region20: #{vit_pose_forward.2} parent=11 // pred_fallthru
        _
    $region12: #{vit_pose_forward.2} parent=5 // pred_fallthru
      _
    %p460 = scmp.lt.s32.totalorder %s21, 4
    // Predicated region
    $region21: #{vit_pose_forward.2} parent=5 // pred_check
      %p461 = pneg %p460
    $region22: #{vit_pose_forward.2} parent=5 // pred_check_branch
      %463 = sbr.rel (%p461) target = $region24
    $region23: #{vit_pose_forward.2} parent=5 // pred_region
      // Predicated region
      $region25: #{vit_pose_forward.2} parent=23 // pred_check
        %p464 = pneg %p53
      $region26: #{vit_pose_forward.2} parent=23 // pred_check_branch
        %466 = sbr.rel (%p464) target = $region28
      $region27: #{vit_pose_forward.2} parent=23 // pred_region
        %p467 = scmp.lt.s32.totalorder %s28, 1
        %s468 = scalar_select %p467, %s28, 1
        %s469 = smul.addr %s468, 3
        %s470 = smul.addr %s469, 8
        %s471 = scalar_lea.vmem %s0, %s470
      $region28: #{vit_pose_forward.2} parent=23 // pred_fallthru
        _
      // Predicated region
      $region29: #{vit_pose_forward.2} parent=23 // pred_check
        %p472 = pneg %p121
      $region30: #{vit_pose_forward.2} parent=23 // pred_check_branch
        %474 = sbr.rel (%p472) target = $region32
      $region31: #{vit_pose_forward.2} parent=23 // pred_region
        %p475 = scmp.lt.s32.totalorder %s29, 1
        %s476 = scalar_select %p475, %s29, 1
        %s477 = scalar_lea.vmem %s3, %s476
      $region32: #{vit_pose_forward.2} parent=23 // pred_fallthru
        _
      // Predicated region
      $region33: #{vit_pose_forward.2} parent=23 // pred_check
        %p478 = pneg %p147
      $region34: #{vit_pose_forward.2} parent=23 // pred_check_branch
        %480 = sbr.rel (%p478) target = $region36
      $region35: #{vit_pose_forward.2} parent=23 // pred_region
        %p481 = scmp.lt.s32.totalorder %s29, 1
        %s482 = scalar_select %p481, %s29, 1
        %s483 = scalar_lea.vmem %s4, %s482
      $region36: #{vit_pose_forward.2} parent=23 // pred_fallthru
        _
      // Predicated region
      $region37: #{vit_pose_forward.2} parent=23 // pred_check
        %p484 = pneg %p173
      $region38: #{vit_pose_forward.2} parent=23 // pred_check_branch
        %486 = sbr.rel (%p484) target = $region40
      $region39: #{vit_pose_forward.2} parent=23 // pred_region
        %p487 = scmp.lt.s32.totalorder %s29, 1
        %s488 = scalar_select %p487, %s29, 1
        %s489 = smul.addr %s488, 4
        %s490 = smul.addr %s489, 8
        %s491 = scalar_lea.vmem %s5, %s490
      $region40: #{vit_pose_forward.2} parent=23 // pred_fallthru
        _
      // Predicated region
      $region41: #{vit_pose_forward.2} parent=23 // pred_check
        %p492 = pneg %p199
      $region42: #{vit_pose_forward.2} parent=23 // pred_check_branch
        %494 = sbr.rel (%p492) target = $region44
      $region43: #{vit_pose_forward.2} parent=23 // pred_region
        %p495 = scmp.lt.s32.totalorder %s29, 1
        %s496 = scalar_select %p495, %s29, 1
        %s497 = scalar_lea.vmem %s6, %s496
      $region44: #{vit_pose_forward.2} parent=23 // pred_fallthru
        _
      // Predicated region
      $region45: #{vit_pose_forward.2} parent=23 // pred_check
        %p498 = pneg %p225
      $region46: #{vit_pose_forward.2} parent=23 // pred_check_branch
        %500 = sbr.rel (%p498) target = $region48
      $region47: #{vit_pose_forward.2} parent=23 // pred_region
        %p501 = scmp.lt.s32.totalorder %s29, 1
        %s502 = scalar_select %p501, %s29, 1
        %s503 = smul.addr %s502, 4
        %s504 = smul.addr %s503, 8
        %s505 = scalar_lea.vmem %s7, %s504
      $region48: #{vit_pose_forward.2} parent=23 // pred_fallthru
        _
      // Predicated region
      $region49: #{vit_pose_forward.2} parent=23 // pred_check
        %p506 = pneg %p251
      $region50: #{vit_pose_forward.2} parent=23 // pred_check_branch
        %508 = sbr.rel (%p506) target = $region52
      $region51: #{vit_pose_forward.2} parent=23 // pred_region
        %p509 = scmp.lt.s32.totalorder %s29, 1
        %s510 = scalar_select %p509, %s29, 1
        %s511 = scalar_lea.vmem %s8, %s510
      $region52: #{vit_pose_forward.2} parent=23 // pred_fallthru
        _
      // Predicated region
      $region53: #{vit_pose_forward.2} parent=23 // pred_check
        %p512 = pneg %p277
      $region54: #{vit_pose_forward.2} parent=23 // pred_check_branch
        %514 = sbr.rel (%p512) target = $region56
      $region55: #{vit_pose_forward.2} parent=23 // pred_region
        %p515 = scmp.lt.s32.totalorder %s29, 1
        %s516 = scalar_select %p515, %s29, 1
        %s517 = scalar_lea.vmem %s9, %s516
      $region56: #{vit_pose_forward.2} parent=23 // pred_fallthru
        _
      // Predicated region
      $region57: #{vit_pose_forward.2} parent=23 // pred_check
        %p518 = pneg %p303
      $region58: #{vit_pose_forward.2} parent=23 // pred_check_branch
        %520 = sbr.rel (%p518) target = $region60
      $region59: #{vit_pose_forward.2} parent=23 // pred_region
        %p521 = scmp.lt.s32.totalorder %s29, 1
        %s522 = scalar_select %p521, %s29, 1
        %s523 = scalar_lea.vmem %s10, %s522
      $region60: #{vit_pose_forward.2} parent=23 // pred_fallthru
        _
      // Predicated region
      $region61: #{vit_pose_forward.2} parent=23 // pred_check
        %p524 = pneg %p329
      $region62: #{vit_pose_forward.2} parent=23 // pred_check_branch
        %526 = sbr.rel (%p524) target = $region64
      $region63: #{vit_pose_forward.2} parent=23 // pred_region
        %p527 = scmp.lt.s32.totalorder %s29, 1
        %s528 = scalar_select %p527, %s29, 1
        %s529 = smul.addr %s528, 4
        %s530 = smul.addr %s529, 8
        %s531 = scalar_lea.vmem %s11, %s530
      $region64: #{vit_pose_forward.2} parent=23 // pred_fallthru
        _
      // Predicated region
      $region65: #{vit_pose_forward.2} parent=23 // pred_check
        %p532 = pneg %p355
      $region66: #{vit_pose_forward.2} parent=23 // pred_check_branch
        %534 = sbr.rel (%p532) target = $region68
      $region67: #{vit_pose_forward.2} parent=23 // pred_region
        %p535 = scmp.lt.s32.totalorder %s29, 1
        %s536 = scalar_select %p535, %s29, 1
        %s537 = scalar_lea.vmem %s12, %s536
      $region68: #{vit_pose_forward.2} parent=23 // pred_fallthru
        _
      // Predicated region
      $region69: #{vit_pose_forward.2} parent=23 // pred_check
        %p538 = pneg %p381
      $region70: #{vit_pose_forward.2} parent=23 // pred_check_branch
        %540 = sbr.rel (%p538) target = $region72
      $region71: #{vit_pose_forward.2} parent=23 // pred_region
        %p541 = scmp.lt.s32.totalorder %s29, 1
        %s542 = scalar_select %p541, %s29, 1
        %s543 = smul.addr %s542, 16
        %s544 = smul.addr %s543, 8
        %s545 = scalar_lea.vmem %s13, %s544
      $region72: #{vit_pose_forward.2} parent=23 // pred_fallthru
        _
      // Predicated region
      $region73: #{vit_pose_forward.2} parent=23 // pred_check
        %p546 = pneg %p407
      $region74: #{vit_pose_forward.2} parent=23 // pred_check_branch
        %548 = sbr.rel (%p546) target = $region76
      $region75: #{vit_pose_forward.2} parent=23 // pred_region
        %p549 = scmp.lt.s32.totalorder %s29, 1
        %s550 = scalar_select %p549, %s29, 1
        %s551 = scalar_lea.vmem %s14, %s550
      $region76: #{vit_pose_forward.2} parent=23 // pred_fallthru
        _
    $region24: #{vit_pose_forward.2} parent=5 // pred_fallthru
      _
    %p552 = scmp.le.s32.totalorder 1, %s21
    %p553 = scmp.lt.s32.totalorder %s21, 5
    %p554 = pnand %p552, %p553
    %p555 = pneg %p554
    // Predicated region
    $region77: #{vit_pose_forward.2} parent=5 // pred_check
      _
    $region78: #{vit_pose_forward.2} parent=5 // pred_check_branch
      %557 = sbr.rel (%p554) target = $region80
    $region79: #{vit_pose_forward.2} parent=5 // pred_region
      %s558 = ssub.s32 %s21, 1
      %p559 = scmp.lt.s32.totalorder %s30, 1
      %s560 = scalar_select %p559, %s30, 1
      %s561 = smul.addr %s560, 3
      %s562 = smul.addr %s561, 8
      %s563 = scalar_lea.vmem %s0, %s562
      %p564 = pneg %p59
      %p565 = pneg %p56
      %p566 = pneg %p80
      %p567 = pneg %p77
      %p568 = pneg %p101
      %p569 = pneg %p98
      %p570 = scmp.lt.s32.totalorder %s31, 1
      %s571 = scalar_select %p570, %s31, 1
      %s572 = scalar_lea.vmem %s3, %s571
      %p573 = pneg %p127
      %p574 = pneg %p124
      %p575 = scmp.lt.s32.totalorder %s31, 1
      %s576 = scalar_select %p575, %s31, 1
      %s577 = scalar_lea.vmem %s4, %s576
      %p578 = pneg %p153
      %p579 = pneg %p150
      %p580 = scmp.lt.s32.totalorder %s31, 1
      %s581 = scalar_select %p580, %s31, 1
      %s582 = smul.addr %s581, 4
      %s583 = smul.addr %s582, 8
      %s584 = scalar_lea.vmem %s5, %s583
      %p585 = pneg %p179
      %p586 = pneg %p176
      %p587 = scmp.lt.s32.totalorder %s31, 1
      %s588 = scalar_select %p587, %s31, 1
      %s589 = scalar_lea.vmem %s6, %s588
      %p590 = pneg %p205
      %p591 = pneg %p202
      %p592 = scmp.lt.s32.totalorder %s31, 1
      %s593 = scalar_select %p592, %s31, 1
      %s594 = smul.addr %s593, 4
      %s595 = smul.addr %s594, 8
      %s596 = scalar_lea.vmem %s7, %s595
      %p597 = pneg %p231
      %p598 = pneg %p228
      %p599 = scmp.lt.s32.totalorder %s31, 1
      %s600 = scalar_select %p599, %s31, 1
      %s601 = scalar_lea.vmem %s8, %s600
      %p602 = pneg %p257
      %p603 = pneg %p254
      %p604 = scmp.lt.s32.totalorder %s31, 1
      %s605 = scalar_select %p604, %s31, 1
      %s606 = scalar_lea.vmem %s9, %s605
      %p607 = pneg %p283
      %p608 = pneg %p280
      %p609 = scmp.lt.s32.totalorder %s31, 1
      %s610 = scalar_select %p609, %s31, 1
      %s611 = scalar_lea.vmem %s10, %s610
      %p612 = pneg %p309
      %p613 = pneg %p306
      %p614 = scmp.lt.s32.totalorder %s31, 1
      %s615 = scalar_select %p614, %s31, 1
      %s616 = smul.addr %s615, 4
      %s617 = smul.addr %s616, 8
      %s618 = scalar_lea.vmem %s11, %s617
      %p619 = pneg %p335
      %p620 = pneg %p332
      %p621 = scmp.lt.s32.totalorder %s31, 1
      %s622 = scalar_select %p621, %s31, 1
      %s623 = scalar_lea.vmem %s12, %s622
      %p624 = pneg %p361
      %p625 = pneg %p358
      %p626 = scmp.lt.s32.totalorder %s31, 1
      %s627 = scalar_select %p626, %s31, 1
      %s628 = smul.addr %s627, 16
      %s629 = smul.addr %s628, 8
      %s630 = scalar_lea.vmem %s13, %s629
      %p631 = pneg %p387
      %p632 = pneg %p384
      %p633 = scmp.lt.s32.totalorder %s31, 1
      %s634 = scalar_select %p633, %s31, 1
      %s635 = scalar_lea.vmem %s14, %s634
      %p636 = pneg %p413
      %p637 = pneg %p410
      %p638 = pneg %p439
      %p639 = pneg %p436
      %p640 = scmp.lt.s32.totalorder %s30, 1
      %s641 = scalar_select %p640, %s30, 1
      %s642 = smul.addr %s641, 3
      %s643 = smul.addr %s642, 8
      %s644 = scalar_lea.vmem %s15, %s643
      %p645 = scmp.lt.s32.totalorder %s30, 1
      %s646 = scalar_select %p645, %s30, 1
      %s647 = smul.addr %s646, 3
      %s648 = smul.addr %s647, 8
      %s649 = scalar_lea.vmem %s0, %s648
      %p650 = scmp.lt.s32.totalorder %s31, 1
      %s651 = scalar_select %p650, %s31, 1
      %s652 = scalar_lea.vmem %s3, %s651
      %p653 = scmp.lt.s32.totalorder %s31, 1
      %s654 = scalar_select %p653, %s31, 1
      %s655 = scalar_lea.vmem %s4, %s654
      %p656 = scmp.lt.s32.totalorder %s31, 1
      %s657 = scalar_select %p656, %s31, 1
      %s658 = smul.addr %s657, 4
      %s659 = smul.addr %s658, 8
      %s660 = scalar_lea.vmem %s5, %s659
      %p661 = scmp.lt.s32.totalorder %s31, 1
      %s662 = scalar_select %p661, %s31, 1
      %s663 = scalar_lea.vmem %s6, %s662
      %p664 = scmp.lt.s32.totalorder %s31, 1
      %s665 = scalar_select %p664, %s31, 1
      %s666 = smul.addr %s665, 4
      %s667 = smul.addr %s666, 8
      %s668 = scalar_lea.vmem %s7, %s667
      %p669 = scmp.lt.s32.totalorder %s31, 1
      %s670 = scalar_select %p669, %s31, 1
      %s671 = scalar_lea.vmem %s8, %s670
      %p672 = scmp.lt.s32.totalorder %s31, 1
      %s673 = scalar_select %p672, %s31, 1
      %s674 = scalar_lea.vmem %s9, %s673
      %p675 = scmp.lt.s32.totalorder %s31, 1
      %s676 = scalar_select %p675, %s31, 1
      %s677 = scalar_lea.vmem %s10, %s676
      %p678 = scmp.lt.s32.totalorder %s31, 1
      %s679 = scalar_select %p678, %s31, 1
      %s680 = smul.addr %s679, 4
      %s681 = smul.addr %s680, 8
      %s682 = scalar_lea.vmem %s11, %s681
      %p683 = scmp.lt.s32.totalorder %s31, 1
      %s684 = scalar_select %p683, %s31, 1
      %s685 = scalar_lea.vmem %s12, %s684
      %p686 = scmp.lt.s32.totalorder %s31, 1
      %s687 = scalar_select %p686, %s31, 1
      %s688 = smul.addr %s687, 16
      %s689 = smul.addr %s688, 8
      %s690 = scalar_lea.vmem %s13, %s689
      %p691 = scmp.lt.s32.totalorder %s31, 1
      %s692 = scalar_select %p691, %s31, 1
      %s693 = scalar_lea.vmem %s14, %s692
      %p694 = scmp.lt.s32.totalorder %s30, 1
      %s695 = scalar_select %p694, %s30, 1
      %s696 = smul.addr %s695, 3
      %s697 = smul.addr %s696, 8
      %s698 = scalar_lea.vmem %s15, %s697
      %p699 = scmp.eq.s32.totalorder %s31, 0
      // Predicated region
      $region81: #{vit_pose_forward.2} parent=79 // pred_check
        %p700 = pneg %p699
      $region82: #{vit_pose_forward.2} parent=79 // pred_check_branch
        %702 = sbr.rel (%p700) target = $region84
      $region83: #{vit_pose_forward.2} parent=79 // pred_region
        %v703 = vld [vmem:[%s649] sm:$0xff]
        %v704 = vld [vmem:[%s649 + $0x8] sm:$0xff]
        %v705 = vld [vmem:[%s649 + $0x10] sm:$0x1]
        %v706 = vld [vmem:[%s1] sm:$0xff]
        %v707 = vld [vmem:[%s1 + $0x8] sm:$0xff]
        %v708 = vld [vmem:[%s1 + $0x10] sm:$0xff]
        %v709 = vld [vmem:[%s1 + $0x18] sm:$0xff]
        %v710 = vld [vmem:[%s1 + $0x20] sm:$0xff]
        %v711 = vld [vmem:[%s1 + $0x28] sm:$0xff]
        %v712 = vld [vmem:[%s2] sm:$0xff]
        %v713 = vld [vmem:[%s2 + $0x8] sm:$0xff]
        %v714 = vld [vmem:[%s2 + $0x10] sm:$0x1]
        %vm715 = vcmask 392192
        %v717 = vsel %vm715, %v703, 0
        %v720 = vsel %vm715, %v704, 0
        %v723 = vsel %vm715, %v705, 0
        %725 = vmatprep.subr.mxu0 0.0
        %726 = vmatpush1.msra.mxu0 %v706
        %727 = vmatprep.subr.mxu0 0.0
        %728 = vmatpush1.msra.mxu0 %v707
        %729 = vmatprep.subr.mxu0 0.0
        %730 = vmatpush1.msra.mxu0 %v708
        %731 = vmatprep.subr.mxu0 0.0
        %732 = vmatpush1.msra.mxu0 %v709
        %733 = vmatprep.subr.mxu0 0.0
        %734 = vmatpush1.msra.mxu0 %v710
        %735 = vmatprep.subr.mxu0 0.0
        %736 = vmatpush1.msra.mxu0 %v711
        %737 = vmatprep.subr.mxu0 0.0
        %738 = vmatpush1.msra.mxu0 0.0
        %739 = vmatprep.subr.mxu0 0.0
        %740 = vmatpush1.msra.mxu0 0.0
        %741 = vmatprep.subr.mxu0 0.0
        %742 = vmatpush1.msra.mxu0 0.0
        %743 = vmatprep.subr.mxu0 0.0
        %744 = vmatpush1.msra.mxu0 0.0
        %745 = vmatprep.subr.mxu0 0.0
        %746 = vmatpush1.msra.mxu0 0.0
        %747 = vmatprep.subr.mxu0 0.0
        %748 = vmatpush1.msra.mxu0 0.0
        %749 = vmatprep.subr.mxu0 0.0
        %750 = vmatpush1.msra.mxu0 0.0
        %751 = vmatprep.subr.mxu0 0.0
        %752 = vmatpush1.msra.mxu0 0.0
        %753 = vmatprep.subr.mxu0 0.0
        %754 = vmatpush1.msra.mxu0 0.0
        %755 = vmatprep.subr.mxu0 0.0
        %756 = vmatpush1.msra.mxu0 0.0
        %757 = vmatprep.subr.mxu0 0.0
        %758 = vmatpush1.msra.mxu0 0.0
        %759 = vmatprep.subr.mxu0 0.0
        %760 = vmatpush1.msra.mxu0 0.0
        %761 = vmatprep.subr.mxu0 0.0
        %762 = vmatpush1.msra.mxu0 0.0
        %763 = vmatprep.subr.mxu0 0.0
        %764 = vmatpush1.msra.mxu0 0.0
        %765 = vmatprep.subr.mxu0 0.0
        %766 = vmatpush1.msra.mxu0 0.0
        %767 = vmatprep.subr.mxu0 0.0
        %768 = vmatpush1.msra.mxu0 0.0
        %769 = vmatprep.subr.mxu0 0.0
        %770 = vmatpush1.msra.mxu0 0.0
        %771 = vmatprep.subr.mxu0 0.0
        %772 = vmatpush1.msra.mxu0 0.0
        %773 = vmatprep.subr.mxu0 0.0
        %774 = vmatpush1.msra.mxu0 0.0
        %775 = vmatprep.subr.mxu0 0.0
        %776 = vmatpush1.msra.mxu0 0.0
        %777 = vmatprep.subr.mxu0 0.0
        %778 = vmatpush1.msra.mxu0 0.0
        %779 = vmatprep.subr.mxu0 0.0
        %780 = vmatpush1.msra.mxu0 0.0
        %781 = vmatprep.subr.mxu0 0.0
        %782 = vmatpush1.msra.mxu0 0.0
        %783 = vmatprep.subr.mxu0 0.0
        %784 = vmatpush1.msra.mxu0 0.0
        %785 = vmatprep.subr.mxu0 0.0
        %786 = vmatpush1.msra.mxu0 0.0
        %787 = vmatprep.subr.mxu0 0.0
        %788 = vmatpush1.msra.mxu0 0.0
        %789 = vmatprep.mubr.f32.mxu0 0.0
        %790 = vmatmul.mubr.f32.gmra.mrb[0].mxu0 %v717
        %v791 = vpop.f32.mrb[0].mxu0
        %v792 = vadd.f32 %v712, %v791
        %v793 = vpop.f32.mrb[0].mxu0
        %794 = vmatprep.mubr.f32.mxu0 0.0
        %795 = vmatmul.mubr.f32.gmra.mrb[0].mxu0 %v720
        %v796 = vpop.f32.mrb[0].mxu0
        %v797 = vadd.f32 %v713, %v796
        %v798 = vpop.f32.mrb[0].mxu0
        %799 = vmatprep.mubr.f32.mxu0 0.0
        %800 = vmatmul.mubr.f32.gmra.mrb[0].mxu0 %v723
        %v801 = vpop.f32.mrb[0].mxu0
        %v802 = vadd.f32 %v714, %v801
        %v803 = vpop.f32.mrb[0].mxu0
        %804 = vdwg.mxu0
        %vm805 = vcmask 261120
        %806 = vst.msk [vmem:[%s698] sm:$0xff] %vm805, %v792
        %807 = vst.msk [vmem:[%s698 + $0x8] sm:$0xff] %vm805, %v797
        %vm808 = vcmask 253952
        %809 = vst.msk [vmem:[%s698 + $0x10] sm:$0x1] %vm808, %v802
      $region84: #{vit_pose_forward.2} parent=79 // pred_fallthru
        _
      %v810 = vld [vmem:[%s698] sm:$0xff]
      %v811 = vld [vmem:[%s698 + $0x8] sm:$0xff]
      %v812 = vld [vmem:[%s698 + $0x10] sm:$0x1]
      %v813 = vld [vmem:[%s652] sm:$0x1]
      %v814 = vld [vmem:[%s655] sm:$0x1]
      %vm815 = vcmask 261120
      %v816 = vsel %vm815, %v810, 0.0
      %817 = vadd.xlane.f32.xlu0 %v816
      %v818 = vpop.xlane.xlu0 %817
      %v819 = vsel %vm815, %v811, 0.0
      %820 = vadd.xlane.f32.xlu0 %v819
      %v821 = vpop.xlane.xlu0 %820
      %vm822 = vcmask 253952
      %v823 = vsel %vm822, %v812, 0.0
      %824 = vadd.xlane.f32.xlu0 %v823
      %v825 = vpop.xlane.xlu0 %824
      %v826 = vrcp.pop 32.0
      %v827 = vmul.f32 %v818, %v826
      %v828 = vmul.f32 %v821, %v826
      %v829 = vmul.f32 %v825, %v826
      %v830 = vsub.f32 %v810, %v827
      %v831 = vsub.f32 %v811, %v828
      %v832 = vsub.f32 %v812, %v829
      %v833 = vmul.f32 %v830, %v830
      %v834 = vmul.f32 %v831, %v831
      %v835 = vmul.f32 %v832, %v832
      %v836 = vsel %vm815, %v833, 0.0
      %837 = vadd.xlane.f32.xlu0 %v836
      %v838 = vpop.xlane.xlu0 %837
      %v839 = vsel %vm815, %v834, 0.0
      %840 = vadd.xlane.f32.xlu0 %v839
      %v841 = vpop.xlane.xlu0 %840
      %v842 = vsel %vm822, %v835, 0.0
      %843 = vadd.xlane.f32.xlu0 %v842
      %v844 = vpop.xlane.xlu0 %843
      %v845 = vmul.f32 %v838, %v826
      %v846 = vmul.f32 %v841, %v826
      %v847 = vmul.f32 %v844, %v826
      %v848 = vadd.f32 %v845, 1e-12
      %v849 = vadd.f32 %v846, 1e-12
      %v850 = vadd.f32 %v847, 1e-12
      %v851 = vrsqrt.pop %v848
      %v852 = vrsqrt.pop %v849
      %v853 = vrsqrt.pop %v850
      %v854 = vmul.f32 %v830, %v851
      %v855 = vmul.f32 %v831, %v852
      %v856 = vmul.f32 %v832, %v853
      %v858 = vlaneseq
      %v859 = vshrl.u32 %v858, 7
      %v860 = vsub.s32 0, %v859
      %v861 = vrot.slane %v813, %v860
      %v863 = vmul.f32 %v854, %v861
      %v864 = vmul.f32 %v855, %v861
      %v865 = vmul.f32 %v856, %v861
      %v867 = vlaneseq
      %v868 = vshrl.u32 %v867, 7
      %v869 = vsub.s32 0, %v868
      %v870 = vrot.slane %v814, %v869
      %v872 = vadd.f32 %v863, %v870
      %v873 = vadd.f32 %v864, %v870
      %v874 = vadd.f32 %v865, %v870
      %v875 = vld [vmem:[%s660] sm:$0xff]
      %v876 = vld [vmem:[%s660 + $0x8] sm:$0xff]
      %v877 = vld [vmem:[%s660 + $0x10] sm:$0xff]
      %v878 = vld [vmem:[%s660 + $0x18] sm:$0xff]
      %v879 = vld [vmem:[%s663] sm:$0x1]
      %v881 = vlaneseq
      %v882 = vshrl.u32 %v881, 7
      %v883 = vsub.s32 0, %v882
      %v884 = vrot.slane %v879, %v883
      %v887 = vsel %vm815, %v872, 0
      %v890 = vsel %vm815, %v873, 0
      %v893 = vsel %vm815, %v874, 0
      %895 = vmatprep.subr.mxu0 0.0
      %896 = vmatpush1.msra.mxu0 %v875
      %897 = vmatprep.subr.mxu0 0.0
      %898 = vmatpush1.msra.mxu0 %v876
      %899 = vmatprep.subr.mxu0 0.0
      %900 = vmatpush1.msra.mxu0 %v877
      %901 = vmatprep.subr.mxu0 0.0
      %902 = vmatpush1.msra.mxu0 %v878
      %903 = vmatprep.subr.mxu0 0.0
      %904 = vmatpush1.msra.mxu0 0.0
      %905 = vmatprep.subr.mxu0 0.0
      %906 = vmatpush1.msra.mxu0 0.0
      %907 = vmatprep.subr.mxu0 0.0
      %908 = vmatpush1.msra.mxu0 0.0
      %909 = vmatprep.subr.mxu0 0.0
      %910 = vmatpush1.msra.mxu0 0.0
      %911 = vmatprep.subr.mxu0 0.0
      %912 = vmatpush1.msra.mxu0 0.0
      %913 = vmatprep.subr.mxu0 0.0
      %914 = vmatpush1.msra.mxu0 0.0
      %915 = vmatprep.subr.mxu0 0.0
      %916 = vmatpush1.msra.mxu0 0.0
      %917 = vmatprep.subr.mxu0 0.0
      %918 = vmatpush1.msra.mxu0 0.0
      %919 = vmatprep.subr.mxu0 0.0
      %920 = vmatpush1.msra.mxu0 0.0
      %921 = vmatprep.subr.mxu0 0.0
      %922 = vmatpush1.msra.mxu0 0.0
      %923 = vmatprep.subr.mxu0 0.0
      %924 = vmatpush1.msra.mxu0 0.0
      %925 = vmatprep.subr.mxu0 0.0
      %926 = vmatpush1.msra.mxu0 0.0
      %927 = vmatprep.subr.mxu0 0.0
      %928 = vmatpush1.msra.mxu0 0.0
      %929 = vmatprep.subr.mxu0 0.0
      %930 = vmatpush1.msra.mxu0 0.0
      %931 = vmatprep.subr.mxu0 0.0
      %932 = vmatpush1.msra.mxu0 0.0
      %933 = vmatprep.subr.mxu0 0.0
      %934 = vmatpush1.msra.mxu0 0.0
      %935 = vmatprep.subr.mxu0 0.0
      %936 = vmatpush1.msra.mxu0 0.0
      %937 = vmatprep.subr.mxu0 0.0
      %938 = vmatpush1.msra.mxu0 0.0
      %939 = vmatprep.subr.mxu0 0.0
      %940 = vmatpush1.msra.mxu0 0.0
      %941 = vmatprep.subr.mxu0 0.0
      %942 = vmatpush1.msra.mxu0 0.0
      %943 = vmatprep.subr.mxu0 0.0
      %944 = vmatpush1.msra.mxu0 0.0
      %945 = vmatprep.subr.mxu0 0.0
      %946 = vmatpush1.msra.mxu0 0.0
      %947 = vmatprep.subr.mxu0 0.0
      %948 = vmatpush1.msra.mxu0 0.0
      %949 = vmatprep.subr.mxu0 0.0
      %950 = vmatpush1.msra.mxu0 0.0
      %951 = vmatprep.subr.mxu0 0.0
      %952 = vmatpush1.msra.mxu0 0.0
      %953 = vmatprep.subr.mxu0 0.0
      %954 = vmatpush1.msra.mxu0 0.0
      %955 = vmatprep.subr.mxu0 0.0
      %956 = vmatpush1.msra.mxu0 0.0
      %957 = vmatprep.subr.mxu0 0.0
      %958 = vmatpush1.msra.mxu0 0.0
      %959 = vmatprep.mubr.f32.mxu0 0.0
      %960 = vmatmul.mubr.f32.gmra.mrb[0].mxu0 %v887
      %v961 = vpop.f32.mrb[0].mxu0
      %v962 = vadd.f32 %v884, %v961
      %v963 = vpop.f32.mrb[0].mxu0
      %964 = vmatprep.mubr.f32.mxu0 0.0
      %965 = vmatmul.mubr.f32.gmra.mrb[0].mxu0 %v890
      %v966 = vpop.f32.mrb[0].mxu0
      %v967 = vadd.f32 %v884, %v966
      %v968 = vpop.f32.mrb[0].mxu0
      %969 = vmatprep.mubr.f32.mxu0 0.0
      %970 = vmatmul.mubr.f32.gmra.mrb[0].mxu0 %v893
      %v971 = vpop.f32.mrb[0].mxu0
      %v972 = vadd.f32 %v884, %v971
      %v973 = vpop.f32.mrb[0].mxu0
      %974 = vdwg.mxu0
      %v975 = vld [vmem:[%s668] sm:$0xff]
      %v976 = vld [vmem:[%s668 + $0x8] sm:$0xff]
      %v977 = vld [vmem:[%s668 + $0x10] sm:$0xff]
      %v978 = vld [vmem:[%s668 + $0x18] sm:$0xff]
      %982 = vrot.lane.b32.xlu0 %v962, 96
      %v983 = vpop.permute.xlu0 %982
      %984 = vrot.lane.b32.xlu0 %v967, 96
      %v985 = vpop.permute.xlu0 %984
      %986 = vrot.lane.b32.xlu0 %v972, 96
      %v987 = vpop.permute.xlu0 %986
      %vm988 = vcmask 64512
      %v989 = vsel %vm988, %v962, 0
      %v991 = vsel %vm988, %v967, 0
      %v993 = vsel %vm988, %v972, 0
      %v995 = vsel %vm988, %v983, 0
      %v997 = vsel %vm988, %v985, 0
      %v999 = vsel %vm988, %v987, 0
      %1001 = vmatprep.subr.mxu0 0.0
      %1002 = vmatpush1.xpose.msra.mxu0 %v995
      %1003 = vmatprep.subr.mxu0 0.0
      %1004 = vmatpush1.xpose.msra.mxu0 %v997
      %1005 = vmatprep.subr.mxu0 0.0
      %1006 = vmatpush1.xpose.msra.mxu0 %v999
      %1007 = vmatprep.subr.mxu0 0.0
      %1008 = vmatpush1.xpose.msra.mxu0 0.0
      %1009 = vmatprep.subr.mxu0 0.0
      %1010 = vmatpush1.xpose.msra.mxu0 0.0
      %1011 = vmatprep.subr.mxu0 0.0
      %1012 = vmatpush1.xpose.msra.mxu0 0.0
      %1013 = vmatprep.subr.mxu0 0.0
      %1014 = vmatpush1.xpose.msra.mxu0 0.0
      %1015 = vmatprep.subr.mxu0 0.0
      %1016 = vmatpush1.xpose.msra.mxu0 0.0
      %1017 = vmatprep.subr.mxu0 0.0
      %1018 = vmatpush1.xpose.msra.mxu0 0.0
      %1019 = vmatprep.subr.mxu0 0.0
      %1020 = vmatpush1.xpose.msra.mxu0 0.0
      %1021 = vmatprep.subr.mxu0 0.0
      %1022 = vmatpush1.xpose.msra.mxu0 0.0
      %1023 = vmatprep.subr.mxu0 0.0
      %1024 = vmatpush1.xpose.msra.mxu0 0.0
      %1025 = vmatprep.subr.mxu0 0.0
      %1026 = vmatpush1.xpose.msra.mxu0 0.0
      %1027 = vmatprep.subr.mxu0 0.0
      %1028 = vmatpush1.xpose.msra.mxu0 0.0
      %1029 = vmatprep.subr.mxu0 0.0
      %1030 = vmatpush1.xpose.msra.mxu0 0.0
      %1031 = vmatprep.subr.mxu0 0.0
      %1032 = vmatpush1.xpose.msra.mxu0 0.0
      %1033 = vmatprep.subr.mxu0 0.0
      %1034 = vmatpush1.xpose.msra.mxu0 0.0
      %1035 = vmatprep.subr.mxu0 0.0
      %1036 = vmatpush1.xpose.msra.mxu0 0.0
      %1037 = vmatprep.subr.mxu0 0.0
      %1038 = vmatpush1.xpose.msra.mxu0 0.0
      %1039 = vmatprep.subr.mxu0 0.0
      %1040 = vmatpush1.xpose.msra.mxu0 0.0
      %1041 = vmatprep.subr.mxu0 0.0
      %1042 = vmatpush1.xpose.msra.mxu0 0.0
      %1043 = vmatprep.subr.mxu0 0.0
      %1044 = vmatpush1.xpose.msra.mxu0 0.0
      %1045 = vmatprep.subr.mxu0 0.0
      %1046 = vmatpush1.xpose.msra.mxu0 0.0
      %1047 = vmatprep.subr.mxu0 0.0
      %1048 = vmatpush1.xpose.msra.mxu0 0.0
      %1049 = vmatprep.subr.mxu0 0.0
      %1050 = vmatpush1.xpose.msra.mxu0 0.0
      %1051 = vmatprep.subr.mxu0 0.0
      %1052 = vmatpush1.xpose.msra.mxu0 0.0
      %1053 = vmatprep.subr.mxu0 0.0
      %1054 = vmatpush1.xpose.msra.mxu0 0.0
      %1055 = vmatprep.subr.mxu0 0.0
      %1056 = vmatpush1.xpose.msra.mxu0 0.0
      %1057 = vmatprep.subr.mxu0 0.0
      %1058 = vmatpush1.xpose.msra.mxu0 0.0
      %1059 = vmatprep.subr.mxu0 0.0
      %1060 = vmatpush1.xpose.msra.mxu0 0.0
      %1061 = vmatprep.subr.mxu0 0.0
      %1062 = vmatpush1.xpose.msra.mxu0 0.0
      %1063 = vmatprep.subr.mxu0 0.0
      %1064 = vmatpush1.xpose.msra.mxu0 0.0
      %1065 = vmatprep.mubr.f32.mxu0 0.0
      %1066 = vmatmul.mubr.f32.gmra.mrb[0].mxu0 %v989
      %v1067 = vpop.f32.mrb[0].mxu0
      %v1068 = vadd.f32 0.0, %v1067
      %v1069 = vpop.f32.mrb[0].mxu0
      %1070 = vmatprep.mubr.f32.mxu0 0.0
      %1071 = vmatmul.mubr.f32.gmra.mrb[0].mxu0 %v991
      %v1072 = vpop.f32.mrb[0].mxu0
      %v1073 = vadd.f32 0.0, %v1072
      %v1074 = vpop.f32.mrb[0].mxu0
      %1075 = vmatprep.mubr.f32.mxu0 0.0
      %1076 = vmatmul.mubr.f32.gmra.mrb[0].mxu0 %v993
      %v1077 = vpop.f32.mrb[0].mxu0
      %v1078 = vadd.f32 0.0, %v1077
      %v1079 = vpop.f32.mrb[0].mxu0
      %1080 = vdwg.mxu0
      %v1081 = vmul.f32 %v1068, 0.35355338
      %v1082 = vmul.f32 %v1073, 0.35355338
      %v1083 = vmul.f32 %v1078, 0.35355338
      %vm1084 = vcmask 138240
      %v1085 = vsel %vm1084, %v1081, -inf
      %1086 = vmax.xlane.f32.xlu0 %v1085
      %v1087 = vpop.xlane.xlu0 %1086
      %v1088 = vsel %vm1084, %v1082, -inf
      %1089 = vmax.xlane.f32.xlu0 %v1088
      %v1090 = vpop.xlane.xlu0 %1089
      %vm1091 = vcmask 131072
      %v1092 = vsel %vm1091, %v1083, -inf
      %1093 = vmax.xlane.f32.xlu0 %v1092
      %v1094 = vpop.xlane.xlu0 %1093
      %v1095 = vsub.f32 %v1081, %v1087
      %v1096 = vsub.f32 %v1082, %v1090
      %v1097 = vsub.f32 %v1083, %v1094
      %v1098 = vmul.f32 %v1095, 1.442695
      %v1099 = vpow.pop %v1098
      %v1100 = vmul.f32 %v1096, 1.442695
      %v1101 = vpow.pop %v1100
      %v1102 = vmul.f32 %v1097, 1.442695
      %v1103 = vpow.pop %v1102
      %v1104 = vsel %vm1084, %v1099, 0.0
      %1105 = vadd.xlane.f32.xlu0 %v1104
      %v1106 = vpop.xlane.xlu0 %1105
      %v1107 = vsel %vm1084, %v1101, 0.0
      %1108 = vadd.xlane.f32.xlu0 %v1107
      %v1109 = vpop.xlane.xlu0 %1108
      %v1110 = vsel %vm1091, %v1103, 0.0
      %1111 = vadd.xlane.f32.xlu0 %v1110
      %v1112 = vpop.xlane.xlu0 %1111
      %v1113 = vrcp.pop %v1106
      %v1114 = vmul.f32 %v1099, %v1113
      %v1115 = vrcp.pop %v1109
      %v1116 = vmul.f32 %v1101, %v1115
      %v1117 = vrcp.pop %v1112
      %v1118 = vmul.f32 %v1103, %v1117
      %1119 = vrot.lane.b32.xlu0 %v962, 64
      %v1120 = vpop.permute.xlu0 %1119
      %1121 = vrot.lane.b32.xlu0 %v967, 64
      %v1122 = vpop.permute.xlu0 %1121
      %1123 = vrot.lane.b32.xlu0 %v972, 64
      %v1124 = vpop.permute.xlu0 %1123
      %v1128 = vsel %vm1084, %v1114, 0
      %v1131 = vsel %vm1084, %v1116, 0
      %v1134 = vsel %vm1084, %v1118, 0
      %vm1136 = vcmask 1040384
      %v1137 = vsel %vm1136, %v1124, 0
      %1139 = vmatprep.subr.mxu0 0.0
      %1140 = vmatpush1.msra.mxu0 %v1120
      %1141 = vmatprep.subr.mxu0 0.0
      %1142 = vmatpush1.msra.mxu0 %v1122
      %1143 = vmatprep.subr.mxu0 0.0
      %1144 = vmatpush1.msra.mxu0 %v1137
      %1145 = vmatprep.subr.mxu0 0.0
      %1146 = vmatpush1.msra.mxu0 0.0
      %1147 = vmatprep.subr.mxu0 0.0
      %1148 = vmatpush1.msra.mxu0 0.0
      %1149 = vmatprep.subr.mxu0 0.0
      %1150 = vmatpush1.msra.mxu0 0.0
      %1151 = vmatprep.subr.mxu0 0.0
      %1152 = vmatpush1.msra.mxu0 0.0
      %1153 = vmatprep.subr.mxu0 0.0
      %1154 = vmatpush1.msra.mxu0 0.0
      %1155 = vmatprep.subr.mxu0 0.0
      %1156 = vmatpush1.msra.mxu0 0.0
      %1157 = vmatprep.subr.mxu0 0.0
      %1158 = vmatpush1.msra.mxu0 0.0
      %1159 = vmatprep.subr.mxu0 0.0
      %1160 = vmatpush1.msra.mxu0 0.0
      %1161 = vmatprep.subr.mxu0 0.0
      %1162 = vmatpush1.msra.mxu0 0.0
      %1163 = vmatprep.subr.mxu0 0.0
      %1164 = vmatpush1.msra.mxu0 0.0
      %1165 = vmatprep.subr.mxu0 0.0
      %1166 = vmatpush1.msra.mxu0 0.0
      %1167 = vmatprep.subr.mxu0 0.0
      %1168 = vmatpush1.msra.mxu0 0.0
      %1169 = vmatprep.subr.mxu0 0.0
      %1170 = vmatpush1.msra.mxu0 0.0
      %1171 = vmatprep.subr.mxu0 0.0
      %1172 = vmatpush1.msra.mxu0 0.0
      %1173 = vmatprep.subr.mxu0 0.0
      %1174 = vmatpush1.msra.mxu0 0.0
      %1175 = vmatprep.subr.mxu0 0.0
      %1176 = vmatpush1.msra.mxu0 0.0
      %1177 = vmatprep.subr.mxu0 0.0
      %1178 = vmatpush1.msra.mxu0 0.0
      %1179 = vmatprep.subr.mxu0 0.0
      %1180 = vmatpush1.msra.mxu0 0.0
      %1181 = vmatprep.subr.mxu0 0.0
      %1182 = vmatpush1.msra.mxu0 0.0
      %1183 = vmatprep.subr.mxu0 0.0
      %1184 = vmatpush1.msra.mxu0 0.0
      %1185 = vmatprep.subr.mxu0 0.0
      %1186 = vmatpush1.msra.mxu0 0.0
      %1187 = vmatprep.subr.mxu0 0.0
      %1188 = vmatpush1.msra.mxu0 0.0
      %1189 = vmatprep.subr.mxu0 0.0
      %1190 = vmatpush1.msra.mxu0 0.0
      %1191 = vmatprep.subr.mxu0 0.0
      %1192 = vmatpush1.msra.mxu0 0.0
      %1193 = vmatprep.subr.mxu0 0.0
      %1194 = vmatpush1.msra.mxu0 0.0
      %1195 = vmatprep.subr.mxu0 0.0
      %1196 = vmatpush1.msra.mxu0 0.0
      %1197 = vmatprep.subr.mxu0 0.0
      %1198 = vmatpush1.msra.mxu0 0.0
      %1199 = vmatprep.subr.mxu0 0.0
      %1200 = vmatpush1.msra.mxu0 0.0
      %1201 = vmatprep.subr.mxu0 0.0
      %1202 = vmatpush1.msra.mxu0 0.0
      %1203 = vmatprep.mubr.f32.mxu0 0.0
      %1204 = vmatmul.mubr.f32.gmra.mrb[0].mxu0 %v1128
      %v1205 = vpop.f32.mrb[0].mxu0
      %v1206 = vadd.f32 0.0, %v1205
      %v1207 = vpop.f32.mrb[0].mxu0
      %1208 = vmatprep.mubr.f32.mxu0 0.0
      %1209 = vmatmul.mubr.f32.gmra.mrb[0].mxu0 %v1131
      %v1210 = vpop.f32.mrb[0].mxu0
      %v1211 = vadd.f32 0.0, %v1210
      %v1212 = vpop.f32.mrb[0].mxu0
      %1213 = vmatprep.mubr.f32.mxu0 0.0
      %1214 = vmatmul.mubr.f32.gmra.mrb[0].mxu0 %v1134
      %v1215 = vpop.f32.mrb[0].mxu0
      %v1216 = vadd.f32 0.0, %v1215
      %v1217 = vpop.f32.mrb[0].mxu0
      %1218 = vdwg.mxu0
      %1219 = vrot.lane.b32.xlu0 %v962, 120
      %v1220 = vpop.permute.xlu0 %1219
      %1221 = vrot.lane.b32.xlu0 %v967, 120
      %v1222 = vpop.permute.xlu0 %1221
      %1223 = vrot.lane.b32.xlu0 %v972, 120
      %v1224 = vpop.permute.xlu0 %1223
      %1225 = vrot.lane.b32.xlu0 %v962, 88
      %v1226 = vpop.permute.xlu0 %1225
      %1227 = vrot.lane.b32.xlu0 %v967, 88
      %v1228 = vpop.permute.xlu0 %1227
      %1229 = vrot.lane.b32.xlu0 %v972, 88
      %v1230 = vpop.permute.xlu0 %1229
      %v1231 = vsel %vm988, %v1220, 0
      %v1233 = vsel %vm988, %v1222, 0
      %v1235 = vsel %vm988, %v1224, 0
      %v1237 = vsel %vm988, %v1226, 0
      %v1239 = vsel %vm988, %v1228, 0
      %v1241 = vsel %vm988, %v1230, 0
      %1243 = vmatprep.subr.mxu0 0.0
      %1244 = vmatpush1.xpose.msra.mxu0 %v1237
      %1245 = vmatprep.subr.mxu0 0.0
      %1246 = vmatpush1.xpose.msra.mxu0 %v1239
      %1247 = vmatprep.subr.mxu0 0.0
      %1248 = vmatpush1.xpose.msra.mxu0 %v1241
      %1249 = vmatprep.subr.mxu0 0.0
      %1250 = vmatpush1.xpose.msra.mxu0 0.0
      %1251 = vmatprep.subr.mxu0 0.0
      %1252 = vmatpush1.xpose.msra.mxu0 0.0
      %1253 = vmatprep.subr.mxu0 0.0
      %1254 = vmatpush1.xpose.msra.mxu0 0.0
      %1255 = vmatprep.subr.mxu0 0.0
      %1256 = vmatpush1.xpose.msra.mxu0 0.0
      %1257 = vmatprep.subr.mxu0 0.0
      %1258 = vmatpush1.xpose.msra.mxu0 0.0
      %1259 = vmatprep.subr.mxu0 0.0
      %1260 = vmatpush1.xpose.msra.mxu0 0.0
      %1261 = vmatprep.subr.mxu0 0.0
      %1262 = vmatpush1.xpose.msra.mxu0 0.0
      %1263 = vmatprep.subr.mxu0 0.0
      %1264 = vmatpush1.xpose.msra.mxu0 0.0
      %1265 = vmatprep.subr.mxu0 0.0
      %1266 = vmatpush1.xpose.msra.mxu0 0.0
      %1267 = vmatprep.subr.mxu0 0.0
      %1268 = vmatpush1.xpose.msra.mxu0 0.0
      %1269 = vmatprep.subr.mxu0 0.0
      %1270 = vmatpush1.xpose.msra.mxu0 0.0
      %1271 = vmatprep.subr.mxu0 0.0
      %1272 = vmatpush1.xpose.msra.mxu0 0.0
      %1273 = vmatprep.subr.mxu0 0.0
      %1274 = vmatpush1.xpose.msra.mxu0 0.0
      %1275 = vmatprep.subr.mxu0 0.0
      %1276 = vmatpush1.xpose.msra.mxu0 0.0
      %1277 = vmatprep.subr.mxu0 0.0
      %1278 = vmatpush1.xpose.msra.mxu0 0.0
      %1279 = vmatprep.subr.mxu0 0.0
      %1280 = vmatpush1.xpose.msra.mxu0 0.0
      %1281 = vmatprep.subr.mxu0 0.0
      %1282 = vmatpush1.xpose.msra.mxu0 0.0
      %1283 = vmatprep.subr.mxu0 0.0
      %1284 = vmatpush1.xpose.msra.mxu0 0.0
      %1285 = vmatprep.subr.mxu0 0.0
      %1286 = vmatpush1.xpose.msra.mxu0 0.0
      %1287 = vmatprep.subr.mxu0 0.0
      %1288 = vmatpush1.xpose.msra.mxu0 0.0
      %1289 = vmatprep.subr.mxu0 0.0
      %1290 = vmatpush1.xpose.msra.mxu0 0.0
      %1291 = vmatprep.subr.mxu0 0.0
      %1292 = vmatpush1.xpose.msra.mxu0 0.0
      %1293 = vmatprep.subr.mxu0 0.0
      %1294 = vmatpush1.xpose.msra.mxu0 0.0
      %1295 = vmatprep.subr.mxu0 0.0
      %1296 = vmatpush1.xpose.msra.mxu0 0.0
      %1297 = vmatprep.subr.mxu0 0.0
      %1298 = vmatpush1.xpose.msra.mxu0 0.0
      %1299 = vmatprep.subr.mxu0 0.0
      %1300 = vmatpush1.xpose.msra.mxu0 0.0
      %1301 = vmatprep.subr.mxu0 0.0
      %1302 = vmatpush1.xpose.msra.mxu0 0.0
      %1303 = vmatprep.subr.mxu0 0.0
      %1304 = vmatpush1.xpose.msra.mxu0 0.0
      %1305 = vmatprep.subr.mxu0 0.0
      %1306 = vmatpush1.xpose.msra.mxu0 0.0
      %1307 = vmatprep.mubr.f32.mxu0 0.0
      %1308 = vmatmul.mubr.f32.gmra.mrb[0].mxu0 %v1231
      %v1309 = vpop.f32.mrb[0].mxu0
      %v1310 = vadd.f32 0.0, %v1309
      %v1311 = vpop.f32.mrb[0].mxu0
      %1312 = vmatprep.mubr.f32.mxu0 0.0
      %1313 = vmatmul.mubr.f32.gmra.mrb[0].mxu0 %v1233
      %v1314 = vpop.f32.mrb[0].mxu0
      %v1315 = vadd.f32 0.0, %v1314
      %v1316 = vpop.f32.mrb[0].mxu0
      %1317 = vmatprep.mubr.f32.mxu0 0.0
      %1318 = vmatmul.mubr.f32.gmra.mrb[0].mxu0 %v1235
      %v1319 = vpop.f32.mrb[0].mxu0
      %v1320 = vadd.f32 0.0, %v1319
      %v1321 = vpop.f32.mrb[0].mxu0
      %1322 = vdwg.mxu0
      %v1323 = vmul.f32 %v1310, 0.35355338
      %v1324 = vmul.f32 %v1315, 0.35355338
      %v1325 = vmul.f32 %v1320, 0.35355338
      %v1326 = vsel %vm1084, %v1323, -inf
      %1327 = vmax.xlane.f32.xlu0 %v1326
      %v1328 = vpop.xlane.xlu0 %1327
      %v1329 = vsel %vm1084, %v1324, -inf
      %1330 = vmax.xlane.f32.xlu0 %v1329
      %v1331 = vpop.xlane.xlu0 %1330
      %v1332 = vsel %vm1091, %v1325, -inf
      %1333 = vmax.xlane.f32.xlu0 %v1332
      %v1334 = vpop.xlane.xlu0 %1333
      %v1335 = vsub.f32 %v1323, %v1328
      %v1336 = vsub.f32 %v1324, %v1331
      %v1337 = vsub.f32 %v1325, %v1334
      %v1338 = vmul.f32 %v1335, 1.442695
      %v1339 = vpow.pop %v1338
      %v1340 = vmul.f32 %v1336, 1.442695
      %v1341 = vpow.pop %v1340
      %v1342 = vmul.f32 %v1337, 1.442695
      %v1343 = vpow.pop %v1342
      %v1344 = vsel %vm1084, %v1339, 0.0
      %1345 = vadd.xlane.f32.xlu0 %v1344
      %v1346 = vpop.xlane.xlu0 %1345
      %v1347 = vsel %vm1084, %v1341, 0.0
      %1348 = vadd.xlane.f32.xlu0 %v1347
      %v1349 = vpop.xlane.xlu0 %1348
      %v1350 = vsel %vm1091, %v1343, 0.0
      %1351 = vadd.xlane.f32.xlu0 %v1350
      %v1352 = vpop.xlane.xlu0 %1351
      %v1353 = vrcp.pop %v1346
      %v1354 = vmul.f32 %v1339, %v1353
      %v1355 = vrcp.pop %v1349
      %v1356 = vmul.f32 %v1341, %v1355
      %v1357 = vrcp.pop %v1352
      %v1358 = vmul.f32 %v1343, %v1357
      %1359 = vrot.lane.b32.xlu0 %v962, 56
      %v1360 = vpop.permute.xlu0 %1359
      %1361 = vrot.lane.b32.xlu0 %v967, 56
      %v1362 = vpop.permute.xlu0 %1361
      %1363 = vrot.lane.b32.xlu0 %v972, 56
      %v1364 = vpop.permute.xlu0 %1363
      %v1368 = vsel %vm1084, %v1354, 0
      %v1371 = vsel %vm1084, %v1356, 0
      %v1374 = vsel %vm1084, %v1358, 0
      %v1376 = vsel %vm1136, %v1364, 0
      %1378 = vmatprep.subr.mxu0 0.0
      %1379 = vmatpush1.msra.mxu0 %v1360
      %1380 = vmatprep.subr.mxu0 0.0
      %1381 = vmatpush1.msra.mxu0 %v1362
      %1382 = vmatprep.subr.mxu0 0.0
      %1383 = vmatpush1.msra.mxu0 %v1376
      %1384 = vmatprep.subr.mxu0 0.0
      %1385 = vmatpush1.msra.mxu0 0.0
      %1386 = vmatprep.subr.mxu0 0.0
      %1387 = vmatpush1.msra.mxu0 0.0
      %1388 = vmatprep.subr.mxu0 0.0
      %1389 = vmatpush1.msra.mxu0 0.0
      %1390 = vmatprep.subr.mxu0 0.0
      %1391 = vmatpush1.msra.mxu0 0.0
      %1392 = vmatprep.subr.mxu0 0.0
      %1393 = vmatpush1.msra.mxu0 0.0
      %1394 = vmatprep.subr.mxu0 0.0
      %1395 = vmatpush1.msra.mxu0 0.0
      %1396 = vmatprep.subr.mxu0 0.0
      %1397 = vmatpush1.msra.mxu0 0.0
      %1398 = vmatprep.subr.mxu0 0.0
      %1399 = vmatpush1.msra.mxu0 0.0
      %1400 = vmatprep.subr.mxu0 0.0
      %1401 = vmatpush1.msra.mxu0 0.0
      %1402 = vmatprep.subr.mxu0 0.0
      %1403 = vmatpush1.msra.mxu0 0.0
      %1404 = vmatprep.subr.mxu0 0.0
      %1405 = vmatpush1.msra.mxu0 0.0
      %1406 = vmatprep.subr.mxu0 0.0
      %1407 = vmatpush1.msra.mxu0 0.0
      %1408 = vmatprep.subr.mxu0 0.0
      %1409 = vmatpush1.msra.mxu0 0.0
      %1410 = vmatprep.subr.mxu0 0.0
      %1411 = vmatpush1.msra.mxu0 0.0
      %1412 = vmatprep.subr.mxu0 0.0
      %1413 = vmatpush1.msra.mxu0 0.0
      %1414 = vmatprep.subr.mxu0 0.0
      %1415 = vmatpush1.msra.mxu0 0.0
      %1416 = vmatprep.subr.mxu0 0.0
      %1417 = vmatpush1.msra.mxu0 0.0
      %1418 = vmatprep.subr.mxu0 0.0
      %1419 = vmatpush1.msra.mxu0 0.0
      %1420 = vmatprep.subr.mxu0 0.0
      %1421 = vmatpush1.msra.mxu0 0.0
      %1422 = vmatprep.subr.mxu0 0.0
      %1423 = vmatpush1.msra.mxu0 0.0
      %1424 = vmatprep.subr.mxu0 0.0
      %1425 = vmatpush1.msra.mxu0 0.0
      %1426 = vmatprep.subr.mxu0 0.0
      %1427 = vmatpush1.msra.mxu0 0.0
      %1428 = vmatprep.subr.mxu0 0.0
      %1429 = vmatpush1.msra.mxu0 0.0
      %1430 = vmatprep.subr.mxu0 0.0
      %1431 = vmatpush1.msra.mxu0 0.0
      %1432 = vmatprep.subr.mxu0 0.0
      %1433 = vmatpush1.msra.mxu0 0.0
      %1434 = vmatprep.subr.mxu0 0.0
      %1435 = vmatpush1.msra.mxu0 0.0
      %1436 = vmatprep.subr.mxu0 0.0
      %1437 = vmatpush1.msra.mxu0 0.0
      %1438 = vmatprep.subr.mxu0 0.0
      %1439 = vmatpush1.msra.mxu0 0.0
      %1440 = vmatprep.subr.mxu0 0.0
      %1441 = vmatpush1.msra.mxu0 0.0
      %1442 = vmatprep.mubr.f32.mxu0 0.0
      %1443 = vmatmul.mubr.f32.gmra.mrb[0].mxu0 %v1368
      %v1444 = vpop.f32.mrb[0].mxu0
      %v1445 = vadd.f32 0.0, %v1444
      %v1446 = vpop.f32.mrb[0].mxu0
      %1447 = vmatprep.mubr.f32.mxu0 0.0
      %1448 = vmatmul.mubr.f32.gmra.mrb[0].mxu0 %v1371
      %v1449 = vpop.f32.mrb[0].mxu0
      %v1450 = vadd.f32 0.0, %v1449
      %v1451 = vpop.f32.mrb[0].mxu0
      %1452 = vmatprep.mubr.f32.mxu0 0.0
      %1453 = vmatmul.mubr.f32.gmra.mrb[0].mxu0 %v1374
      %v1454 = vpop.f32.mrb[0].mxu0
      %v1455 = vadd.f32 0.0, %v1454
      %v1456 = vpop.f32.mrb[0].mxu0
      %1457 = vdwg.mxu0
      %v1459 = vsel %vm988, %v1445, 0
      %v1462 = vsel %vm988, %v1450, 0
      %v1465 = vsel %vm988, %v1455, 0
      %1467 = vmatprep.subr.mxu0 0.0
      %1468 = vmatpush1.msra.mxu0 %v976
      %1469 = vmatprep.subr.mxu0 0.0
      %1470 = vmatpush1.msra.mxu0 0.0
      %1471 = vmatprep.subr.mxu0 0.0
      %1472 = vmatpush1.msra.mxu0 0.0
      %1473 = vmatprep.subr.mxu0 0.0
      %1474 = vmatpush1.msra.mxu0 0.0
      %1475 = vmatprep.subr.mxu0 0.0
      %1476 = vmatpush1.msra.mxu0 0.0
      %1477 = vmatprep.subr.mxu0 0.0
      %1478 = vmatpush1.msra.mxu0 0.0
      %1479 = vmatprep.subr.mxu0 0.0
      %1480 = vmatpush1.msra.mxu0 0.0
      %1481 = vmatprep.subr.mxu0 0.0
      %1482 = vmatpush1.msra.mxu0 0.0
      %1483 = vmatprep.subr.mxu0 0.0
      %1484 = vmatpush1.msra.mxu0 0.0
      %1485 = vmatprep.subr.mxu0 0.0
      %1486 = vmatpush1.msra.mxu0 0.0
      %1487 = vmatprep.subr.mxu0 0.0
      %1488 = vmatpush1.msra.mxu0 0.0
      %1489 = vmatprep.subr.mxu0 0.0
      %1490 = vmatpush1.msra.mxu0 0.0
      %1491 = vmatprep.subr.mxu0 0.0
      %1492 = vmatpush1.msra.mxu0 0.0
      %1493 = vmatprep.subr.mxu0 0.0
      %1494 = vmatpush1.msra.mxu0 0.0
      %1495 = vmatprep.subr.mxu0 0.0
      %1496 = vmatpush1.msra.mxu0 0.0
      %1497 = vmatprep.subr.mxu0 0.0
      %1498 = vmatpush1.msra.mxu0 0.0
      %1499 = vmatprep.subr.mxu0 0.0
      %1500 = vmatpush1.msra.mxu0 0.0
      %1501 = vmatprep.subr.mxu0 0.0
      %1502 = vmatpush1.msra.mxu0 0.0
      %1503 = vmatprep.subr.mxu0 0.0
      %1504 = vmatpush1.msra.mxu0 0.0
      %1505 = vmatprep.subr.mxu0 0.0
      %1506 = vmatpush1.msra.mxu0 0.0
      %1507 = vmatprep.subr.mxu0 0.0
      %1508 = vmatpush1.msra.mxu0 0.0
      %1509 = vmatprep.subr.mxu0 0.0
      %1510 = vmatpush1.msra.mxu0 0.0
      %1511 = vmatprep.subr.mxu0 0.0
      %1512 = vmatpush1.msra.mxu0 0.0
      %1513 = vmatprep.subr.mxu0 0.0
      %1514 = vmatpush1.msra.mxu0 0.0
      %1515 = vmatprep.subr.mxu0 0.0
      %1516 = vmatpush1.msra.mxu0 0.0
      %1517 = vmatprep.subr.mxu0 0.0
      %1518 = vmatpush1.msra.mxu0 0.0
      %1519 = vmatprep.subr.mxu0 0.0
      %1520 = vmatpush1.msra.mxu0 0.0
      %1521 = vmatprep.subr.mxu0 0.0
      %1522 = vmatpush1.msra.mxu0 0.0
      %1523 = vmatprep.subr.mxu0 0.0
      %1524 = vmatpush1.msra.mxu0 0.0
      %1525 = vmatprep.subr.mxu0 0.0
      %1526 = vmatpush1.msra.mxu0 0.0
      %1527 = vmatprep.subr.mxu0 0.0
      %1528 = vmatpush1.msra.mxu0 0.0
      %1529 = vmatprep.subr.mxu0 0.0
      %1530 = vmatpush1.msra.mxu0 0.0
      %1531 = vmatprep.mubr.f32.mxu0 0.0
      %1532 = vmatmul.mubr.f32.gmra.mrb[0].mxu0 %v1459
      %v1533 = vpop.f32.mrb[0].mxu0
      %v1534 = vadd.f32 0.0, %v1533
      %v1535 = vpop.f32.mrb[0].mxu0
      %1536 = vmatprep.mubr.f32.mxu0 0.0
      %1537 = vmatmul.mubr.f32.gmra.mrb[0].mxu0 %v1462
      %v1538 = vpop.f32.mrb[0].mxu0
      %v1539 = vadd.f32 0.0, %v1538
      %v1540 = vpop.f32.mrb[0].mxu0
      %1541 = vmatprep.mubr.f32.mxu0 0.0
      %1542 = vmatmul.mubr.f32.gmra.mrb[0].mxu0 %v1465
      %v1543 = vpop.f32.mrb[0].mxu0
      %v1544 = vadd.f32 0.0, %v1543
      %v1545 = vpop.f32.mrb[0].mxu0
      %1546 = vdwg.mxu0
      %v1548 = vsel %vm988, %v1206, 0
      %v1551 = vsel %vm988, %v1211, 0
      %v1554 = vsel %vm988, %v1216, 0
      %1556 = vmatprep.subr.mxu0 0.0
      %1557 = vmatpush1.msra.mxu0 %v975
      %1558 = vmatprep.subr.mxu0 0.0
      %1559 = vmatpush1.msra.mxu0 0.0
      %1560 = vmatprep.subr.mxu0 0.0
      %1561 = vmatpush1.msra.mxu0 0.0
      %1562 = vmatprep.subr.mxu0 0.0
      %1563 = vmatpush1.msra.mxu0 0.0
      %1564 = vmatprep.subr.mxu0 0.0
      %1565 = vmatpush1.msra.mxu0 0.0
      %1566 = vmatprep.subr.mxu0 0.0
      %1567 = vmatpush1.msra.mxu0 0.0
      %1568 = vmatprep.subr.mxu0 0.0
      %1569 = vmatpush1.msra.mxu0 0.0
      %1570 = vmatprep.subr.mxu0 0.0
      %1571 = vmatpush1.msra.mxu0 0.0
      %1572 = vmatprep.subr.mxu0 0.0
      %1573 = vmatpush1.msra.mxu0 0.0
      %1574 = vmatprep.subr.mxu0 0.0
      %1575 = vmatpush1.msra.mxu0 0.0
      %1576 = vmatprep.subr.mxu0 0.0
      %1577 = vmatpush1.msra.mxu0 0.0
      %1578 = vmatprep.subr.mxu0 0.0
      %1579 = vmatpush1.msra.mxu0 0.0
      %1580 = vmatprep.subr.mxu0 0.0
      %1581 = vmatpush1.msra.mxu0 0.0
      %1582 = vmatprep.subr.mxu0 0.0
      %1583 = vmatpush1.msra.mxu0 0.0
      %1584 = vmatprep.subr.mxu0 0.0
      %1585 = vmatpush1.msra.mxu0 0.0
      %1586 = vmatprep.subr.mxu0 0.0
      %1587 = vmatpush1.msra.mxu0 0.0
      %1588 = vmatprep.subr.mxu0 0.0
      %1589 = vmatpush1.msra.mxu0 0.0
      %1590 = vmatprep.subr.mxu0 0.0
      %1591 = vmatpush1.msra.mxu0 0.0
      %1592 = vmatprep.subr.mxu0 0.0
      %1593 = vmatpush1.msra.mxu0 0.0
      %1594 = vmatprep.subr.mxu0 0.0
      %1595 = vmatpush1.msra.mxu0 0.0
      %1596 = vmatprep.subr.mxu0 0.0
      %1597 = vmatpush1.msra.mxu0 0.0
      %1598 = vmatprep.subr.mxu0 0.0
      %1599 = vmatpush1.msra.mxu0 0.0
      %1600 = vmatprep.subr.mxu0 0.0
      %1601 = vmatpush1.msra.mxu0 0.0
      %1602 = vmatprep.subr.mxu0 0.0
      %1603 = vmatpush1.msra.mxu0 0.0
      %1604 = vmatprep.subr.mxu0 0.0
      %1605 = vmatpush1.msra.mxu0 0.0
      %1606 = vmatprep.subr.mxu0 0.0
      %1607 = vmatpush1.msra.mxu0 0.0
      %1608 = vmatprep.subr.mxu0 0.0
      %1609 = vmatpush1.msra.mxu0 0.0
      %1610 = vmatprep.subr.mxu0 0.0
      %1611 = vmatpush1.msra.mxu0 0.0
      %1612 = vmatprep.subr.mxu0 0.0
      %1613 = vmatpush1.msra.mxu0 0.0
      %1614 = vmatprep.subr.mxu0 0.0
      %1615 = vmatpush1.msra.mxu0 0.0
      %1616 = vmatprep.subr.mxu0 0.0
      %1617 = vmatpush1.msra.mxu0 0.0
      %1618 = vmatprep.subr.mxu0 0.0
      %1619 = vmatpush1.msra.mxu0 0.0
      %1620 = vmatprep.mubr.f32.mxu0 0.0
      %1621 = vmatmul.mubr.f32.gmra.mrb[0].mxu0 %v1548
      %v1622 = vpop.f32.mrb[0].mxu0
      %v1623 = vadd.f32 %v1534, %v1622
      %v1624 = vpop.f32.mrb[0].mxu0
      %1625 = vmatprep.mubr.f32.mxu0 0.0
      %1626 = vmatmul.mubr.f32.gmra.mrb[0].mxu0 %v1551
      %v1627 = vpop.f32.mrb[0].mxu0
      %v1628 = vadd.f32 %v1539, %v1627
      %v1629 = vpop.f32.mrb[0].mxu0
      %1630 = vmatprep.mubr.f32.mxu0 0.0
      %1631 = vmatmul.mubr.f32.gmra.mrb[0].mxu0 %v1554
      %v1632 = vpop.f32.mrb[0].mxu0
      %v1633 = vadd.f32 %v1544, %v1632
      %v1634 = vpop.f32.mrb[0].mxu0
      %1635 = vdwg.mxu0
      %1636 = vrot.lane.b32.xlu0 %v962, 112
      %v1637 = vpop.permute.xlu0 %1636
      %1638 = vrot.lane.b32.xlu0 %v967, 112
      %v1639 = vpop.permute.xlu0 %1638
      %1640 = vrot.lane.b32.xlu0 %v972, 112
      %v1641 = vpop.permute.xlu0 %1640
      %1642 = vrot.lane.b32.xlu0 %v962, 80
      %v1643 = vpop.permute.xlu0 %1642
      %1644 = vrot.lane.b32.xlu0 %v967, 80
      %v1645 = vpop.permute.xlu0 %1644
      %1646 = vrot.lane.b32.xlu0 %v972, 80
      %v1647 = vpop.permute.xlu0 %1646
      %v1648 = vsel %vm988, %v1637, 0
      %v1650 = vsel %vm988, %v1639, 0
      %v1652 = vsel %vm988, %v1641, 0
      %v1654 = vsel %vm988, %v1643, 0
      %v1656 = vsel %vm988, %v1645, 0
      %v1658 = vsel %vm988, %v1647, 0
      %1660 = vmatprep.subr.mxu0 0.0
      %1661 = vmatpush1.xpose.msra.mxu0 %v1654
      %1662 = vmatprep.subr.mxu0 0.0
      %1663 = vmatpush1.xpose.msra.mxu0 %v1656
      %1664 = vmatprep.subr.mxu0 0.0
      %1665 = vmatpush1.xpose.msra.mxu0 %v1658
      %1666 = vmatprep.subr.mxu0 0.0
      %1667 = vmatpush1.xpose.msra.mxu0 0.0
      %1668 = vmatprep.subr.mxu0 0.0
      %1669 = vmatpush1.xpose.msra.mxu0 0.0
      %1670 = vmatprep.subr.mxu0 0.0
      %1671 = vmatpush1.xpose.msra.mxu0 0.0
      %1672 = vmatprep.subr.mxu0 0.0
      %1673 = vmatpush1.xpose.msra.mxu0 0.0
      %1674 = vmatprep.subr.mxu0 0.0
      %1675 = vmatpush1.xpose.msra.mxu0 0.0
      %1676 = vmatprep.subr.mxu0 0.0
      %1677 = vmatpush1.xpose.msra.mxu0 0.0
      %1678 = vmatprep.subr.mxu0 0.0
      %1679 = vmatpush1.xpose.msra.mxu0 0.0
      %1680 = vmatprep.subr.mxu0 0.0
      %1681 = vmatpush1.xpose.msra.mxu0 0.0
      %1682 = vmatprep.subr.mxu0 0.0
      %1683 = vmatpush1.xpose.msra.mxu0 0.0
      %1684 = vmatprep.subr.mxu0 0.0
      %1685 = vmatpush1.xpose.msra.mxu0 0.0
      %1686 = vmatprep.subr.mxu0 0.0
      %1687 = vmatpush1.xpose.msra.mxu0 0.0
      %1688 = vmatprep.subr.mxu0 0.0
      %1689 = vmatpush1.xpose.msra.mxu0 0.0
      %1690 = vmatprep.subr.mxu0 0.0
      %1691 = vmatpush1.xpose.msra.mxu0 0.0
      %1692 = vmatprep.subr.mxu0 0.0
      %1693 = vmatpush1.xpose.msra.mxu0 0.0
      %1694 = vmatprep.subr.mxu0 0.0
      %1695 = vmatpush1.xpose.msra.mxu0 0.0
      %1696 = vmatprep.subr.mxu0 0.0
      %1697 = vmatpush1.xpose.msra.mxu0 0.0
      %1698 = vmatprep.subr.mxu0 0.0
      %1699 = vmatpush1.xpose.msra.mxu0 0.0
      %1700 = vmatprep.subr.mxu0 0.0
      %1701 = vmatpush1.xpose.msra.mxu0 0.0
      %1702 = vmatprep.subr.mxu0 0.0
      %1703 = vmatpush1.xpose.msra.mxu0 0.0
      %1704 = vmatprep.subr.mxu0 0.0
      %1705 = vmatpush1.xpose.msra.mxu0 0.0
      %1706 = vmatprep.subr.mxu0 0.0
      %1707 = vmatpush1.xpose.msra.mxu0 0.0
      %1708 = vmatprep.subr.mxu0 0.0
      %1709 = vmatpush1.xpose.msra.mxu0 0.0
      %1710 = vmatprep.subr.mxu0 0.0
      %1711 = vmatpush1.xpose.msra.mxu0 0.0
      %1712 = vmatprep.subr.mxu0 0.0
      %1713 = vmatpush1.xpose.msra.mxu0 0.0
      %1714 = vmatprep.subr.mxu0 0.0
      %1715 = vmatpush1.xpose.msra.mxu0 0.0
      %1716 = vmatprep.subr.mxu0 0.0
      %1717 = vmatpush1.xpose.msra.mxu0 0.0
      %1718 = vmatprep.subr.mxu0 0.0
      %1719 = vmatpush1.xpose.msra.mxu0 0.0
      %1720 = vmatprep.subr.mxu0 0.0
      %1721 = vmatpush1.xpose.msra.mxu0 0.0
      %1722 = vmatprep.subr.mxu0 0.0
      %1723 = vmatpush1.xpose.msra.mxu0 0.0
      %1724 = vmatprep.mubr.f32.mxu0 0.0
      %1725 = vmatmul.mubr.f32.gmra.mrb[0].mxu0 %v1648
      %v1726 = vpop.f32.mrb[0].mxu0
      %v1727 = vadd.f32 0.0, %v1726
      %v1728 = vpop.f32.mrb[0].mxu0
      %1729 = vmatprep.mubr.f32.mxu0 0.0
      %1730 = vmatmul.mubr.f32.gmra.mrb[0].mxu0 %v1650
      %v1731 = vpop.f32.mrb[0].mxu0
      %v1732 = vadd.f32 0.0, %v1731
      %v1733 = vpop.f32.mrb[0].mxu0
      %1734 = vmatprep.mubr.f32.mxu0 0.0
      %1735 = vmatmul.mubr.f32.gmra.mrb[0].mxu0 %v1652
      %v1736 = vpop.f32.mrb[0].mxu0
      %v1737 = vadd.f32 0.0, %v1736
      %v1738 = vpop.f32.mrb[0].mxu0
      %1739 = vdwg.mxu0
      %v1740 = vmul.f32 %v1727, 0.35355338
      %v1741 = vmul.f32 %v1732, 0.35355338
      %v1742 = vmul.f32 %v1737, 0.35355338
      %v1743 = vsel %vm1084, %v1740, -inf
      %1744 = vmax.xlane.f32.xlu0 %v1743
      %v1745 = vpop.xlane.xlu0 %1744
      %v1746 = vsel %vm1084, %v1741, -inf
      %1747 = vmax.xlane.f32.xlu0 %v1746
      %v1748 = vpop.xlane.xlu0 %1747
      %v1749 = vsel %vm1091, %v1742, -inf
      %1750 = vmax.xlane.f32.xlu0 %v1749
      %v1751 = vpop.xlane.xlu0 %1750
      %v1752 = vsub.f32 %v1740, %v1745
      %v1753 = vsub.f32 %v1741, %v1748
      %v1754 = vsub.f32 %v1742, %v1751
      %v1755 = vmul.f32 %v1752, 1.442695
      %v1756 = vpow.pop %v1755
      %v1757 = vmul.f32 %v1753, 1.442695
      %v1758 = vpow.pop %v1757
      %v1759 = vmul.f32 %v1754, 1.442695
      %v1760 = vpow.pop %v1759
      %v1761 = vsel %vm1084, %v1756, 0.0
      %1762 = vadd.xlane.f32.xlu0 %v1761
      %v1763 = vpop.xlane.xlu0 %1762
      %v1764 = vsel %vm1084, %v1758, 0.0
      %1765 = vadd.xlane.f32.xlu0 %v1764
      %v1766 = vpop.xlane.xlu0 %1765
      %v1767 = vsel %vm1091, %v1760, 0.0
      %1768 = vadd.xlane.f32.xlu0 %v1767
      %v1769 = vpop.xlane.xlu0 %1768
      %v1770 = vrcp.pop %v1763
      %v1771 = vmul.f32 %v1756, %v1770
      %v1772 = vrcp.pop %v1766
      %v1773 = vmul.f32 %v1758, %v1772
      %v1774 = vrcp.pop %v1769
      %v1775 = vmul.f32 %v1760, %v1774
      %1776 = vrot.lane.b32.xlu0 %v962, 48
      %v1777 = vpop.permute.xlu0 %1776
      %1778 = vrot.lane.b32.xlu0 %v967, 48
      %v1779 = vpop.permute.xlu0 %1778
      %1780 = vrot.lane.b32.xlu0 %v972, 48
      %v1781 = vpop.permute.xlu0 %1780
      %v1785 = vsel %vm1084, %v1771, 0
      %v1788 = vsel %vm1084, %v1773, 0
      %v1791 = vsel %vm1084, %v1775, 0
      %v1793 = vsel %vm1136, %v1781, 0
      %1795 = vmatprep.subr.mxu0 0.0
      %1796 = vmatpush1.msra.mxu0 %v1777
      %1797 = vmatprep.subr.mxu0 0.0
      %1798 = vmatpush1.msra.mxu0 %v1779
      %1799 = vmatprep.subr.mxu0 0.0
      %1800 = vmatpush1.msra.mxu0 %v1793
      %1801 = vmatprep.subr.mxu0 0.0
      %1802 = vmatpush1.msra.mxu0 0.0
      %1803 = vmatprep.subr.mxu0 0.0
      %1804 = vmatpush1.msra.mxu0 0.0
      %1805 = vmatprep.subr.mxu0 0.0
      %1806 = vmatpush1.msra.mxu0 0.0
      %1807 = vmatprep.subr.mxu0 0.0
      %1808 = vmatpush1.msra.mxu0 0.0
      %1809 = vmatprep.subr.mxu0 0.0
      %1810 = vmatpush1.msra.mxu0 0.0
      %1811 = vmatprep.subr.mxu0 0.0
      %1812 = vmatpush1.msra.mxu0 0.0
      %1813 = vmatprep.subr.mxu0 0.0
      %1814 = vmatpush1.msra.mxu0 0.0
      %1815 = vmatprep.subr.mxu0 0.0
      %1816 = vmatpush1.msra.mxu0 0.0
      %1817 = vmatprep.subr.mxu0 0.0
      %1818 = vmatpush1.msra.mxu0 0.0
      %1819 = vmatprep.subr.mxu0 0.0
      %1820 = vmatpush1.msra.mxu0 0.0
      %1821 = vmatprep.subr.mxu0 0.0
      %1822 = vmatpush1.msra.mxu0 0.0
      %1823 = vmatprep.subr.mxu0 0.0
      %1824 = vmatpush1.msra.mxu0 0.0
      %1825 = vmatprep.subr.mxu0 0.0
      %1826 = vmatpush1.msra.mxu0 0.0
      %1827 = vmatprep.subr.mxu0 0.0
      %1828 = vmatpush1.msra.mxu0 0.0
      %1829 = vmatprep.subr.mxu0 0.0
      %1830 = vmatpush1.msra.mxu0 0.0
      %1831 = vmatprep.subr.mxu0 0.0
      %1832 = vmatpush1.msra.mxu0 0.0
      %1833 = vmatprep.subr.mxu0 0.0
      %1834 = vmatpush1.msra.mxu0 0.0
      %1835 = vmatprep.subr.mxu0 0.0
      %1836 = vmatpush1.msra.mxu0 0.0
      %1837 = vmatprep.subr.mxu0 0.0
      %1838 = vmatpush1.msra.mxu0 0.0
      %1839 = vmatprep.subr.mxu0 0.0
      %1840 = vmatpush1.msra.mxu0 0.0
      %1841 = vmatprep.subr.mxu0 0.0
      %1842 = vmatpush1.msra.mxu0 0.0
      %1843 = vmatprep.subr.mxu0 0.0
      %1844 = vmatpush1.msra.mxu0 0.0
      %1845 = vmatprep.subr.mxu0 0.0
      %1846 = vmatpush1.msra.mxu0 0.0
      %1847 = vmatprep.subr.mxu0 0.0
      %1848 = vmatpush1.msra.mxu0 0.0
      %1849 = vmatprep.subr.mxu0 0.0
      %1850 = vmatpush1.msra.mxu0 0.0
      %1851 = vmatprep.subr.mxu0 0.0
      %1852 = vmatpush1.msra.mxu0 0.0
      %1853 = vmatprep.subr.mxu0 0.0
      %1854 = vmatpush1.msra.mxu0 0.0
      %1855 = vmatprep.subr.mxu0 0.0
      %1856 = vmatpush1.msra.mxu0 0.0
      %1857 = vmatprep.subr.mxu0 0.0
      %1858 = vmatpush1.msra.mxu0 0.0
      %1859 = vmatprep.mubr.f32.mxu0 0.0
      %1860 = vmatmul.mubr.f32.gmra.mrb[0].mxu0 %v1785
      %v1861 = vpop.f32.mrb[0].mxu0
      %v1862 = vadd.f32 0.0, %v1861
      %v1863 = vpop.f32.mrb[0].mxu0
      %1864 = vmatprep.mubr.f32.mxu0 0.0
      %1865 = vmatmul.mubr.f32.gmra.mrb[0].mxu0 %v1788
      %v1866 = vpop.f32.mrb[0].mxu0
      %v1867 = vadd.f32 0.0, %v1866
      %v1868 = vpop.f32.mrb[0].mxu0
      %1869 = vmatprep.mubr.f32.mxu0 0.0
      %1870 = vmatmul.mubr.f32.gmra.mrb[0].mxu0 %v1791
      %v1871 = vpop.f32.mrb[0].mxu0
      %v1872 = vadd.f32 0.0, %v1871
      %v1873 = vpop.f32.mrb[0].mxu0
      %1874 = vdwg.mxu0
      %v1876 = vsel %vm988, %v1862, 0
      %v1879 = vsel %vm988, %v1867, 0
      %v1882 = vsel %vm988, %v1872, 0
      %1884 = vmatprep.subr.mxu0 0.0
      %1885 = vmatpush1.msra.mxu0 %v977
      %1886 = vmatprep.subr.mxu0 0.0
      %1887 = vmatpush1.msra.mxu0 0.0
      %1888 = vmatprep.subr.mxu0 0.0
      %1889 = vmatpush1.msra.mxu0 0.0
      %1890 = vmatprep.subr.mxu0 0.0
      %1891 = vmatpush1.msra.mxu0 0.0
      %1892 = vmatprep.subr.mxu0 0.0
      %1893 = vmatpush1.msra.mxu0 0.0
      %1894 = vmatprep.subr.mxu0 0.0
      %1895 = vmatpush1.msra.mxu0 0.0
      %1896 = vmatprep.subr.mxu0 0.0
      %1897 = vmatpush1.msra.mxu0 0.0
      %1898 = vmatprep.subr.mxu0 0.0
      %1899 = vmatpush1.msra.mxu0 0.0
      %1900 = vmatprep.subr.mxu0 0.0
      %1901 = vmatpush1.msra.mxu0 0.0
      %1902 = vmatprep.subr.mxu0 0.0
      %1903 = vmatpush1.msra.mxu0 0.0
      %1904 = vmatprep.subr.mxu0 0.0
      %1905 = vmatpush1.msra.mxu0 0.0
      %1906 = vmatprep.subr.mxu0 0.0
      %1907 = vmatpush1.msra.mxu0 0.0
      %1908 = vmatprep.subr.mxu0 0.0
      %1909 = vmatpush1.msra.mxu0 0.0
      %1910 = vmatprep.subr.mxu0 0.0
      %1911 = vmatpush1.msra.mxu0 0.0
      %1912 = vmatprep.subr.mxu0 0.0
      %1913 = vmatpush1.msra.mxu0 0.0
      %1914 = vmatprep.subr.mxu0 0.0
      %1915 = vmatpush1.msra.mxu0 0.0
      %1916 = vmatprep.subr.mxu0 0.0
      %1917 = vmatpush1.msra.mxu0 0.0
      %1918 = vmatprep.subr.mxu0 0.0
      %1919 = vmatpush1.msra.mxu0 0.0
      %1920 = vmatprep.subr.mxu0 0.0
      %1921 = vmatpush1.msra.mxu0 0.0
      %1922 = vmatprep.subr.mxu0 0.0
      %1923 = vmatpush1.msra.mxu0 0.0
      %1924 = vmatprep.subr.mxu0 0.0
      %1925 = vmatpush1.msra.mxu0 0.0
      %1926 = vmatprep.subr.mxu0 0.0
      %1927 = vmatpush1.msra.mxu0 0.0
      %1928 = vmatprep.subr.mxu0 0.0
      %1929 = vmatpush1.msra.mxu0 0.0
      %1930 = vmatprep.subr.mxu0 0.0
      %1931 = vmatpush1.msra.mxu0 0.0
      %1932 = vmatprep.subr.mxu0 0.0
      %1933 = vmatpush1.msra.mxu0 0.0
      %1934 = vmatprep.subr.mxu0 0.0
      %1935 = vmatpush1.msra.mxu0 0.0
      %1936 = vmatprep.subr.mxu0 0.0
      %1937 = vmatpush1.msra.mxu0 0.0
      %1938 = vmatprep.subr.mxu0 0.0
      %1939 = vmatpush1.msra.mxu0 0.0
      %1940 = vmatprep.subr.mxu0 0.0
      %1941 = vmatpush1.msra.mxu0 0.0
      %1942 = vmatprep.subr.mxu0 0.0
      %1943 = vmatpush1.msra.mxu0 0.0
      %1944 = vmatprep.subr.mxu0 0.0
      %1945 = vmatpush1.msra.mxu0 0.0
      %1946 = vmatprep.subr.mxu0 0.0
      %1947 = vmatpush1.msra.mxu0 0.0
      %1948 = vmatprep.mubr.f32.mxu0 0.0
      %1949 = vmatmul.mubr.f32.gmra.mrb[0].mxu0 %v1876
      %v1950 = vpop.f32.mrb[0].mxu0
      %v1951 = vadd.f32 0.0, %v1950
      %v1952 = vpop.f32.mrb[0].mxu0
      %1953 = vmatprep.mubr.f32.mxu0 0.0
      %1954 = vmatmul.mubr.f32.gmra.mrb[0].mxu0 %v1879
      %v1955 = vpop.f32.mrb[0].mxu0
      %v1956 = vadd.f32 0.0, %v1955
      %v1957 = vpop.f32.mrb[0].mxu0
      %1958 = vmatprep.mubr.f32.mxu0 0.0
      %1959 = vmatmul.mubr.f32.gmra.mrb[0].mxu0 %v1882
      %v1960 = vpop.f32.mrb[0].mxu0
      %v1961 = vadd.f32 0.0, %v1960
      %v1962 = vpop.f32.mrb[0].mxu0
      %1963 = vdwg.mxu0
      %v1964 = vadd.f32 %v1623, %v1951
      %v1965 = vadd.f32 %v1628, %v1956
      %v1966 = vadd.f32 %v1633, %v1961
      %1967 = vrot.lane.b32.xlu0 %v962, 104
      %v1968 = vpop.permute.xlu0 %1967
      %1969 = vrot.lane.b32.xlu0 %v967, 104
      %v1970 = vpop.permute.xlu0 %1969
      %1971 = vrot.lane.b32.xlu0 %v972, 104
      %v1972 = vpop.permute.xlu0 %1971
      %1973 = vrot.lane.b32.xlu0 %v962, 72
      %v1974 = vpop.permute.xlu0 %1973
      %1975 = vrot.lane.b32.xlu0 %v967, 72
      %v1976 = vpop.permute.xlu0 %1975
      %1977 = vrot.lane.b32.xlu0 %v972, 72
      %v1978 = vpop.permute.xlu0 %1977
      %v1979 = vsel %vm988, %v1968, 0
      %v1981 = vsel %vm988, %v1970, 0
      %v1983 = vsel %vm988, %v1972, 0
      %v1985 = vsel %vm988, %v1974, 0
      %v1987 = vsel %vm988, %v1976, 0
      %v1989 = vsel %vm988, %v1978, 0
      %1991 = vmatprep.subr.mxu0 0.0
      %1992 = vmatpush1.xpose.msra.mxu0 %v1985
      %1993 = vmatprep.subr.mxu0 0.0
      %1994 = vmatpush1.xpose.msra.mxu0 %v1987
      %1995 = vmatprep.subr.mxu0 0.0
      %1996 = vmatpush1.xpose.msra.mxu0 %v1989
      %1997 = vmatprep.subr.mxu0 0.0
      %1998 = vmatpush1.xpose.msra.mxu0 0.0
      %1999 = vmatprep.subr.mxu0 0.0
      %2000 = vmatpush1.xpose.msra.mxu0 0.0
      %2001 = vmatprep.subr.mxu0 0.0
      %2002 = vmatpush1.xpose.msra.mxu0 0.0
      %2003 = vmatprep.subr.mxu0 0.0
      %2004 = vmatpush1.xpose.msra.mxu0 0.0
      %2005 = vmatprep.subr.mxu0 0.0
      %2006 = vmatpush1.xpose.msra.mxu0 0.0
      %2007 = vmatprep.subr.mxu0 0.0
      %2008 = vmatpush1.xpose.msra.mxu0 0.0
      %2009 = vmatprep.subr.mxu0 0.0
      %2010 = vmatpush1.xpose.msra.mxu0 0.0
      %2011 = vmatprep.subr.mxu0 0.0
      %2012 = vmatpush1.xpose.msra.mxu0 0.0
      %2013 = vmatprep.subr.mxu0 0.0
      %2014 = vmatpush1.xpose.msra.mxu0 0.0
      %2015 = vmatprep.subr.mxu0 0.0
      %2016 = vmatpush1.xpose.msra.mxu0 0.0
      %2017 = vmatprep.subr.mxu0 0.0
      %2018 = vmatpush1.xpose.msra.mxu0 0.0
      %2019 = vmatprep.subr.mxu0 0.0
      %2020 = vmatpush1.xpose.msra.mxu0 0.0
      %2021 = vmatprep.subr.mxu0 0.0
      %2022 = vmatpush1.xpose.msra.mxu0 0.0
      %2023 = vmatprep.subr.mxu0 0.0
      %2024 = vmatpush1.xpose.msra.mxu0 0.0
      %2025 = vmatprep.subr.mxu0 0.0
      %2026 = vmatpush1.xpose.msra.mxu0 0.0
      %2027 = vmatprep.subr.mxu0 0.0
      %2028 = vmatpush1.xpose.msra.mxu0 0.0
      %2029 = vmatprep.subr.mxu0 0.0
      %2030 = vmatpush1.xpose.msra.mxu0 0.0
      %2031 = vmatprep.subr.mxu0 0.0
      %2032 = vmatpush1.xpose.msra.mxu0 0.0
      %2033 = vmatprep.subr.mxu0 0.0
      %2034 = vmatpush1.xpose.msra.mxu0 0.0
      %2035 = vmatprep.subr.mxu0 0.0
      %2036 = vmatpush1.xpose.msra.mxu0 0.0
      %2037 = vmatprep.subr.mxu0 0.0
      %2038 = vmatpush1.xpose.msra.mxu0 0.0
      %2039 = vmatprep.subr.mxu0 0.0
      %2040 = vmatpush1.xpose.msra.mxu0 0.0
      %2041 = vmatprep.subr.mxu0 0.0
      %2042 = vmatpush1.xpose.msra.mxu0 0.0
      %2043 = vmatprep.subr.mxu0 0.0
      %2044 = vmatpush1.xpose.msra.mxu0 0.0
      %2045 = vmatprep.subr.mxu0 0.0
      %2046 = vmatpush1.xpose.msra.mxu0 0.0
      %2047 = vmatprep.subr.mxu0 0.0
      %2048 = vmatpush1.xpose.msra.mxu0 0.0
      %2049 = vmatprep.subr.mxu0 0.0
      %2050 = vmatpush1.xpose.msra.mxu0 0.0
      %2051 = vmatprep.subr.mxu0 0.0
      %2052 = vmatpush1.xpose.msra.mxu0 0.0
      %2053 = vmatprep.subr.mxu0 0.0
      %2054 = vmatpush1.xpose.msra.mxu0 0.0
      %2055 = vmatprep.mubr.f32.mxu0 0.0
      %2056 = vmatmul.mubr.f32.gmra.mrb[0].mxu0 %v1979
      %v2057 = vpop.f32.mrb[0].mxu0
      %v2058 = vadd.f32 0.0, %v2057
      %v2059 = vpop.f32.mrb[0].mxu0
      %2060 = vmatprep.mubr.f32.mxu0 0.0
      %2061 = vmatmul.mubr.f32.gmra.mrb[0].mxu0 %v1981
      %v2062 = vpop.f32.mrb[0].mxu0
      %v2063 = vadd.f32 0.0, %v2062
      %v2064 = vpop.f32.mrb[0].mxu0
      %2065 = vmatprep.mubr.f32.mxu0 0.0
      %2066 = vmatmul.mubr.f32.gmra.mrb[0].mxu0 %v1983
      %v2067 = vpop.f32.mrb[0].mxu0
      %v2068 = vadd.f32 0.0, %v2067
      %v2069 = vpop.f32.mrb[0].mxu0
      %2070 = vdwg.mxu0
      %v2071 = vmul.f32 %v2058, 0.35355338
      %v2072 = vmul.f32 %v2063, 0.35355338
      %v2073 = vmul.f32 %v2068, 0.35355338
      %v2074 = vsel %vm1084, %v2071, -inf
      %2075 = vmax.xlane.f32.xlu0 %v2074
      %v2076 = vpop.xlane.xlu0 %2075
      %v2077 = vsel %vm1084, %v2072, -inf
      %2078 = vmax.xlane.f32.xlu0 %v2077
      %v2079 = vpop.xlane.xlu0 %2078
      %v2080 = vsel %vm1091, %v2073, -inf
      %2081 = vmax.xlane.f32.xlu0 %v2080
      %v2082 = vpop.xlane.xlu0 %2081
      %v2083 = vsub.f32 %v2071, %v2076
      %v2084 = vsub.f32 %v2072, %v2079
      %v2085 = vsub.f32 %v2073, %v2082
      %v2086 = vmul.f32 %v2083, 1.442695
      %v2087 = vpow.pop %v2086
      %v2088 = vmul.f32 %v2084, 1.442695
      %v2089 = vpow.pop %v2088
      %v2090 = vmul.f32 %v2085, 1.442695
      %v2091 = vpow.pop %v2090
      %v2092 = vsel %vm1084, %v2087, 0.0
      %2093 = vadd.xlane.f32.xlu0 %v2092
      %v2094 = vpop.xlane.xlu0 %2093
      %v2095 = vsel %vm1084, %v2089, 0.0
      %2096 = vadd.xlane.f32.xlu0 %v2095
      %v2097 = vpop.xlane.xlu0 %2096
      %v2098 = vsel %vm1091, %v2091, 0.0
      %2099 = vadd.xlane.f32.xlu0 %v2098
      %v2100 = vpop.xlane.xlu0 %2099
      %v2101 = vrcp.pop %v2094
      %v2102 = vmul.f32 %v2087, %v2101
      %v2103 = vrcp.pop %v2097
      %v2104 = vmul.f32 %v2089, %v2103
      %v2105 = vrcp.pop %v2100
      %v2106 = vmul.f32 %v2091, %v2105
      %2107 = vrot.lane.b32.xlu0 %v962, 40
      %v2108 = vpop.permute.xlu0 %2107
      %2109 = vrot.lane.b32.xlu0 %v967, 40
      %v2110 = vpop.permute.xlu0 %2109
      %2111 = vrot.lane.b32.xlu0 %v972, 40
      %v2112 = vpop.permute.xlu0 %2111
      %v2116 = vsel %vm1084, %v2102, 0
      %v2119 = vsel %vm1084, %v2104, 0
      %v2122 = vsel %vm1084, %v2106, 0
      %v2124 = vsel %vm1136, %v2112, 0
      %2126 = vmatprep.subr.mxu0 0.0
      %2127 = vmatpush1.msra.mxu0 %v2108
      %2128 = vmatprep.subr.mxu0 0.0
      %2129 = vmatpush1.msra.mxu0 %v2110
      %2130 = vmatprep.subr.mxu0 0.0
      %2131 = vmatpush1.msra.mxu0 %v2124
      %2132 = vmatprep.subr.mxu0 0.0
      %2133 = vmatpush1.msra.mxu0 0.0
      %2134 = vmatprep.subr.mxu0 0.0
      %2135 = vmatpush1.msra.mxu0 0.0
      %2136 = vmatprep.subr.mxu0 0.0
      %2137 = vmatpush1.msra.mxu0 0.0
      %2138 = vmatprep.subr.mxu0 0.0
      %2139 = vmatpush1.msra.mxu0 0.0
      %2140 = vmatprep.subr.mxu0 0.0
      %2141 = vmatpush1.msra.mxu0 0.0
      %2142 = vmatprep.subr.mxu0 0.0
      %2143 = vmatpush1.msra.mxu0 0.0
      %2144 = vmatprep.subr.mxu0 0.0
      %2145 = vmatpush1.msra.mxu0 0.0
      %2146 = vmatprep.subr.mxu0 0.0
      %2147 = vmatpush1.msra.mxu0 0.0
      %2148 = vmatprep.subr.mxu0 0.0
      %2149 = vmatpush1.msra.mxu0 0.0
      %2150 = vmatprep.subr.mxu0 0.0
      %2151 = vmatpush1.msra.mxu0 0.0
      %2152 = vmatprep.subr.mxu0 0.0
      %2153 = vmatpush1.msra.mxu0 0.0
      %2154 = vmatprep.subr.mxu0 0.0
      %2155 = vmatpush1.msra.mxu0 0.0
      %2156 = vmatprep.subr.mxu0 0.0
      %2157 = vmatpush1.msra.mxu0 0.0
      %2158 = vmatprep.subr.mxu0 0.0
      %2159 = vmatpush1.msra.mxu0 0.0
      %2160 = vmatprep.subr.mxu0 0.0
      %2161 = vmatpush1.msra.mxu0 0.0
      %2162 = vmatprep.subr.mxu0 0.0
      %2163 = vmatpush1.msra.mxu0 0.0
      %2164 = vmatprep.subr.mxu0 0.0
      %2165 = vmatpush1.msra.mxu0 0.0
      %2166 = vmatprep.subr.mxu0 0.0
      %2167 = vmatpush1.msra.mxu0 0.0
      %2168 = vmatprep.subr.mxu0 0.0
      %2169 = vmatpush1.msra.mxu0 0.0
      %2170 = vmatprep.subr.mxu0 0.0
      %2171 = vmatpush1.msra.mxu0 0.0
      %2172 = vmatprep.subr.mxu0 0.0
      %2173 = vmatpush1.msra.mxu0 0.0
      %2174 = vmatprep.subr.mxu0 0.0
      %2175 = vmatpush1.msra.mxu0 0.0
      %2176 = vmatprep.subr.mxu0 0.0
      %2177 = vmatpush1.msra.mxu0 0.0
      %2178 = vmatprep.subr.mxu0 0.0
      %2179 = vmatpush1.msra.mxu0 0.0
      %2180 = vmatprep.subr.mxu0 0.0
      %2181 = vmatpush1.msra.mxu0 0.0
      %2182 = vmatprep.subr.mxu0 0.0
      %2183 = vmatpush1.msra.mxu0 0.0
      %2184 = vmatprep.subr.mxu0 0.0
      %2185 = vmatpush1.msra.mxu0 0.0
      %2186 = vmatprep.subr.mxu0 0.0
      %2187 = vmatpush1.msra.mxu0 0.0
      %2188 = vmatprep.subr.mxu0 0.0
      %2189 = vmatpush1.msra.mxu0 0.0
      %2190 = vmatprep.mubr.f32.mxu0 0.0
      %2191 = vmatmul.mubr.f32.gmra.mrb[0].mxu0 %v2116
      %v2192 = vpop.f32.mrb[0].mxu0
      %v2193 = vadd.f32 0.0, %v2192
      %v2194 = vpop.f32.mrb[0].mxu0
      %2195 = vmatprep.mubr.f32.mxu0 0.0
      %2196 = vmatmul.mubr.f32.gmra.mrb[0].mxu0 %v2119
      %v2197 = vpop.f32.mrb[0].mxu0
      %v2198 = vadd.f32 0.0, %v2197
      %v2199 = vpop.f32.mrb[0].mxu0
      %2200 = vmatprep.mubr.f32.mxu0 0.0
      %2201 = vmatmul.mubr.f32.gmra.mrb[0].mxu0 %v2122
      %v2202 = vpop.f32.mrb[0].mxu0
      %v2203 = vadd.f32 0.0, %v2202
      %v2204 = vpop.f32.mrb[0].mxu0
      %2205 = vdwg.mxu0
      %v2207 = vsel %vm988, %v2193, 0
      %v2210 = vsel %vm988, %v2198, 0
      %v2213 = vsel %vm988, %v2203, 0
      %2215 = vmatprep.subr.mxu0 0.0
      %2216 = vmatpush1.msra.mxu0 %v978
      %2217 = vmatprep.subr.mxu0 0.0
      %2218 = vmatpush1.msra.mxu0 0.0
      %2219 = vmatprep.subr.mxu0 0.0
      %2220 = vmatpush1.msra.mxu0 0.0
      %2221 = vmatprep.subr.mxu0 0.0
      %2222 = vmatpush1.msra.mxu0 0.0
      %2223 = vmatprep.subr.mxu0 0.0
      %2224 = vmatpush1.msra.mxu0 0.0
      %2225 = vmatprep.subr.mxu0 0.0
      %2226 = vmatpush1.msra.mxu0 0.0
      %2227 = vmatprep.subr.mxu0 0.0
      %2228 = vmatpush1.msra.mxu0 0.0
      %2229 = vmatprep.subr.mxu0 0.0
      %2230 = vmatpush1.msra.mxu0 0.0
      %2231 = vmatprep.subr.mxu0 0.0
      %2232 = vmatpush1.msra.mxu0 0.0
      %2233 = vmatprep.subr.mxu0 0.0
      %2234 = vmatpush1.msra.mxu0 0.0
      %2235 = vmatprep.subr.mxu0 0.0
      %2236 = vmatpush1.msra.mxu0 0.0
      %2237 = vmatprep.subr.mxu0 0.0
      %2238 = vmatpush1.msra.mxu0 0.0
      %2239 = vmatprep.subr.mxu0 0.0
      %2240 = vmatpush1.msra.mxu0 0.0
      %2241 = vmatprep.subr.mxu0 0.0
      %2242 = vmatpush1.msra.mxu0 0.0
      %2243 = vmatprep.subr.mxu0 0.0
      %2244 = vmatpush1.msra.mxu0 0.0
      %2245 = vmatprep.subr.mxu0 0.0
      %2246 = vmatpush1.msra.mxu0 0.0
      %2247 = vmatprep.subr.mxu0 0.0
      %2248 = vmatpush1.msra.mxu0 0.0
      %2249 = vmatprep.subr.mxu0 0.0
      %2250 = vmatpush1.msra.mxu0 0.0
      %2251 = vmatprep.subr.mxu0 0.0
      %2252 = vmatpush1.msra.mxu0 0.0
      %2253 = vmatprep.subr.mxu0 0.0
      %2254 = vmatpush1.msra.mxu0 0.0
      %2255 = vmatprep.subr.mxu0 0.0
      %2256 = vmatpush1.msra.mxu0 0.0
      %2257 = vmatprep.subr.mxu0 0.0
      %2258 = vmatpush1.msra.mxu0 0.0
      %2259 = vmatprep.subr.mxu0 0.0
      %2260 = vmatpush1.msra.mxu0 0.0
      %2261 = vmatprep.subr.mxu0 0.0
      %2262 = vmatpush1.msra.mxu0 0.0
      %2263 = vmatprep.subr.mxu0 0.0
      %2264 = vmatpush1.msra.mxu0 0.0
      %2265 = vmatprep.subr.mxu0 0.0
      %2266 = vmatpush1.msra.mxu0 0.0
      %2267 = vmatprep.subr.mxu0 0.0
      %2268 = vmatpush1.msra.mxu0 0.0
      %2269 = vmatprep.subr.mxu0 0.0
      %2270 = vmatpush1.msra.mxu0 0.0
      %2271 = vmatprep.subr.mxu0 0.0
      %2272 = vmatpush1.msra.mxu0 0.0
      %2273 = vmatprep.subr.mxu0 0.0
      %2274 = vmatpush1.msra.mxu0 0.0
      %2275 = vmatprep.subr.mxu0 0.0
      %2276 = vmatpush1.msra.mxu0 0.0
      %2277 = vmatprep.subr.mxu0 0.0
      %2278 = vmatpush1.msra.mxu0 0.0
      %2279 = vmatprep.mubr.f32.mxu0 0.0
      %2280 = vmatmul.mubr.f32.gmra.mrb[0].mxu0 %v2207
      %v2281 = vpop.f32.mrb[0].mxu0
      %v2282 = vadd.f32 0.0, %v2281
      %v2283 = vpop.f32.mrb[0].mxu0
      %2284 = vmatprep.mubr.f32.mxu0 0.0
      %2285 = vmatmul.mubr.f32.gmra.mrb[0].mxu0 %v2210
      %v2286 = vpop.f32.mrb[0].mxu0
      %v2287 = vadd.f32 0.0, %v2286
      %v2288 = vpop.f32.mrb[0].mxu0
      %2289 = vmatprep.mubr.f32.mxu0 0.0
      %2290 = vmatmul.mubr.f32.gmra.mrb[0].mxu0 %v2213
      %v2291 = vpop.f32.mrb[0].mxu0
      %v2292 = vadd.f32 0.0, %v2291
      %v2293 = vpop.f32.mrb[0].mxu0
      %2294 = vdwg.mxu0
      %v2295 = vadd.f32 %v1964, %v2282
      %v2296 = vadd.f32 %v1965, %v2287
      %v2297 = vadd.f32 %v1966, %v2292
      %v2298 = vadd.f32 %v810, %v2295
      %v2299 = vadd.f32 %v811, %v2296
      %v2300 = vadd.f32 %v812, %v2297
      %v2301 = vld [vmem:[%s671] sm:$0x1]
      %v2303 = vlaneseq
      %v2304 = vshrl.u32 %v2303, 7
      %v2305 = vsub.s32 0, %v2304
      %v2306 = vrot.slane %v2301, %v2305
      %v2308 = vadd.f32 %v2298, %v2306
      %v2309 = vadd.f32 %v2299, %v2306
      %v2310 = vadd.f32 %v2300, %v2306
      %v2311 = vld [vmem:[%s674] sm:$0x1]
      %v2312 = vld [vmem:[%s677] sm:$0x1]
      %v2313 = vsel %vm815, %v2308, 0.0
      %2314 = vadd.xlane.f32.xlu0 %v2313
      %v2315 = vpop.xlane.xlu0 %2314
      %v2316 = vsel %vm815, %v2309, 0.0
      %2317 = vadd.xlane.f32.xlu0 %v2316
      %v2318 = vpop.xlane.xlu0 %2317
      %v2319 = vsel %vm822, %v2310, 0.0
      %2320 = vadd.xlane.f32.xlu0 %v2319
      %v2321 = vpop.xlane.xlu0 %2320
      %v2322 = vmul.f32 %v2315, %v826
      %v2323 = vmul.f32 %v2318, %v826
      %v2324 = vmul.f32 %v2321, %v826
      %v2325 = vsub.f32 %v2308, %v2322
      %v2326 = vsub.f32 %v2309, %v2323
      %v2327 = vsub.f32 %v2310, %v2324
      %v2328 = vmul.f32 %v2325, %v2325
      %v2329 = vmul.f32 %v2326, %v2326
      %v2330 = vmul.f32 %v2327, %v2327
      %v2331 = vsel %vm815, %v2328, 0.0
      %2332 = vadd.xlane.f32.xlu0 %v2331
      %v2333 = vpop.xlane.xlu0 %2332
      %v2334 = vsel %vm815, %v2329, 0.0
      %2335 = vadd.xlane.f32.xlu0 %v2334
      %v2336 = vpop.xlane.xlu0 %2335
      %v2337 = vsel %vm822, %v2330, 0.0
      %2338 = vadd.xlane.f32.xlu0 %v2337
      %v2339 = vpop.xlane.xlu0 %2338
      %v2340 = vmul.f32 %v2333, %v826
      %v2341 = vmul.f32 %v2336, %v826
      %v2342 = vmul.f32 %v2339, %v826
      %v2343 = vadd.f32 %v2340, 1e-12
      %v2344 = vadd.f32 %v2341, 1e-12
      %v2345 = vadd.f32 %v2342, 1e-12
      %v2346 = vrsqrt.pop %v2343
      %v2347 = vrsqrt.pop %v2344
      %v2348 = vrsqrt.pop %v2345
      %v2349 = vmul.f32 %v2325, %v2346
      %v2350 = vmul.f32 %v2326, %v2347
      %v2351 = vmul.f32 %v2327, %v2348
      %v2353 = vlaneseq
      %v2354 = vshrl.u32 %v2353, 7
      %v2355 = vsub.s32 0, %v2354
      %v2356 = vrot.slane %v2311, %v2355
      %v2358 = vmul.f32 %v2349, %v2356
      %v2359 = vmul.f32 %v2350, %v2356
      %v2360 = vmul.f32 %v2351, %v2356
      %v2362 = vlaneseq
      %v2363 = vshrl.u32 %v2362, 7
      %v2364 = vsub.s32 0, %v2363
      %v2365 = vrot.slane %v2312, %v2364
      %v2367 = vadd.f32 %v2358, %v2365
      %v2368 = vadd.f32 %v2359, %v2365
      %v2369 = vadd.f32 %v2360, %v2365
      %v2370 = vld [vmem:[%s682] sm:$0xff]
      %v2371 = vld [vmem:[%s682 + $0x8] sm:$0xff]
      %v2372 = vld [vmem:[%s682 + $0x10] sm:$0xff]
      %v2373 = vld [vmem:[%s682 + $0x18] sm:$0xff]
      %v2374 = vld [vmem:[%s685] sm:$0x1]
      %v2376 = vlaneseq
      %v2377 = vshrl.u32 %v2376, 7
      %v2378 = vsub.s32 0, %v2377
      %v2379 = vrot.slane %v2374, %v2378
      %v2382 = vsel %vm815, %v2367, 0
      %v2385 = vsel %vm815, %v2368, 0
      %v2388 = vsel %vm815, %v2369, 0
      %2390 = vmatprep.subr.mxu0 0.0
      %2391 = vmatpush1.msra.mxu0 %v2370
      %2392 = vmatprep.subr.mxu0 0.0
      %2393 = vmatpush1.msra.mxu0 %v2371
      %2394 = vmatprep.subr.mxu0 0.0
      %2395 = vmatpush1.msra.mxu0 %v2372
      %2396 = vmatprep.subr.mxu0 0.0
      %2397 = vmatpush1.msra.mxu0 %v2373
      %2398 = vmatprep.subr.mxu0 0.0
      %2399 = vmatpush1.msra.mxu0 0.0
      %2400 = vmatprep.subr.mxu0 0.0
      %2401 = vmatpush1.msra.mxu0 0.0
      %2402 = vmatprep.subr.mxu0 0.0
      %2403 = vmatpush1.msra.mxu0 0.0
      %2404 = vmatprep.subr.mxu0 0.0
      %2405 = vmatpush1.msra.mxu0 0.0
      %2406 = vmatprep.subr.mxu0 0.0
      %2407 = vmatpush1.msra.mxu0 0.0
      %2408 = vmatprep.subr.mxu0 0.0
      %2409 = vmatpush1.msra.mxu0 0.0
      %2410 = vmatprep.subr.mxu0 0.0
      %2411 = vmatpush1.msra.mxu0 0.0
      %2412 = vmatprep.subr.mxu0 0.0
      %2413 = vmatpush1.msra.mxu0 0.0
      %2414 = vmatprep.subr.mxu0 0.0
      %2415 = vmatpush1.msra.mxu0 0.0
      %2416 = vmatprep.subr.mxu0 0.0
      %2417 = vmatpush1.msra.mxu0 0.0
      %2418 = vmatprep.subr.mxu0 0.0
      %2419 = vmatpush1.msra.mxu0 0.0
      %2420 = vmatprep.subr.mxu0 0.0
      %2421 = vmatpush1.msra.mxu0 0.0
      %2422 = vmatprep.subr.mxu0 0.0
      %2423 = vmatpush1.msra.mxu0 0.0
      %2424 = vmatprep.subr.mxu0 0.0
      %2425 = vmatpush1.msra.mxu0 0.0
      %2426 = vmatprep.subr.mxu0 0.0
      %2427 = vmatpush1.msra.mxu0 0.0
      %2428 = vmatprep.subr.mxu0 0.0
      %2429 = vmatpush1.msra.mxu0 0.0
      %2430 = vmatprep.subr.mxu0 0.0
      %2431 = vmatpush1.msra.mxu0 0.0
      %2432 = vmatprep.subr.mxu0 0.0
      %2433 = vmatpush1.msra.mxu0 0.0
      %2434 = vmatprep.subr.mxu0 0.0
      %2435 = vmatpush1.msra.mxu0 0.0
      %2436 = vmatprep.subr.mxu0 0.0
      %2437 = vmatpush1.msra.mxu0 0.0
      %2438 = vmatprep.subr.mxu0 0.0
      %2439 = vmatpush1.msra.mxu0 0.0
      %2440 = vmatprep.subr.mxu0 0.0
      %2441 = vmatpush1.msra.mxu0 0.0
      %2442 = vmatprep.subr.mxu0 0.0
      %2443 = vmatpush1.msra.mxu0 0.0
      %2444 = vmatprep.subr.mxu0 0.0
      %2445 = vmatpush1.msra.mxu0 0.0
      %2446 = vmatprep.subr.mxu0 0.0
      %2447 = vmatpush1.msra.mxu0 0.0
      %2448 = vmatprep.subr.mxu0 0.0
      %2449 = vmatpush1.msra.mxu0 0.0
      %2450 = vmatprep.subr.mxu0 0.0
      %2451 = vmatpush1.msra.mxu0 0.0
      %2452 = vmatprep.subr.mxu0 0.0
      %2453 = vmatpush1.msra.mxu0 0.0
      %2454 = vmatprep.mubr.f32.mxu0 0.0
      %2455 = vmatmul.mubr.f32.gmra.mrb[0].mxu0 %v2382
      %v2456 = vpop.f32.mrb[0].mxu0
      %v2457 = vadd.f32 %v2379, %v2456
      %v2458 = vpop.f32.mrb[0].mxu0
      %2459 = vmatprep.mubr.f32.mxu0 0.0
      %2460 = vmatmul.mubr.f32.gmra.mrb[0].mxu0 %v2385
      %v2461 = vpop.f32.mrb[0].mxu0
      %v2462 = vadd.f32 %v2379, %v2461
      %v2463 = vpop.f32.mrb[0].mxu0
      %2464 = vmatprep.mubr.f32.mxu0 0.0
      %2465 = vmatmul.mubr.f32.gmra.mrb[0].mxu0 %v2388
      %v2466 = vpop.f32.mrb[0].mxu0
      %v2467 = vadd.f32 %v2379, %v2466
      %v2468 = vpop.f32.mrb[0].mxu0
      %2469 = vdwg.mxu0
      %v2470 = vmul.f32 %v2457, %v2457
      %v2471 = vmul.f32 %v2462, %v2462
      %v2472 = vmul.f32 %v2467, %v2467
      %v2473 = vmul.f32 %v2457, %v2470
      %v2474 = vmul.f32 %v2462, %v2471
      %v2475 = vmul.f32 %v2467, %v2472
      %v2476 = vmul.f32 %v2473, 0.044715
      %v2477 = vmul.f32 %v2474, 0.044715
      %v2478 = vmul.f32 %v2475, 0.044715
      %v2479 = vadd.f32 %v2457, %v2476
      %v2480 = vadd.f32 %v2462, %v2477
      %v2481 = vadd.f32 %v2467, %v2478
      %v2482 = vmul.f32 %v2479, 0.7978846
      %v2483 = vmul.f32 %v2480, 0.7978846
      %v2484 = vmul.f32 %v2481, 0.7978846
      %v2485 = vtanh.pop %v2482
      %v2486 = vtanh.pop %v2483
      %v2487 = vtanh.pop %v2484
      %v2488 = vadd.f32 %v2485, 1.0
      %v2489 = vadd.f32 %v2486, 1.0
      %v2490 = vadd.f32 %v2487, 1.0
      %v2491 = vmul.f32 %v2488, 0.5
      %v2492 = vmul.f32 %v2489, 0.5
      %v2493 = vmul.f32 %v2490, 0.5
      %v2494 = vmul.f32 %v2457, %v2491
      %v2495 = vmul.f32 %v2462, %v2492
      %v2496 = vmul.f32 %v2467, %v2493
      %v2497 = vld [vmem:[%s690] sm:$0xff]
      %v2498 = vld [vmem:[%s690 + $0x8] sm:$0xff]
      %v2499 = vld [vmem:[%s690 + $0x10] sm:$0xff]
      %v2500 = vld [vmem:[%s690 + $0x18] sm:$0xff]
      %v2501 = vld [vmem:[%s690 + $0x20] sm:$0xff]
      %v2502 = vld [vmem:[%s690 + $0x28] sm:$0xff]
      %v2503 = vld [vmem:[%s690 + $0x30] sm:$0xff]
      %v2504 = vld [vmem:[%s690 + $0x38] sm:$0xff]
      %v2505 = vld [vmem:[%s690 + $0x40] sm:$0xff]
      %v2506 = vld [vmem:[%s690 + $0x48] sm:$0xff]
      %v2507 = vld [vmem:[%s690 + $0x50] sm:$0xff]
      %v2508 = vld [vmem:[%s690 + $0x58] sm:$0xff]
      %v2509 = vld [vmem:[%s690 + $0x60] sm:$0xff]
      %v2510 = vld [vmem:[%s690 + $0x68] sm:$0xff]
      %v2511 = vld [vmem:[%s690 + $0x70] sm:$0xff]
      %v2512 = vld [vmem:[%s690 + $0x78] sm:$0xff]
      %v2513 = vld [vmem:[%s693] sm:$0x1]
      %v2515 = vlaneseq
      %v2516 = vshrl.u32 %v2515, 7
      %v2517 = vsub.s32 0, %v2516
      %v2518 = vrot.slane %v2513, %v2517
      %2520 = vmatprep.subr.mxu0 0.0
      %2521 = vmatpush1.msra.mxu0 %v2497
      %2522 = vmatprep.subr.mxu0 0.0
      %2523 = vmatpush1.msra.mxu0 %v2498
      %2524 = vmatprep.subr.mxu0 0.0
      %2525 = vmatpush1.msra.mxu0 %v2499
      %2526 = vmatprep.subr.mxu0 0.0
      %2527 = vmatpush1.msra.mxu0 %v2500
      %2528 = vmatprep.subr.mxu0 0.0
      %2529 = vmatpush1.msra.mxu0 %v2501
      %2530 = vmatprep.subr.mxu0 0.0
      %2531 = vmatpush1.msra.mxu0 %v2502
      %2532 = vmatprep.subr.mxu0 0.0
      %2533 = vmatpush1.msra.mxu0 %v2503
      %2534 = vmatprep.subr.mxu0 0.0
      %2535 = vmatpush1.msra.mxu0 %v2504
      %2536 = vmatprep.subr.mxu0 0.0
      %2537 = vmatpush1.msra.mxu0 %v2505
      %2538 = vmatprep.subr.mxu0 0.0
      %2539 = vmatpush1.msra.mxu0 %v2506
      %2540 = vmatprep.subr.mxu0 0.0
      %2541 = vmatpush1.msra.mxu0 %v2507
      %2542 = vmatprep.subr.mxu0 0.0
      %2543 = vmatpush1.msra.mxu0 %v2508
      %2544 = vmatprep.subr.mxu0 0.0
      %2545 = vmatpush1.msra.mxu0 %v2509
      %2546 = vmatprep.subr.mxu0 0.0
      %2547 = vmatpush1.msra.mxu0 %v2510
      %2548 = vmatprep.subr.mxu0 0.0
      %2549 = vmatpush1.msra.mxu0 %v2511
      %2550 = vmatprep.subr.mxu0 0.0
      %2551 = vmatpush1.msra.mxu0 %v2512
      %2552 = vmatprep.subr.mxu0 0.0
      %2553 = vmatpush1.msra.mxu0 0.0
      %2554 = vmatprep.subr.mxu0 0.0
      %2555 = vmatpush1.msra.mxu0 0.0
      %2556 = vmatprep.subr.mxu0 0.0
      %2557 = vmatpush1.msra.mxu0 0.0
      %2558 = vmatprep.subr.mxu0 0.0
      %2559 = vmatpush1.msra.mxu0 0.0
      %2560 = vmatprep.subr.mxu0 0.0
      %2561 = vmatpush1.msra.mxu0 0.0
      %2562 = vmatprep.subr.mxu0 0.0
      %2563 = vmatpush1.msra.mxu0 0.0
      %2564 = vmatprep.subr.mxu0 0.0
      %2565 = vmatpush1.msra.mxu0 0.0
      %2566 = vmatprep.subr.mxu0 0.0
      %2567 = vmatpush1.msra.mxu0 0.0
      %2568 = vmatprep.subr.mxu0 0.0
      %2569 = vmatpush1.msra.mxu0 0.0
      %2570 = vmatprep.subr.mxu0 0.0
      %2571 = vmatpush1.msra.mxu0 0.0
      %2572 = vmatprep.subr.mxu0 0.0
      %2573 = vmatpush1.msra.mxu0 0.0
      %2574 = vmatprep.subr.mxu0 0.0
      %2575 = vmatpush1.msra.mxu0 0.0
      %2576 = vmatprep.subr.mxu0 0.0
      %2577 = vmatpush1.msra.mxu0 0.0
      %2578 = vmatprep.subr.mxu0 0.0
      %2579 = vmatpush1.msra.mxu0 0.0
      %2580 = vmatprep.subr.mxu0 0.0
      %2581 = vmatpush1.msra.mxu0 0.0
      %2582 = vmatprep.subr.mxu0 0.0
      %2583 = vmatpush1.msra.mxu0 0.0
      %2584 = vmatprep.mubr.f32.mxu0 0.0
      %2585 = vmatmul.mubr.f32.gmra.mrb[0].mxu0 %v2494
      %v2586 = vpop.f32.mrb[0].mxu0
      %v2587 = vadd.f32 %v2518, %v2586
      %v2588 = vpop.f32.mrb[0].mxu0
      %2589 = vmatprep.mubr.f32.mxu0 0.0
      %2590 = vmatmul.mubr.f32.gmra.mrb[0].mxu0 %v2495
      %v2591 = vpop.f32.mrb[0].mxu0
      %v2592 = vadd.f32 %v2518, %v2591
      %v2593 = vpop.f32.mrb[0].mxu0
      %2594 = vmatprep.mubr.f32.mxu0 0.0
      %2595 = vmatmul.mubr.f32.gmra.mrb[0].mxu0 %v2496
      %v2596 = vpop.f32.mrb[0].mxu0
      %v2597 = vadd.f32 %v2518, %v2596
      %v2598 = vpop.f32.mrb[0].mxu0
      %2599 = vdwg.mxu0
      %v2600 = vadd.f32 %v2308, %v2587
      %v2601 = vadd.f32 %v2309, %v2592
      %v2602 = vadd.f32 %v2310, %v2597
      %2603 = vst.msk [vmem:[%s698] sm:$0xff] %vm815, %v2600
      %2604 = vst.msk [vmem:[%s698 + $0x8] sm:$0xff] %vm815, %v2601
      %2605 = vst.msk [vmem:[%s698 + $0x10] sm:$0x1] %vm822, %v2602
      %p2606 = scmp.lt.s32.totalorder %s30, 1
      %s2607 = scalar_select %p2606, %s30, 1
      %s2608 = smul.addr %s2607, 3
      %s2609 = smul.addr %s2608, 8
      %s2610 = scalar_lea.vmem %s15, %s2609
      // Predicated region
      $region85: #{vit_pose_forward.2} parent=79 // pred_check
        %p2611 = pneg %p436
      $region86: #{vit_pose_forward.2} parent=79 // pred_check_branch
        %2613 = sbr.rel (%p2611) target = $region88
      $region87: #{vit_pose_forward.2} parent=79 // pred_region
        _
      $region88: #{vit_pose_forward.2} parent=79 // pred_fallthru
        _
    $region80: #{vit_pose_forward.2} parent=5 // pred_fallthru
      _
    %p2614 = scmp.le.s32.totalorder 2, %s21
    // Predicated region
    $region89: #{vit_pose_forward.2} parent=5 // pred_check
      %p2615 = pneg %p2614
    $region90: #{vit_pose_forward.2} parent=5 // pred_check_branch
      %2617 = sbr.rel (%p2615) target = $region92
    $region91: #{vit_pose_forward.2} parent=5 // pred_region
      %s2618 = ssub.s32 %s21, 2
      // Predicated region
      $region93: #{vit_pose_forward.2} parent=91 // pred_check
        %p2619 = pneg %p442
      $region94: #{vit_pose_forward.2} parent=91 // pred_check_branch
        %2621 = sbr.rel (%p2619) target = $region96
      $region95: #{vit_pose_forward.2} parent=91 // pred_region
        %p2622 = scmp.lt.s32.totalorder %s32, 1
        %s2623 = scalar_select %p2622, %s32, 1
        %s2624 = smul.addr %s2623, 3
        %s2625 = smul.addr %s2624, 8
        %s2626 = scalar_lea.vmem %s15, %s2625
      $region96: #{vit_pose_forward.2} parent=91 // pred_fallthru
        _
    $region92: #{vit_pose_forward.2} parent=5 // pred_fallthru
      _
  $region6: #{vit_pose_forward.2} parent=0 // loop_footer
    %s25 = sadd.s32 1, %s21
  $region7: #{vit_pose_forward.2} parent=0 // loop_footer_branch
    %20 = sbr.rel target = $region3
  $region8: #{vit_pose_forward.2} parent=0 // loop_exit
    _

</llo_original>
